<compile_context>
chip_gen: v6e
topology: v6e:2x2x1
jax: 0.10.0
libtpu: 0.0.40
codegen_flags: <defaults>
</compile_context>

<pallas_src>
from functools import partial

import jax
import jax.numpy as jnp
from jax.experimental import pallas as pl
from jax.experimental.pallas import tpu as pltpu


# ----------------------------------------------------------------------------
# Helpers
# ----------------------------------------------------------------------------
def _round_up(x, m):
    return (x + m - 1) // m * m


def _divisors_desc(n):
    return [d for d in range(n, 0, -1) if n % d == 0]


def _vmem_limit_bytes():
    """Generation-aware VMEM limit (do not request all of v7x's 64 MiB)."""
    try:
        kind = jax.devices()[0].device_kind.lower()
    except Exception:  # pragma: no cover
        kind = ""
    if any(tag in kind for tag in ("v4", "v5", "v6")):
        return 100 * 1024 * 1024          # 128 MiB physical VMEM: headroom left
    return 48 * 1024 * 1024               # v7x (64 MiB physical) / unknown: safe


def _choose_tiling(B, num_heads, n_pad, head_dim):
    """Pick (batch_block, heads_per_group) for the grid."""
    # Batch block: enough flattened rows (bb * n_pad) to fill the MXU M dim.
    target_bb = max(1, -(-256 // n_pad))
    bb = max([d for d in _divisors_desc(B) if d <= target_bb], default=1)
    # Keep the per-step f32 score tile (bb * hgp * n_pad^2) under ~8 MiB so
    # p / attn / ctx and double-buffered I/O blocks still fit the VMEM budget.
    score_budget_elems = (8 * 1024 * 1024) // 4
    while bb > 1 and bb * n_pad * n_pad > score_budget_elems:
        bb = max([d for d in _divisors_desc(B) if d < bb], default=1)
    hgp = 1
    for cand in _divisors_desc(num_heads):
        # wproj block (hgp*head_dim, C) needs a sublane-aligned second-minor.
        if (cand * head_dim) % 8 != 0 and cand != num_heads:
            continue
        if bb * cand * n_pad * n_pad <= score_budget_elems:
            hgp = cand
            break
    return bb, hgp


# ----------------------------------------------------------------------------
# Kernel: one (batch block, head group) per grid step
# ----------------------------------------------------------------------------
def _attention_kernel(x_ref, wqkv_ref, wproj_ref, bproj_ref, o_ref, attn_ref,
                      *, heads_per_group, head_dim, n_valid):
    bb, n_pad, dim = x_ref.shape
    hgp, d = heads_per_group, head_dim
    hgd = hgp * d
    g = bb * hgp                                   # collapsed (batch, head) dim

    # ---- fused QKV projection for this head group (bf16 in, f32 acc) -------
    xb = x_ref[...].reshape(bb * n_pad, dim).astype(jnp.bfloat16)
    qkv = jnp.dot(xb, wqkv_ref[0], preferred_element_type=jnp.float32)
    # Slab column order is (q|k|v, head-in-group, d); the softmax scale is
    # already folded into the q columns on the host.

    def split_heads(cols):                         # (bb*n_pad, hgd) -> (g, n_pad, d)
        t = cols.reshape(bb, n_pad, hgp, d)
        return jnp.transpose(t, (0, 2, 1, 3)).reshape(g, n_pad, d)

    q = split_heads(qkv[:, 0 * hgd:1 * hgd])
    k = split_heads(qkv[:, 1 * hgd:2 * hgd])
    v = split_heads(qkv[:, 2 * hgd:3 * hgd])

    # ---- scores + numerically stable softmax (f32) --------------------------
    s = jnp.einsum('gnd,gmd->gnm',
                   q.astype(jnp.bfloat16), k.astype(jnp.bfloat16),
                   preferred_element_type=jnp.float32)
    if n_valid < n_pad:                            # mask padded key columns
        key_id = jax.lax.broadcasted_iota(jnp.int32, (1, 1, n_pad), 2)
        s = jnp.where(key_id < n_valid, s, -1e30)
    s = s - jnp.max(s, axis=-1, keepdims=True)
    p = jnp.exp(s)
    # Exact reciprocal: the returned attention rows must sum to 1.
    p = p * pl.reciprocal(jnp.sum(p, axis=-1, keepdims=True), approx=False)
    attn_ref[...] = p.reshape(bb, hgp, n_pad, n_pad).astype(attn_ref.dtype)

    # ---- context + accumulated output projection ----------------------------
    ctx = jnp.einsum('gnm,gmd->gnd',
                     p.astype(jnp.bfloat16), v.astype(jnp.bfloat16),
                     preferred_element_type=jnp.float32)
    ctx = jnp.transpose(ctx.reshape(bb, hgp, n_pad, d), (0, 2, 1, 3))
    ctx = ctx.reshape(bb * n_pad, hgd)
    part = jnp.dot(ctx.astype(jnp.bfloat16), wproj_ref[...],
                   preferred_element_type=jnp.float32).reshape(bb, n_pad, dim)

    bias = bproj_ref[...].reshape(1, 1, dim)

    @pl.when(pl.program_id(1) == 0)                # first head group: init+bias
    def _():
        o_ref[...] = (part + bias).astype(o_ref.dtype)

    @pl.when(pl.program_id(1) != 0)                # later groups: accumulate
    def _():
        o_ref[...] += part
    # TODO(synk): attn_drop / proj_drop are identity at the module default
    # p=0.0; RNG-based dropout is not implemented.


# ----------------------------------------------------------------------------
# Wrapper
# ----------------------------------------------------------------------------
def attention_forward(x, params, *, num_heads, qk_scale=None,
                      attn_dtype=jnp.float32,
                      batch_block=None, heads_per_group=None):
    """x: (B, N, C) f32 -> (out (B, N, C) f32, attn (B, H, N, N) attn_dtype)."""
    B, N, C = x.shape
    assert C % num_heads == 0
    head_dim = C // num_heads
    scale = float(qk_scale) if qk_scale is not None else head_dim ** (-0.5)

    # Lane-dense token padding (n_pad is the last dim of scores / attn).
    n_pad = _round_up(N, 128) if N >= 64 else _round_up(N, 8)
    x_p = jnp.pad(x, ((0, 0), (0, n_pad - N), (0, 0))) if n_pad != N else x

    bb, hgp = _choose_tiling(B, num_heads, n_pad, head_dim)
    if batch_block is not None:
        assert B % batch_block == 0
        bb = batch_block
    if heads_per_group is not None:
        assert num_heads % heads_per_group == 0
        hgp = heads_per_group
    assert (hgp * head_dim) % 8 == 0 or hgp == num_heads
    n_hg = num_heads // hgp
    hgd = hgp * head_dim

    # One-time weight prep (outside the hot path): fold the softmax scale into
    # the q columns and regroup columns so each head group reads one contiguous
    # (C, 3*hgd) slab.
    w = params["qkv_w_t"].astype(jnp.float32).reshape(C, 3, num_heads, head_dim)
    w = w.at[:, 0].multiply(scale)
    w = w.reshape(C, 3, n_hg, hgp, head_dim)
    wqkv = jnp.transpose(w, (2, 0, 1, 3, 4)).reshape(n_hg, C, 3 * hgd)
    wqkv = wqkv.astype(jnp.bfloat16)
    wproj = params["proj_w_t"].astype(jnp.bfloat16)        # (C, C), rows = (head, d)
    bproj = params["proj_b"].astype(jnp.float32).reshape(1, C)

    kernel = partial(_attention_kernel, heads_per_group=hgp,
                     head_dim=head_dim, n_valid=N)

    out_p, attn_p = pl.pallas_call(
        kernel,
        grid=(B // bb, n_hg),
        in_specs=[
            pl.BlockSpec((bb, n_pad, C), lambda b, g: (b, 0, 0)),
            pl.BlockSpec((1, C, 3 * hgd), lambda b, g: (g, 0, 0)),
            pl.BlockSpec((hgd, C), lambda b, g: (g, 0)),
            pl.BlockSpec((1, C), lambda b, g: (0, 0)),
        ],
        out_specs=[
            # output block is resident across the head-group (reduction) axis
            pl.BlockSpec((bb, n_pad, C), lambda b, g: (b, 0, 0)),
            pl.BlockSpec((bb, hgp, n_pad, n_pad), lambda b, g: (b, g, 0, 0)),
        ],
        out_shape=[
            jax.ShapeDtypeStruct((B, n_pad, C), jnp.float32),
            jax.ShapeDtypeStruct((B, num_heads, n_pad, n_pad), attn_dtype),
        ],
        compiler_params=pltpu.CompilerParams(
            dimension_semantics=("parallel", "arbitrary"),
            vmem_limit_bytes=_vmem_limit_bytes(),
        ),
    )(x_p, wqkv, wproj, bproj)

    return out_p[:, :N, :], attn_p[:, :, :N, :N]


# ----------------------------------------------------------------------------
# Pure-JAX reference (same bf16 matmul casts) for a correctness check
# ----------------------------------------------------------------------------
def attention_reference(x, params, *, num_heads, qk_scale=None):
    B, N, C = x.shape
    d = C // num_heads
    scale = qk_scale if qk_scale is not None else d ** (-0.5)
    wqkv = params["qkv_w_t"].astype(jnp.bfloat16)
    wproj = params["proj_w_t"].astype(jnp.bfloat16)
    qkv = jnp.einsum("bnc,ce->bne", x.astype(jnp.bfloat16), wqkv,
                     preferred_element_type=jnp.float32)
    qkv = qkv.reshape(B, N, 3, num_heads, d).transpose(2, 0, 3, 1, 4)
    q, k, v = qkv[0], qkv[1], qkv[2]
    s = jnp.einsum("bhnd,bhmd->bhnm", (q * scale).astype(jnp.bfloat16),
                   k.astype(jnp.bfloat16), preferred_element_type=jnp.float32)
    attn = jax.nn.softmax(s, axis=-1)
    ctx = jnp.einsum("bhnm,bhmd->bhnd", attn.astype(jnp.bfloat16),
                     v.astype(jnp.bfloat16), preferred_element_type=jnp.float32)
    ctx = ctx.transpose(0, 2, 1, 3).reshape(B, N, C)
    out = jnp.einsum("bnc,ce->bne", ctx.astype(jnp.bfloat16), wproj,
                     preferred_element_type=jnp.float32) + params["proj_b"]
    return out, attn


def init_params(key, dim):
    k1, k2 = jax.random.split(key)
    std = 0.02
    return {
        "qkv_w_t": jax.random.normal(k1, (dim, 3 * dim), jnp.float32) * std,
        "proj_w_t": jax.random.normal(k2, (dim, dim), jnp.float32) * std,
        "proj_b": jnp.zeros((1, dim), jnp.float32),
    }


# ----------------------------------------------------------------------------
if __name__ == "__main__":
    B, N, C, H = 2, 13, 128, 4   # N=13 exercises token padding + key masking

    key = jax.random.PRNGKey(0)
    pkey, xkey = jax.random.split(key)
    params = init_params(pkey, C)
    x = jax.random.normal(xkey, (B, N, C), jnp.float32)

    out_r, attn_r = attention_reference(x, params, num_heads=H)

    # 1) Auto tiling: batch-blocked step, single head group.
    out, attn = attention_forward(x, params, num_heads=H)
    out, attn = jax.block_until_ready((out, attn))
    assert out.shape == (B, N, C), out.shape
    assert attn.shape == (B, H, N, N), attn.shape
    assert bool(jnp.all(jnp.isfinite(out))) and bool(jnp.all(jnp.isfinite(attn)))
    assert bool(jnp.allclose(out, out_r, atol=2e-2, rtol=2e-2))
    assert bool(jnp.allclose(attn, attn_r, atol=2e-2, rtol=2e-2))
    assert bool(jnp.allclose(jnp.sum(attn, axis=-1), 1.0, atol=1e-3))

    # 2) Exercise the multi-step grid: per-batch blocks + head-group
    #    accumulation of the output projection (grid = (2, 2)).
    out2, attn2 = attention_forward(x, params, num_heads=H,
                                    batch_block=1, heads_per_group=2)
    out2, attn2 = jax.block_until_ready((out2, attn2))
    assert bool(jnp.allclose(out2, out_r, atol=2e-2, rtol=2e-2))
    assert bool(jnp.allclose(attn2, attn_r, atol=2e-2, rtol=2e-2))

    print("KERNEL_OK")
</pallas_src>

<mosaic_0001>
module attributes {stable_mosaic.version = 11 : i64} {
  func.func @_attention_kernel(%arg0: i32, %arg1: i32, %arg2: memref<2x16x128xf32, #tpu.memory_space<vmem>>, %arg3: memref<1x128x384xbf16, #tpu.memory_space<vmem>>, %arg4: memref<128x128xbf16, #tpu.memory_space<vmem>>, %arg5: memref<1x128xf32, #tpu.memory_space<vmem>>, %arg6: memref<2x16x128xf32, #tpu.memory_space<vmem>>, %arg7: memref<2x4x16x16xf32, #tpu.memory_space<vmem>>) attributes {dimension_semantics = [#tpu.dimension_semantics<parallel>, #tpu.dimension_semantics<arbitrary>], iteration_bounds = array<i64: 1, 1>, scalar_prefetch = 0 : i64, scratch_operands = 0 : i64, tpu.core_type = #tpu.core_type<tc>, window_params = [{transform_indices = @transform_0, window_bounds = array<i64: 2, 16, 128>}, {transform_indices = @transform_1, window_bounds = array<i64: 1, 128, 384>}, {transform_indices = @transform_2, window_bounds = array<i64: 128, 128>}, {pipeline_mode = #tpu.pipeline_mode<synchronous>, transform_indices = @transform_3, window_bounds = array<i64: 1, 128>}, {transform_indices = @transform_4, window_bounds = array<i64: 2, 16, 128>}, {transform_indices = @transform_5, window_bounds = array<i64: 2, 4, 16, 16>}]} {
    %c0 = arith.constant 0 : index
    %c0_0 = arith.constant 0 : index
    %c0_1 = arith.constant 0 : index
    %0 = vector.load %arg2[%c0, %c0_0, %c0_1] : memref<2x16x128xf32, #tpu.memory_space<vmem>>, vector<2x16x128xf32>
    %1 = vector.shape_cast %0 : vector<2x16x128xf32> to vector<32x128xf32>
    %2 = arith.truncf %1 : vector<32x128xf32> to vector<32x128xbf16>
    %c0_2 = arith.constant 0 : index
    %c0_3 = arith.constant 0 : index
    %c0_4 = arith.constant 0 : index
    %3 = vector.load %arg3[%c0_2, %c0_3, %c0_4] : memref<1x128x384xbf16, #tpu.memory_space<vmem>>, vector<1x128x384xbf16>
    %4 = vector.shape_cast %3 : vector<1x128x384xbf16> to vector<128x384xbf16>
    %cst = arith.constant dense<0.000000e+00> : vector<32x384xf32>
    %5 = tpu.matmul %2, %4, %cst {dimension_numbers = #tpu.dot_dimension_numbers<[1], [0], [0], [1], [0, 0, 1, 1], [], []>} : vector<32x128xbf16>, vector<128x384xbf16>, vector<32x384xf32> -> vector<32x384xf32>
    %6 = vector.extract_strided_slice %5 {offsets = [0, 0], sizes = [32, 128], strides = [1, 1]} : vector<32x384xf32> to vector<32x128xf32>
    %7 = vector.shape_cast %6 : vector<32x128xf32> to vector<2x16x4x32xf32>
    %8 = tpu.transpose %7, [0, 2, 1, 3] : vector<2x16x4x32xf32> -> vector<2x4x16x32xf32>
    %9 = vector.shape_cast %8 : vector<2x4x16x32xf32> to vector<8x16x32xf32>
    %10 = vector.extract_strided_slice %5 {offsets = [0, 128], sizes = [32, 128], strides = [1, 1]} : vector<32x384xf32> to vector<32x128xf32>
    %11 = vector.shape_cast %10 : vector<32x128xf32> to vector<2x16x4x32xf32>
    %12 = tpu.transpose %11, [0, 2, 1, 3] : vector<2x16x4x32xf32> -> vector<2x4x16x32xf32>
    %13 = vector.shape_cast %12 : vector<2x4x16x32xf32> to vector<8x16x32xf32>
    %14 = vector.extract_strided_slice %5 {offsets = [0, 256], sizes = [32, 128], strides = [1, 1]} : vector<32x384xf32> to vector<32x128xf32>
    %15 = vector.shape_cast %14 : vector<32x128xf32> to vector<2x16x4x32xf32>
    %16 = tpu.transpose %15, [0, 2, 1, 3] : vector<2x16x4x32xf32> -> vector<2x4x16x32xf32>
    %17 = vector.shape_cast %16 : vector<2x4x16x32xf32> to vector<8x16x32xf32>
    %18 = arith.truncf %9 : vector<8x16x32xf32> to vector<8x16x32xbf16>
    %19 = arith.truncf %13 : vector<8x16x32xf32> to vector<8x16x32xbf16>
    "tpu.trace_start"() <{level = 10 : i32, message = "gnd,gmd->gnm"}> : () -> ()
    %cst_5 = arith.constant dense<0.000000e+00> : vector<8x16x16xf32>
    %20 = tpu.matmul %18, %19, %cst_5 {dimension_numbers = #tpu.dot_dimension_numbers<[2], [2], [1], [1], [0, 0, 0, 1, 1, 1], [0], [0]>} : vector<8x16x32xbf16>, vector<8x16x32xbf16>, vector<8x16x16xf32> -> vector<8x16x16xf32>
    "tpu.trace_stop"() : () -> ()
    %21 = tpu.iota {dimensions = array<i32: 2>} : vector<1x1x16xi32>
    %c13_i32 = arith.constant 13 : i32
    %22 = vector.broadcast %c13_i32 : i32 to vector<1x1x16xi32>
    %23 = arith.cmpi slt, %21, %22 : vector<1x1x16xi32>
    %cst_6 = arith.constant -1.000000e+30 : f32
    %24 = vector.shape_cast %23 : vector<1x1x16xi1> to vector<1x1x16xi1>
    %25 = vector.broadcast %24 : vector<1x1x16xi1> to vector<8x16x16xi1>
    %26 = vector.broadcast %cst_6 : f32 to vector<8x16x16xf32>
    %27 = arith.select %25, %20, %26 : vector<8x16x16xi1>, vector<8x16x16xf32>
    %cst_7 = arith.constant dense<0xFF800000> : vector<8x16xf32>
    %28 = vector.multi_reduction <maximumf>, %27, %cst_7 [2] : vector<8x16x16xf32> to vector<8x16xf32>
    %29 = vector.shape_cast %28 : vector<8x16xf32> to vector<8x16x1xf32>
    %30 = vector.broadcast %29 : vector<8x16x1xf32> to vector<8x16x16xf32>
    %31 = arith.subf %27, %30 : vector<8x16x16xf32>
    %32 = math.exp %31 : vector<8x16x16xf32>
    %cst_8 = arith.constant dense<0.000000e+00> : vector<8x16xf32>
    %33 = vector.multi_reduction <add>, %32, %cst_8 [2] : vector<8x16x16xf32> to vector<8x16xf32>
    %34 = vector.shape_cast %33 : vector<8x16xf32> to vector<8x16x1xf32>
    %35 = tpu.reciprocal %34 : vector<8x16x1xf32> -> vector<8x16x1xf32>
    %36 = vector.broadcast %35 : vector<8x16x1xf32> to vector<8x16x16xf32>
    %37 = arith.mulf %32, %36 : vector<8x16x16xf32>
    %38 = vector.shape_cast %37 : vector<8x16x16xf32> to vector<2x4x16x16xf32>
    %c0_9 = arith.constant 0 : index
    %c0_10 = arith.constant 0 : index
    %c0_11 = arith.constant 0 : index
    %c0_12 = arith.constant 0 : index
    %39 = vector.load %arg7[%c0_9, %c0_10, %c0_11, %c0_12] : memref<2x4x16x16xf32, #tpu.memory_space<vmem>>, vector<2x4x16x16xf32>
    tpu.vector_store %arg7[%c0_9, %c0_10, %c0_11, %c0_12], %38 {strides = array<i32>} : memref<2x4x16x16xf32, #tpu.memory_space<vmem>>, vector<2x4x16x16xf32>,
    %40 = arith.truncf %37 : vector<8x16x16xf32> to vector<8x16x16xbf16>
    %41 = arith.truncf %17 : vector<8x16x32xf32> to vector<8x16x32xbf16>
    "tpu.trace_start"() <{level = 10 : i32, message = "gnm,gmd->gnd"}> : () -> ()
    %cst_13 = arith.constant dense<0.000000e+00> : vector<8x16x32xf32>
    %42 = tpu.matmul %40, %41, %cst_13 {dimension_numbers = #tpu.dot_dimension_numbers<[2], [1], [1], [2], [0, 0, 0, 1, 1, 2], [0], [0]>} : vector<8x16x16xbf16>, vector<8x16x32xbf16>, vector<8x16x32xf32> -> vector<8x16x32xf32>
    "tpu.trace_stop"() : () -> ()
    %43 = vector.shape_cast %42 : vector<8x16x32xf32> to vector<2x4x16x32xf32>
    %44 = tpu.transpose %43, [0, 2, 1, 3] : vector<2x4x16x32xf32> -> vector<2x16x4x32xf32>
    %45 = vector.shape_cast %44 : vector<2x16x4x32xf32> to vector<32x128xf32>
    %46 = arith.truncf %45 : vector<32x128xf32> to vector<32x128xbf16>
    %c0_14 = arith.constant 0 : index
    %c0_15 = arith.constant 0 : index
    %47 = vector.load %arg4[%c0_14, %c0_15] : memref<128x128xbf16, #tpu.memory_space<vmem>>, vector<128x128xbf16>
    %cst_16 = arith.constant dense<0.000000e+00> : vector<32x128xf32>
    %48 = tpu.matmul %46, %47, %cst_16 {dimension_numbers = #tpu.dot_dimension_numbers<[1], [0], [0], [1], [0, 0, 1, 1], [], []>} : vector<32x128xbf16>, vector<128x128xbf16>, vector<32x128xf32> -> vector<32x128xf32>
    %49 = vector.shape_cast %48 : vector<32x128xf32> to vector<2x16x128xf32>
    %c0_17 = arith.constant 0 : index
    %c0_18 = arith.constant 0 : index
    %50 = vector.load %arg5[%c0_17, %c0_18] : memref<1x128xf32, #tpu.memory_space<vmem>>, vector<1x128xf32>
    %51 = vector.shape_cast %50 : vector<1x128xf32> to vector<1x1x128xf32>
    %c0_i32 = arith.constant 0 : i32
    %52 = arith.cmpi eq, %arg1, %c0_i32 : i32
    %53 = arith.extui %52 : i1 to i32
    %c0_i32_19 = arith.constant 0 : i32
    %54 = arith.cmpi ne, %53, %c0_i32_19 : i32
    scf.if %54 {
      %58 = vector.broadcast %51 : vector<1x1x128xf32> to vector<2x16x128xf32>
      %59 = arith.addf %49, %58 : vector<2x16x128xf32>
      %c0_22 = arith.constant 0 : index
      %c0_23 = arith.constant 0 : index
      %c0_24 = arith.constant 0 : index
      %60 = vector.load %arg6[%c0_22, %c0_23, %c0_24] : memref<2x16x128xf32, #tpu.memory_space<vmem>>, vector<2x16x128xf32>
      tpu.vector_store %arg6[%c0_22, %c0_23, %c0_24], %59 {strides = array<i32>} : memref<2x16x128xf32, #tpu.memory_space<vmem>>, vector<2x16x128xf32>,
    } else {
    }
    %c0_i32_20 = arith.constant 0 : i32
    %55 = arith.cmpi ne, %arg1, %c0_i32_20 : i32
    %56 = arith.extui %55 : i1 to i32
    %c0_i32_21 = arith.constant 0 : i32
    %57 = arith.cmpi ne, %56, %c0_i32_21 : i32
    scf.if %57 {
      %c0_22 = arith.constant 0 : index
      %c0_23 = arith.constant 0 : index
      %c0_24 = arith.constant 0 : index
      %58 = vector.load %arg6[%c0_22, %c0_23, %c0_24] : memref<2x16x128xf32, #tpu.memory_space<vmem>>, vector<2x16x128xf32>
      %59 = arith.addf %58, %49 : vector<2x16x128xf32>
      %c0_25 = arith.constant 0 : index
      %c0_26 = arith.constant 0 : index
      %c0_27 = arith.constant 0 : index
      %60 = vector.load %arg6[%c0_25, %c0_26, %c0_27] : memref<2x16x128xf32, #tpu.memory_space<vmem>>, vector<2x16x128xf32>
      tpu.vector_store %arg6[%c0_25, %c0_26, %c0_27], %59 {strides = array<i32>} : memref<2x16x128xf32, #tpu.memory_space<vmem>>, vector<2x16x128xf32>,
    } else {
    }
    return
  }
  func.func @transform_0(%arg0: i32, %arg1: i32) -> (i32, i32, i32) {
    %c0_i32 = arith.constant 0 : i32
    %c0_i32_0 = arith.constant 0 : i32
    %c0_i32_1 = arith.constant 0 : i32
    return %arg0, %c0_i32, %c0_i32_0 : i32, i32, i32
  }
  func.func @transform_1(%arg0: i32, %arg1: i32) -> (i32, i32, i32) {
    %c0_i32 = arith.constant 0 : i32
    %c0_i32_0 = arith.constant 0 : i32
    %c0_i32_1 = arith.constant 0 : i32
    return %arg1, %c0_i32, %c0_i32_0 : i32, i32, i32
  }
  func.func @transform_2(%arg0: i32, %arg1: i32) -> (i32, i32) {
    %c0_i32 = arith.constant 0 : i32
    %c0_i32_0 = arith.constant 0 : i32
    return %arg1, %c0_i32 : i32, i32
  }
  func.func @transform_3(%arg0: i32, %arg1: i32) -> (i32, i32) {
    %c0_i32 = arith.constant 0 : i32
    %c0_i32_0 = arith.constant 0 : i32
    %c0_i32_1 = arith.constant 0 : i32
    return %c0_i32, %c0_i32_0 : i32, i32
  }
  func.func @transform_4(%arg0: i32, %arg1: i32) -> (i32, i32, i32) {
    %c0_i32 = arith.constant 0 : i32
    %c0_i32_0 = arith.constant 0 : i32
    %c0_i32_1 = arith.constant 0 : i32
    return %arg0, %c0_i32, %c0_i32_0 : i32, i32, i32
  }
  func.func @transform_5(%arg0: i32, %arg1: i32) -> (i32, i32, i32, i32) {
    %c0_i32 = arith.constant 0 : i32
    %c0_i32_0 = arith.constant 0 : i32
    %c0_i32_1 = arith.constant 0 : i32
    return %arg0, %arg1, %c0_i32, %c0_i32_0 : i32, i32, i32, i32
  }
}

</mosaic_0001>

<llo_original>
// kernel: tpu_custom_call.1
$region0: #{tpu_custom_call.1}
  #allocation0 [shape = 'u32[]', space=smem, size = 0x4, offset = 0x4, fixed_abs, tag = 'smem constant byte address 0x4 - core index']
  #allocation1 [shape = 'u32[144,128]{1,0:T(1,128)}', space=vmem, size = 0x12000, scoped, tag = 'internal scratch']
  %s0 = inlined_call_operand.hbm [shape: f32[2,16,128], index: 0, kind: input, shape index: {}]
  %s1 = inlined_call_operand.hbm [shape: bf16[1,128,384], index: 1, kind: input, shape index: {}]
  %s2 = inlined_call_operand.hbm [shape: bf16[128,128], index: 2, kind: input, shape index: {}]
  %s3 = inlined_call_operand.vmem [shape: f32[1,128], index: 3, kind: input, shape index: {}]
  %s4 = inlined_call_operand.hbm [shape: f32[2,16,128], index: 4, kind: output, shape index: {0}]
  %s5 = inlined_call_operand.hbm [shape: f32[2,4,16,16], index: 5, kind: output, shape index: {1}]
  %6 = xla_tuple %s4, %s5
  %s7 = sld [smem:[#allocation0]]
  $region54: #{tpu_custom_call.1} parent=0
    _
  %s9 = ssub.s32 1, %s7
  %s10 = scalar_select 0, %s9, %s7
  $region1: #{tpu_custom_call.1} parent=0
    #allocation2 [shape = 'u8[16384]{0}', space=vmem, size = 0x4000, scoped, tag = 'input window, operand 0, single buffered']
    #allocation3 [shape = 's32[1]{0}', space=sflag, size = 0x4, scoped, tag = 'scoped memory for tpu_custom_call.1']
    #allocation4 [shape = 's32[1]{0}', space=sflag, size = 0x4, scoped, tag = 'scoped memory for tpu_custom_call.1']
    #allocation5 [shape = 'u8[98304]{0}', space=vmem, size = 0x18000, scoped, tag = 'input window, operand 1, single buffered']
    #allocation6 [shape = 's32[1]{0}', space=sflag, size = 0x4, scoped, tag = 'scoped memory for tpu_custom_call.1']
    #allocation7 [shape = 'u8[32768]{0}', space=vmem, size = 0x8000, scoped, tag = 'input window, operand 2, single buffered']
    #allocation8 [shape = 'u8[16384]{0}', space=vmem, size = 0x4000, scoped, tag = 'output window, operand 0, single buffered']
    #allocation9 [shape = 'u8[65536]{0}', space=vmem, size = 0x10000, scoped, tag = 'output window, operand 1, single buffered']
    #allocation10 [shape = 's32[1]{0}', space=sflag, size = 0x4, scoped, tag = 'scoped memory for tpu_custom_call.1']
    %11 = vsyncpa [#allocation3], 0
    %12 = vsyncpa [#allocation6], 0
    %13 = vsyncpa [#allocation4], 0
    %14 = vsyncpa [#allocation10], 0
    // Predicated region
    $region2: #{tpu_custom_call.1} parent=1 // pred_check
      _
    $region3: #{tpu_custom_call.1} parent=1 // pred_check_branch
      %16 = sbr.rel (0) target = $region5
    $region4: #{tpu_custom_call.1} parent=1 // pred_region
      %s18 = ssub.s32 512, 512
      %19 = vsyncadd [#allocation3], %s18
      %s20 = sshll.u32 [#allocation2], 4
      %s21 = int_to_ptr.vmem [resolvable:$true] %s20
      %26 = dma.hbm_to_vmem [thread:$0]  %s0, 512, %s21, [#allocation3], 128, 128, 8
    $region5: #{tpu_custom_call.1} parent=1 // pred_fallthru
      _
    // Predicated region
    $region6: #{tpu_custom_call.1} parent=1 // pred_check
      _
    $region7: #{tpu_custom_call.1} parent=1 // pred_check_branch
      %28 = sbr.rel (0) target = $region9
    $region8: #{tpu_custom_call.1} parent=1 // pred_region
      %s30 = ssub.s32 3072, 3072
      %31 = vsyncadd [#allocation6], %s30
      %s32 = sshll.u32 [#allocation5], 4
      %s33 = int_to_ptr.vmem [resolvable:$true] %s32
      %38 = dma.hbm_to_vmem [thread:$0]  %s1, 3072, %s33, [#allocation6], 192, 192, 12
    $region9: #{tpu_custom_call.1} parent=1 // pred_fallthru
      _
    // Predicated region
    $region10: #{tpu_custom_call.1} parent=1 // pred_check
      _
    $region11: #{tpu_custom_call.1} parent=1 // pred_check_branch
      %40 = sbr.rel (0) target = $region13
    $region12: #{tpu_custom_call.1} parent=1 // pred_region
      %s42 = ssub.s32 1024, 1024
      %43 = vsyncadd [#allocation6], %s42
      %s44 = sshll.u32 [#allocation7], 4
      %s45 = int_to_ptr.vmem [resolvable:$true] %s44
      %50 = dma.hbm_to_vmem [thread:$0]  %s2, 1024, %s45, [#allocation6], 64, 64, 4
    $region13: #{tpu_custom_call.1} parent=1 // pred_fallthru
      _
    // Predicated region
    $region14: #{tpu_custom_call.1} parent=1 // pred_check
      _
    $region15: #{tpu_custom_call.1} parent=1 // pred_check_branch
      %52 = sbr.rel (0) target = $region17
    $region16: #{tpu_custom_call.1} parent=1 // pred_region
      _
    $region17: #{tpu_custom_call.1} parent=1 // pred_fallthru
      _
    // Predicated region
    $region18: #{tpu_custom_call.1} parent=1 // pred_check
      _
    $region19: #{tpu_custom_call.1} parent=1 // pred_check_branch
      %54 = sbr.rel (0) target = $region21
    $region20: #{tpu_custom_call.1} parent=1 // pred_region
      %55 = dma.done [#allocation3], 512
    $region21: #{tpu_custom_call.1} parent=1 // pred_fallthru
      _
    // Predicated region
    $region22: #{tpu_custom_call.1} parent=1 // pred_check
      _
    $region23: #{tpu_custom_call.1} parent=1 // pred_check_branch
      %57 = sbr.rel (0) target = $region25
    $region24: #{tpu_custom_call.1} parent=1 // pred_region
      %58 = dma.done [#allocation6], 3072
    $region25: #{tpu_custom_call.1} parent=1 // pred_fallthru
      _
    // Predicated region
    $region26: #{tpu_custom_call.1} parent=1 // pred_check
      _
    $region27: #{tpu_custom_call.1} parent=1 // pred_check_branch
      %60 = sbr.rel (0) target = $region29
    $region28: #{tpu_custom_call.1} parent=1 // pred_region
      %61 = dma.done [#allocation6], 1024
    $region29: #{tpu_custom_call.1} parent=1 // pred_fallthru
      _
    %v63 = vld [vmem:[#allocation2] sm:$0xff]
    %v64 = vld [vmem:[#allocation2 + $0x8] sm:$0xff]
    %v65 = vld [vmem:[#allocation2 + $0x10] sm:$0xff]
    %v66 = vld [vmem:[#allocation2 + $0x18] sm:$0xff]
    %v67 = vpack.c.bf16 %v64, %v63
    %v68 = vpack.c.bf16 %v66, %v65
    %v69 = vld [vmem:[#allocation5] sm:$0xff]
    %v70 = vld [vmem:[#allocation5 + $0x8] sm:$0xf]
    %v71 = vld [vmem:[#allocation5 + $0xc] sm:$0xff]
    %v72 = vld [vmem:[#allocation5 + $0x14] sm:$0xf]
    %v73 = vld [vmem:[#allocation5 + $0x18] sm:$0xff]
    %v74 = vld [vmem:[#allocation5 + $0x20] sm:$0xf]
    %v75 = vld [vmem:[#allocation5 + $0x24] sm:$0xff]
    %v76 = vld [vmem:[#allocation5 + $0x2c] sm:$0xf]
    %v77 = vld [vmem:[#allocation5 + $0x30] sm:$0xff]
    %v78 = vld [vmem:[#allocation5 + $0x38] sm:$0xf]
    %v79 = vld [vmem:[#allocation5 + $0x3c] sm:$0xff]
    %v80 = vld [vmem:[#allocation5 + $0x44] sm:$0xf]
    %v81 = vld [vmem:[#allocation5 + $0x48] sm:$0xff]
    %v82 = vld [vmem:[#allocation5 + $0x50] sm:$0xf]
    %v83 = vld [vmem:[#allocation5 + $0x54] sm:$0xff]
    %v84 = vld [vmem:[#allocation5 + $0x5c] sm:$0xf]
    %v85 = vld [vmem:[#allocation5 + $0x60] sm:$0xff]
    %v86 = vld [vmem:[#allocation5 + $0x68] sm:$0xf]
    %v87 = vld [vmem:[#allocation5 + $0x6c] sm:$0xff]
    %v88 = vld [vmem:[#allocation5 + $0x74] sm:$0xf]
    %v89 = vld [vmem:[#allocation5 + $0x78] sm:$0xff]
    %v90 = vld [vmem:[#allocation5 + $0x80] sm:$0xf]
    %v91 = vld [vmem:[#allocation5 + $0x84] sm:$0xff]
    %v92 = vld [vmem:[#allocation5 + $0x8c] sm:$0xf]
    %v93 = vld [vmem:[#allocation5 + $0x90] sm:$0xff]
    %v94 = vld [vmem:[#allocation5 + $0x98] sm:$0xf]
    %v95 = vld [vmem:[#allocation5 + $0x9c] sm:$0xff]
    %v96 = vld [vmem:[#allocation5 + $0xa4] sm:$0xf]
    %v97 = vld [vmem:[#allocation5 + $0xa8] sm:$0xff]
    %v98 = vld [vmem:[#allocation5 + $0xb0] sm:$0xf]
    %v99 = vld [vmem:[#allocation5 + $0xb4] sm:$0xff]
    %v100 = vld [vmem:[#allocation5 + $0xbc] sm:$0xf]
    %v133 = vunpack.c.l.b16 %v69
    %v134 = vunpack.c.h.b16 %v69
    %v135 = vunpack.c.l.b16 %v70
    %v136 = vunpack.c.l.b16 %v71
    %v137 = vunpack.c.h.b16 %v71
    %v138 = vunpack.c.l.b16 %v72
    %v139 = vunpack.c.l.b16 %v73
    %v140 = vunpack.c.h.b16 %v73
    %v141 = vunpack.c.l.b16 %v74
    %v142 = vunpack.c.l.b16 %v75
    %v143 = vunpack.c.h.b16 %v75
    %v144 = vunpack.c.l.b16 %v76
    %v145 = vunpack.c.l.b16 %v77
    %v146 = vunpack.c.h.b16 %v77
    %v147 = vunpack.c.l.b16 %v78
    %v148 = vunpack.c.l.b16 %v79
    %v149 = vunpack.c.h.b16 %v79
    %v150 = vunpack.c.l.b16 %v80
    %v151 = vunpack.c.l.b16 %v81
    %v152 = vunpack.c.h.b16 %v81
    %v153 = vunpack.c.l.b16 %v82
    %v154 = vunpack.c.l.b16 %v83
    %v155 = vunpack.c.h.b16 %v83
    %v156 = vunpack.c.l.b16 %v84
    %v157 = vunpack.c.l.b16 %v85
    %v158 = vunpack.c.h.b16 %v85
    %v159 = vunpack.c.l.b16 %v86
    %v160 = vunpack.c.l.b16 %v87
    %v161 = vunpack.c.h.b16 %v87
    %v162 = vunpack.c.l.b16 %v88
    %v163 = vunpack.c.l.b16 %v89
    %v164 = vunpack.c.h.b16 %v89
    %v165 = vunpack.c.l.b16 %v90
    %v166 = vunpack.c.l.b16 %v91
    %v167 = vunpack.c.h.b16 %v91
    %v168 = vunpack.c.l.b16 %v92
    %v169 = vunpack.c.l.b16 %v93
    %v170 = vunpack.c.h.b16 %v93
    %v171 = vunpack.c.l.b16 %v94
    %v172 = vunpack.c.l.b16 %v95
    %v173 = vunpack.c.h.b16 %v95
    %v174 = vunpack.c.l.b16 %v96
    %v175 = vunpack.c.l.b16 %v97
    %v176 = vunpack.c.h.b16 %v97
    %v177 = vunpack.c.l.b16 %v98
    %v178 = vunpack.c.l.b16 %v99
    %v179 = vunpack.c.h.b16 %v99
    %v180 = vunpack.c.l.b16 %v100
    %v181 = vpack.c.b16 %v136, %v133
    %v182 = vpack.c.b16 %v137, %v134
    %v183 = vpack.c.b16 %v138, %v135
    %v184 = vpack.c.b16 %v142, %v139
    %v185 = vpack.c.b16 %v143, %v140
    %v186 = vpack.c.b16 %v144, %v141
    %v187 = vpack.c.b16 %v148, %v145
    %v188 = vpack.c.b16 %v149, %v146
    %v189 = vpack.c.b16 %v150, %v147
    %v190 = vpack.c.b16 %v154, %v151
    %v191 = vpack.c.b16 %v155, %v152
    %v192 = vpack.c.b16 %v156, %v153
    %v193 = vpack.c.b16 %v160, %v157
    %v194 = vpack.c.b16 %v161, %v158
    %v195 = vpack.c.b16 %v162, %v159
    %v196 = vpack.c.b16 %v166, %v163
    %v197 = vpack.c.b16 %v167, %v164
    %v198 = vpack.c.b16 %v168, %v165
    %v199 = vpack.c.b16 %v172, %v169
    %v200 = vpack.c.b16 %v173, %v170
    %v201 = vpack.c.b16 %v174, %v171
    %v202 = vpack.c.b16 %v178, %v175
    %v203 = vpack.c.b16 %v179, %v176
    %v204 = vpack.c.b16 %v180, %v177
    %229 = vmatprep.subr.bf16.mxu0 %v203
    %230 = vmatpush1.bf16.msra.mxu0 %v202
    %231 = vmatprep.subr.bf16.mxu0 %v200
    %232 = vmatpush1.bf16.msra.mxu0 %v199
    %233 = vmatprep.subr.bf16.mxu0 %v197
    %234 = vmatpush1.bf16.msra.mxu0 %v196
    %235 = vmatprep.subr.bf16.mxu0 %v194
    %236 = vmatpush1.bf16.msra.mxu0 %v193
    %237 = vmatprep.subr.bf16.mxu0 %v191
    %238 = vmatpush1.bf16.msra.mxu0 %v190
    %239 = vmatprep.subr.bf16.mxu0 %v188
    %240 = vmatpush1.bf16.msra.mxu0 %v187
    %241 = vmatprep.subr.bf16.mxu0 %v185
    %242 = vmatpush1.bf16.msra.mxu0 %v184
    %243 = vmatprep.subr.bf16.mxu0 %v182
    %244 = vmatpush1.bf16.msra.mxu0 %v181
    %245 = vmatprep.subr.bf16.mxu0 0
    %246 = vmatpush2.bf16.msra.mxu0 0
    %247 = vmatprep.subr.bf16.mxu0 0
    %248 = vmatpush2.bf16.msra.mxu0 0
    %249 = vmatprep.subr.bf16.mxu0 0
    %250 = vmatpush2.bf16.msra.mxu0 0
    %251 = vmatprep.subr.bf16.mxu0 0
    %252 = vmatpush2.bf16.msra.mxu0 0
    %253 = vmatprep.subr.bf16.mxu0 0
    %254 = vmatpush2.bf16.msra.mxu0 0
    %255 = vmatprep.subr.bf16.mxu0 0
    %256 = vmatpush2.bf16.msra.mxu0 0
    %257 = vmatprep.subr.bf16.mxu0 0
    %258 = vmatpush2.bf16.msra.mxu0 0
    %259 = vmatprep.subr.bf16.mxu0 0
    %260 = vmatpush2.bf16.msra.mxu0 0
    %261 = vmatprep.mubr.bf16.mxu0 0
    %262 = vmatmul.mubr.bf16.gmra.mxu0 %v67
    %v263 = vpop.f32.mrf.mxu0
    %v264 = vadd.f32 0.0, %v263
    %v265 = vpop.f32.mrf.mxu0
    %v266 = vadd.f32 0.0, %v265
    %v267 = vpop.f32.mrf.mxu0
    %v268 = vadd.f32 0.0, %v267
    %v269 = vpop.f32.mrf.mxu0
    %v270 = vadd.f32 0.0, %v269
    %271 = vmatprep.mubr.bf16.mxu0 0
    %272 = vmatmul.mubr.bf16.gmra.mxu0 %v68
    %v273 = vpop.f32.mrf.mxu0
    %v274 = vadd.f32 0.0, %v273
    %v275 = vpop.f32.mrf.mxu0
    %v276 = vadd.f32 0.0, %v275
    %v277 = vpop.f32.mrf.mxu0
    %v278 = vadd.f32 0.0, %v277
    %v279 = vpop.f32.mrf.mxu0
    %v280 = vadd.f32 0.0, %v279
    %281 = vdwg.mxu0
    %282 = vmatprep.subr.bf16.mxu0 0
    %283 = vmatpush1.bf16.msra.mxu0 %v204
    %284 = vmatprep.subr.bf16.mxu0 0
    %285 = vmatpush1.bf16.msra.mxu0 %v201
    %286 = vmatprep.subr.bf16.mxu0 0
    %287 = vmatpush1.bf16.msra.mxu0 %v198
    %288 = vmatprep.subr.bf16.mxu0 0
    %289 = vmatpush1.bf16.msra.mxu0 %v195
    %290 = vmatprep.subr.bf16.mxu0 0
    %291 = vmatpush1.bf16.msra.mxu0 %v192
    %292 = vmatprep.subr.bf16.mxu0 0
    %293 = vmatpush1.bf16.msra.mxu0 %v189
    %294 = vmatprep.subr.bf16.mxu0 0
    %295 = vmatpush1.bf16.msra.mxu0 %v186
    %296 = vmatprep.subr.bf16.mxu0 0
    %297 = vmatpush1.bf16.msra.mxu0 %v183
    %298 = vmatprep.subr.bf16.mxu0 0
    %299 = vmatpush2.bf16.msra.mxu0 0
    %300 = vmatprep.subr.bf16.mxu0 0
    %301 = vmatpush2.bf16.msra.mxu0 0
    %302 = vmatprep.subr.bf16.mxu0 0
    %303 = vmatpush2.bf16.msra.mxu0 0
    %304 = vmatprep.subr.bf16.mxu0 0
    %305 = vmatpush2.bf16.msra.mxu0 0
    %306 = vmatprep.subr.bf16.mxu0 0
    %307 = vmatpush2.bf16.msra.mxu0 0
    %308 = vmatprep.subr.bf16.mxu0 0
    %309 = vmatpush2.bf16.msra.mxu0 0
    %310 = vmatprep.subr.bf16.mxu0 0
    %311 = vmatpush2.bf16.msra.mxu0 0
    %312 = vmatprep.subr.bf16.mxu0 0
    %313 = vmatpush2.bf16.msra.mxu0 0
    %314 = vmatprep.mubr.bf16.mxu0 0
    %315 = vmatmul.mubr.bf16.gmra.mxu0 %v67
    %v316 = vpop.f32.mrf.mxu0
    %v317 = vadd.f32 0.0, %v316
    %v318 = vpop.f32.mrf.mxu0
    %v319 = vpop.f32.mrf.mxu0
    %v320 = vadd.f32 0.0, %v319
    %v321 = vpop.f32.mrf.mxu0
    %322 = vmatprep.mubr.bf16.mxu0 0
    %323 = vmatmul.mubr.bf16.gmra.mxu0 %v68
    %v324 = vpop.f32.mrf.mxu0
    %v325 = vadd.f32 0.0, %v324
    %v326 = vpop.f32.mrf.mxu0
    %v327 = vpop.f32.mrf.mxu0
    %v328 = vadd.f32 0.0, %v327
    %v329 = vpop.f32.mrf.mxu0
    %330 = vdwg.mxu0
    %335 = vrot.lane.b32.xlu0 %v264, 96
    %v336 = vpop.permute.xlu0 %335
    %337 = vrot.lane.b32.xlu0 %v268, 96
    %v338 = vpop.permute.xlu0 %337
    %339 = vrot.lane.b32.xlu0 %v274, 96
    %v340 = vpop.permute.xlu0 %339
    %341 = vrot.lane.b32.xlu0 %v278, 96
    %v342 = vpop.permute.xlu0 %341
    %347 = vrot.lane.b32.xlu0 %v264, 64
    %v348 = vpop.permute.xlu0 %347
    %349 = vrot.lane.b32.xlu0 %v268, 64
    %v350 = vpop.permute.xlu0 %349
    %351 = vrot.lane.b32.xlu0 %v274, 64
    %v352 = vpop.permute.xlu0 %351
    %353 = vrot.lane.b32.xlu0 %v278, 64
    %v354 = vpop.permute.xlu0 %353
    %359 = vrot.lane.b32.xlu0 %v264, 32
    %v360 = vpop.permute.xlu0 %359
    %361 = vrot.lane.b32.xlu0 %v268, 32
    %v362 = vpop.permute.xlu0 %361
    %363 = vrot.lane.b32.xlu0 %v274, 32
    %v364 = vpop.permute.xlu0 %363
    %365 = vrot.lane.b32.xlu0 %v278, 32
    %v366 = vpop.permute.xlu0 %365
    %v371 = vcombine.low %v264, %v348
    %v372 = vcombine.high %v264, %v348
    %v374 = vunpack.c.l.s4 1983009808
    %v375 = vunpack.c.0.s8 %v374
    %v376 = vlaneseq
    %v377 = vshrl.u32 %v376, 7
    %v378 = vsub.s32 %v375, %v377
    %v379 = vrot.slane %v371, %v378
    %v381 = vunpack.c.l.s4 1983009808
    %v382 = vunpack.c.0.s8 %v381
    %v383 = vlaneseq
    %v384 = vshrl.u32 %v383, 7
    %v385 = vsub.s32 %v382, %v384
    %v386 = vrot.slane %v372, %v385
    %v387 = vcombine.low %v336, %v360
    %v388 = vcombine.high %v336, %v360
    %v390 = vunpack.c.l.s4 1983009808
    %v391 = vunpack.c.0.s8 %v390
    %v392 = vlaneseq
    %v393 = vshrl.u32 %v392, 7
    %v394 = vsub.s32 %v391, %v393
    %v395 = vrot.slane %v387, %v394
    %v397 = vunpack.c.l.s4 1983009808
    %v398 = vunpack.c.0.s8 %v397
    %v399 = vlaneseq
    %v400 = vshrl.u32 %v399, 7
    %v401 = vsub.s32 %v398, %v400
    %v402 = vrot.slane %v388, %v401
    %v403 = vcombine.low %v379, %v395
    %v404 = vcombine.high %v379, %v395
    %v406 = vunpack.c.l.s4 1934713408
    %v407 = vunpack.c.0.s8 %v406
    %v408 = vlaneseq
    %v409 = vshrl.u32 %v408, 7
    %v410 = vsub.s32 %v407, %v409
    %v411 = vrot.slane %v403, %v410
    %v413 = vunpack.c.l.s4 1934713408
    %v414 = vunpack.c.0.s8 %v413
    %v415 = vlaneseq
    %v416 = vshrl.u32 %v415, 7
    %v417 = vsub.s32 %v414, %v416
    %v418 = vrot.slane %v404, %v417
    %v419 = vcombine.low %v386, %v402
    %v420 = vcombine.high %v386, %v402
    %v422 = vunpack.c.l.s4 1934713408
    %v423 = vunpack.c.0.s8 %v422
    %v424 = vlaneseq
    %v425 = vshrl.u32 %v424, 7
    %v426 = vsub.s32 %v423, %v425
    %v427 = vrot.slane %v419, %v426
    %v429 = vunpack.c.l.s4 1934713408
    %v430 = vunpack.c.0.s8 %v429
    %v431 = vlaneseq
    %v432 = vshrl.u32 %v431, 7
    %v433 = vsub.s32 %v430, %v432
    %v434 = vrot.slane %v420, %v433
    %v435 = vcombine.high %v411, 0.0
    %v436 = vcombine.high %v418, 0.0
    %v437 = vcombine.high %v427, 0.0
    %v438 = vcombine.high %v434, 0.0
    %v439 = vcombine.low %v268, %v350
    %v440 = vcombine.high %v268, %v350
    %v442 = vunpack.c.l.s4 1983009808
    %v443 = vunpack.c.0.s8 %v442
    %v444 = vlaneseq
    %v445 = vshrl.u32 %v444, 7
    %v446 = vsub.s32 %v443, %v445
    %v447 = vrot.slane %v439, %v446
    %v449 = vunpack.c.l.s4 1983009808
    %v450 = vunpack.c.0.s8 %v449
    %v451 = vlaneseq
    %v452 = vshrl.u32 %v451, 7
    %v453 = vsub.s32 %v450, %v452
    %v454 = vrot.slane %v440, %v453
    %v455 = vcombine.low %v338, %v362
    %v456 = vcombine.high %v338, %v362
    %v458 = vunpack.c.l.s4 1983009808
    %v459 = vunpack.c.0.s8 %v458
    %v460 = vlaneseq
    %v461 = vshrl.u32 %v460, 7
    %v462 = vsub.s32 %v459, %v461
    %v463 = vrot.slane %v455, %v462
    %v465 = vunpack.c.l.s4 1983009808
    %v466 = vunpack.c.0.s8 %v465
    %v467 = vlaneseq
    %v468 = vshrl.u32 %v467, 7
    %v469 = vsub.s32 %v466, %v468
    %v470 = vrot.slane %v456, %v469
    %v471 = vcombine.low %v447, %v463
    %v472 = vcombine.high %v447, %v463
    %v474 = vunpack.c.l.s4 1934713408
    %v475 = vunpack.c.0.s8 %v474
    %v476 = vlaneseq
    %v477 = vshrl.u32 %v476, 7
    %v478 = vsub.s32 %v475, %v477
    %v479 = vrot.slane %v471, %v478
    %v481 = vunpack.c.l.s4 1934713408
    %v482 = vunpack.c.0.s8 %v481
    %v483 = vlaneseq
    %v484 = vshrl.u32 %v483, 7
    %v485 = vsub.s32 %v482, %v484
    %v486 = vrot.slane %v472, %v485
    %v487 = vcombine.low %v454, %v470
    %v488 = vcombine.high %v454, %v470
    %v490 = vunpack.c.l.s4 1934713408
    %v491 = vunpack.c.0.s8 %v490
    %v492 = vlaneseq
    %v493 = vshrl.u32 %v492, 7
    %v494 = vsub.s32 %v491, %v493
    %v495 = vrot.slane %v487, %v494
    %v497 = vunpack.c.l.s4 1934713408
    %v498 = vunpack.c.0.s8 %v497
    %v499 = vlaneseq
    %v500 = vshrl.u32 %v499, 7
    %v501 = vsub.s32 %v498, %v500
    %v502 = vrot.slane %v488, %v501
    %v503 = vcombine.high %v479, 0.0
    %v504 = vcombine.high %v486, 0.0
    %v505 = vcombine.high %v495, 0.0
    %v506 = vcombine.high %v502, 0.0
    %v507 = vcombine.low %v274, %v352
    %v508 = vcombine.high %v274, %v352
    %v510 = vunpack.c.l.s4 1983009808
    %v511 = vunpack.c.0.s8 %v510
    %v512 = vlaneseq
    %v513 = vshrl.u32 %v512, 7
    %v514 = vsub.s32 %v511, %v513
    %v515 = vrot.slane %v507, %v514
    %v517 = vunpack.c.l.s4 1983009808
    %v518 = vunpack.c.0.s8 %v517
    %v519 = vlaneseq
    %v520 = vshrl.u32 %v519, 7
    %v521 = vsub.s32 %v518, %v520
    %v522 = vrot.slane %v508, %v521
    %v523 = vcombine.low %v340, %v364
    %v524 = vcombine.high %v340, %v364
    %v526 = vunpack.c.l.s4 1983009808
    %v527 = vunpack.c.0.s8 %v526
    %v528 = vlaneseq
    %v529 = vshrl.u32 %v528, 7
    %v530 = vsub.s32 %v527, %v529
    %v531 = vrot.slane %v523, %v530
    %v533 = vunpack.c.l.s4 1983009808
    %v534 = vunpack.c.0.s8 %v533
    %v535 = vlaneseq
    %v536 = vshrl.u32 %v535, 7
    %v537 = vsub.s32 %v534, %v536
    %v538 = vrot.slane %v524, %v537
    %v539 = vcombine.low %v515, %v531
    %v540 = vcombine.high %v515, %v531
    %v542 = vunpack.c.l.s4 1934713408
    %v543 = vunpack.c.0.s8 %v542
    %v544 = vlaneseq
    %v545 = vshrl.u32 %v544, 7
    %v546 = vsub.s32 %v543, %v545
    %v547 = vrot.slane %v539, %v546
    %v549 = vunpack.c.l.s4 1934713408
    %v550 = vunpack.c.0.s8 %v549
    %v551 = vlaneseq
    %v552 = vshrl.u32 %v551, 7
    %v553 = vsub.s32 %v550, %v552
    %v554 = vrot.slane %v540, %v553
    %v555 = vcombine.low %v522, %v538
    %v556 = vcombine.high %v522, %v538
    %v558 = vunpack.c.l.s4 1934713408
    %v559 = vunpack.c.0.s8 %v558
    %v560 = vlaneseq
    %v561 = vshrl.u32 %v560, 7
    %v562 = vsub.s32 %v559, %v561
    %v563 = vrot.slane %v555, %v562
    %v565 = vunpack.c.l.s4 1934713408
    %v566 = vunpack.c.0.s8 %v565
    %v567 = vlaneseq
    %v568 = vshrl.u32 %v567, 7
    %v569 = vsub.s32 %v566, %v568
    %v570 = vrot.slane %v556, %v569
    %v571 = vcombine.high %v547, 0.0
    %v572 = vcombine.high %v554, 0.0
    %v573 = vcombine.high %v563, 0.0
    %v574 = vcombine.high %v570, 0.0
    %v575 = vcombine.low %v278, %v354
    %v576 = vcombine.high %v278, %v354
    %v578 = vunpack.c.l.s4 1983009808
    %v579 = vunpack.c.0.s8 %v578
    %v580 = vlaneseq
    %v581 = vshrl.u32 %v580, 7
    %v582 = vsub.s32 %v579, %v581
    %v583 = vrot.slane %v575, %v582
    %v585 = vunpack.c.l.s4 1983009808
    %v586 = vunpack.c.0.s8 %v585
    %v587 = vlaneseq
    %v588 = vshrl.u32 %v587, 7
    %v589 = vsub.s32 %v586, %v588
    %v590 = vrot.slane %v576, %v589
    %v591 = vcombine.low %v342, %v366
    %v592 = vcombine.high %v342, %v366
    %v594 = vunpack.c.l.s4 1983009808
    %v595 = vunpack.c.0.s8 %v594
    %v596 = vlaneseq
    %v597 = vshrl.u32 %v596, 7
    %v598 = vsub.s32 %v595, %v597
    %v599 = vrot.slane %v591, %v598
    %v601 = vunpack.c.l.s4 1983009808
    %v602 = vunpack.c.0.s8 %v601
    %v603 = vlaneseq
    %v604 = vshrl.u32 %v603, 7
    %v605 = vsub.s32 %v602, %v604
    %v606 = vrot.slane %v592, %v605
    %v607 = vcombine.low %v583, %v599
    %v608 = vcombine.high %v583, %v599
    %v610 = vunpack.c.l.s4 1934713408
    %v611 = vunpack.c.0.s8 %v610
    %v612 = vlaneseq
    %v613 = vshrl.u32 %v612, 7
    %v614 = vsub.s32 %v611, %v613
    %v615 = vrot.slane %v607, %v614
    %v617 = vunpack.c.l.s4 1934713408
    %v618 = vunpack.c.0.s8 %v617
    %v619 = vlaneseq
    %v620 = vshrl.u32 %v619, 7
    %v621 = vsub.s32 %v618, %v620
    %v622 = vrot.slane %v608, %v621
    %v623 = vcombine.low %v590, %v606
    %v624 = vcombine.high %v590, %v606
    %v626 = vunpack.c.l.s4 1934713408
    %v627 = vunpack.c.0.s8 %v626
    %v628 = vlaneseq
    %v629 = vshrl.u32 %v628, 7
    %v630 = vsub.s32 %v627, %v629
    %v631 = vrot.slane %v623, %v630
    %v633 = vunpack.c.l.s4 1934713408
    %v634 = vunpack.c.0.s8 %v633
    %v635 = vlaneseq
    %v636 = vshrl.u32 %v635, 7
    %v637 = vsub.s32 %v634, %v636
    %v638 = vrot.slane %v624, %v637
    %v639 = vcombine.high %v615, 0.0
    %v640 = vcombine.high %v622, 0.0
    %v641 = vcombine.high %v631, 0.0
    %v642 = vcombine.high %v638, 0.0
    %v643 = vcombine.low %v411, %v418
    %v645 = vunpack.c.l.s4 1983009808
    %v646 = vunpack.c.0.s8 %v645
    %v647 = vlaneseq
    %v648 = vshrl.u32 %v647, 7
    %v649 = vsub.s32 %v646, %v648
    %v650 = vrot.slane %v643, %v649
    %v651 = vcombine.low %v435, %v436
    %v653 = vunpack.c.l.s4 1983009808
    %v654 = vunpack.c.0.s8 %v653
    %v655 = vlaneseq
    %v656 = vshrl.u32 %v655, 7
    %v657 = vsub.s32 %v654, %v656
    %v658 = vrot.slane %v651, %v657
    %v659 = vcombine.low %v427, %v434
    %v661 = vunpack.c.l.s4 1983009808
    %v662 = vunpack.c.0.s8 %v661
    %v663 = vlaneseq
    %v664 = vshrl.u32 %v663, 7
    %v665 = vsub.s32 %v662, %v664
    %v666 = vrot.slane %v659, %v665
    %v667 = vcombine.low %v437, %v438
    %v669 = vunpack.c.l.s4 1983009808
    %v670 = vunpack.c.0.s8 %v669
    %v671 = vlaneseq
    %v672 = vshrl.u32 %v671, 7
    %v673 = vsub.s32 %v670, %v672
    %v674 = vrot.slane %v667, %v673
    %v675 = vcombine.low %v650, %v658
    %v676 = vcombine.high %v650, %v658
    %v678 = vunpack.c.l.s4 1934713408
    %v679 = vunpack.c.0.s8 %v678
    %v680 = vlaneseq
    %v681 = vshrl.u32 %v680, 7
    %v682 = vsub.s32 %v679, %v681
    %v683 = vrot.slane %v675, %v682
    %v685 = vunpack.c.l.s4 1934713408
    %v686 = vunpack.c.0.s8 %v685
    %v687 = vlaneseq
    %v688 = vshrl.u32 %v687, 7
    %v689 = vsub.s32 %v686, %v688
    %v690 = vrot.slane %v676, %v689
    %v691 = vcombine.low %v666, %v674
    %v692 = vcombine.high %v666, %v674
    %v694 = vunpack.c.l.s4 1934713408
    %v695 = vunpack.c.0.s8 %v694
    %v696 = vlaneseq
    %v697 = vshrl.u32 %v696, 7
    %v698 = vsub.s32 %v695, %v697
    %v699 = vrot.slane %v691, %v698
    %v701 = vunpack.c.l.s4 1934713408
    %v702 = vunpack.c.0.s8 %v701
    %v703 = vlaneseq
    %v704 = vshrl.u32 %v703, 7
    %v705 = vsub.s32 %v702, %v704
    %v706 = vrot.slane %v692, %v705
    %v707 = vcombine.low %v683, %v699
    %v708 = vcombine.high %v683, %v699
    %v709 = vcombine.low %v690, %v706
    %v710 = vcombine.high %v690, %v706
    %v711 = vcombine.low %v479, %v486
    %v713 = vunpack.c.l.s4 1983009808
    %v714 = vunpack.c.0.s8 %v713
    %v715 = vlaneseq
    %v716 = vshrl.u32 %v715, 7
    %v717 = vsub.s32 %v714, %v716
    %v718 = vrot.slane %v711, %v717
    %v719 = vcombine.low %v503, %v504
    %v721 = vunpack.c.l.s4 1983009808
    %v722 = vunpack.c.0.s8 %v721
    %v723 = vlaneseq
    %v724 = vshrl.u32 %v723, 7
    %v725 = vsub.s32 %v722, %v724
    %v726 = vrot.slane %v719, %v725
    %v727 = vcombine.low %v495, %v502
    %v729 = vunpack.c.l.s4 1983009808
    %v730 = vunpack.c.0.s8 %v729
    %v731 = vlaneseq
    %v732 = vshrl.u32 %v731, 7
    %v733 = vsub.s32 %v730, %v732
    %v734 = vrot.slane %v727, %v733
    %v735 = vcombine.low %v505, %v506
    %v737 = vunpack.c.l.s4 1983009808
    %v738 = vunpack.c.0.s8 %v737
    %v739 = vlaneseq
    %v740 = vshrl.u32 %v739, 7
    %v741 = vsub.s32 %v738, %v740
    %v742 = vrot.slane %v735, %v741
    %v743 = vcombine.low %v718, %v726
    %v744 = vcombine.high %v718, %v726
    %v746 = vunpack.c.l.s4 1934713408
    %v747 = vunpack.c.0.s8 %v746
    %v748 = vlaneseq
    %v749 = vshrl.u32 %v748, 7
    %v750 = vsub.s32 %v747, %v749
    %v751 = vrot.slane %v743, %v750
    %v753 = vunpack.c.l.s4 1934713408
    %v754 = vunpack.c.0.s8 %v753
    %v755 = vlaneseq
    %v756 = vshrl.u32 %v755, 7
    %v757 = vsub.s32 %v754, %v756
    %v758 = vrot.slane %v744, %v757
    %v759 = vcombine.low %v734, %v742
    %v760 = vcombine.high %v734, %v742
    %v762 = vunpack.c.l.s4 1934713408
    %v763 = vunpack.c.0.s8 %v762
    %v764 = vlaneseq
    %v765 = vshrl.u32 %v764, 7
    %v766 = vsub.s32 %v763, %v765
    %v767 = vrot.slane %v759, %v766
    %v769 = vunpack.c.l.s4 1934713408
    %v770 = vunpack.c.0.s8 %v769
    %v771 = vlaneseq
    %v772 = vshrl.u32 %v771, 7
    %v773 = vsub.s32 %v770, %v772
    %v774 = vrot.slane %v760, %v773
    %v775 = vcombine.low %v751, %v767
    %v776 = vcombine.high %v751, %v767
    %v777 = vcombine.low %v758, %v774
    %v778 = vcombine.high %v758, %v774
    %v779 = vcombine.low %v547, %v554
    %v781 = vunpack.c.l.s4 1983009808
    %v782 = vunpack.c.0.s8 %v781
    %v783 = vlaneseq
    %v784 = vshrl.u32 %v783, 7
    %v785 = vsub.s32 %v782, %v784
    %v786 = vrot.slane %v779, %v785
    %v787 = vcombine.low %v571, %v572
    %v789 = vunpack.c.l.s4 1983009808
    %v790 = vunpack.c.0.s8 %v789
    %v791 = vlaneseq
    %v792 = vshrl.u32 %v791, 7
    %v793 = vsub.s32 %v790, %v792
    %v794 = vrot.slane %v787, %v793
    %v795 = vcombine.low %v563, %v570
    %v797 = vunpack.c.l.s4 1983009808
    %v798 = vunpack.c.0.s8 %v797
    %v799 = vlaneseq
    %v800 = vshrl.u32 %v799, 7
    %v801 = vsub.s32 %v798, %v800
    %v802 = vrot.slane %v795, %v801
    %v803 = vcombine.low %v573, %v574
    %v805 = vunpack.c.l.s4 1983009808
    %v806 = vunpack.c.0.s8 %v805
    %v807 = vlaneseq
    %v808 = vshrl.u32 %v807, 7
    %v809 = vsub.s32 %v806, %v808
    %v810 = vrot.slane %v803, %v809
    %v811 = vcombine.low %v786, %v794
    %v812 = vcombine.high %v786, %v794
    %v814 = vunpack.c.l.s4 1934713408
    %v815 = vunpack.c.0.s8 %v814
    %v816 = vlaneseq
    %v817 = vshrl.u32 %v816, 7
    %v818 = vsub.s32 %v815, %v817
    %v819 = vrot.slane %v811, %v818
    %v821 = vunpack.c.l.s4 1934713408
    %v822 = vunpack.c.0.s8 %v821
    %v823 = vlaneseq
    %v824 = vshrl.u32 %v823, 7
    %v825 = vsub.s32 %v822, %v824
    %v826 = vrot.slane %v812, %v825
    %v827 = vcombine.low %v802, %v810
    %v828 = vcombine.high %v802, %v810
    %v830 = vunpack.c.l.s4 1934713408
    %v831 = vunpack.c.0.s8 %v830
    %v832 = vlaneseq
    %v833 = vshrl.u32 %v832, 7
    %v834 = vsub.s32 %v831, %v833
    %v835 = vrot.slane %v827, %v834
    %v837 = vunpack.c.l.s4 1934713408
    %v838 = vunpack.c.0.s8 %v837
    %v839 = vlaneseq
    %v840 = vshrl.u32 %v839, 7
    %v841 = vsub.s32 %v838, %v840
    %v842 = vrot.slane %v828, %v841
    %v843 = vcombine.low %v819, %v835
    %v844 = vcombine.high %v819, %v835
    %v845 = vcombine.low %v826, %v842
    %v846 = vcombine.high %v826, %v842
    %v847 = vcombine.low %v615, %v622
    %v849 = vunpack.c.l.s4 1983009808
    %v850 = vunpack.c.0.s8 %v849
    %v851 = vlaneseq
    %v852 = vshrl.u32 %v851, 7
    %v853 = vsub.s32 %v850, %v852
    %v854 = vrot.slane %v847, %v853
    %v855 = vcombine.low %v639, %v640
    %v857 = vunpack.c.l.s4 1983009808
    %v858 = vunpack.c.0.s8 %v857
    %v859 = vlaneseq
    %v860 = vshrl.u32 %v859, 7
    %v861 = vsub.s32 %v858, %v860
    %v862 = vrot.slane %v855, %v861
    %v863 = vcombine.low %v631, %v638
    %v865 = vunpack.c.l.s4 1983009808
    %v866 = vunpack.c.0.s8 %v865
    %v867 = vlaneseq
    %v868 = vshrl.u32 %v867, 7
    %v869 = vsub.s32 %v866, %v868
    %v870 = vrot.slane %v863, %v869
    %v871 = vcombine.low %v641, %v642
    %v873 = vunpack.c.l.s4 1983009808
    %v874 = vunpack.c.0.s8 %v873
    %v875 = vlaneseq
    %v876 = vshrl.u32 %v875, 7
    %v877 = vsub.s32 %v874, %v876
    %v878 = vrot.slane %v871, %v877
    %v879 = vcombine.low %v854, %v862
    %v880 = vcombine.high %v854, %v862
    %v882 = vunpack.c.l.s4 1934713408
    %v883 = vunpack.c.0.s8 %v882
    %v884 = vlaneseq
    %v885 = vshrl.u32 %v884, 7
    %v886 = vsub.s32 %v883, %v885
    %v887 = vrot.slane %v879, %v886
    %v889 = vunpack.c.l.s4 1934713408
    %v890 = vunpack.c.0.s8 %v889
    %v891 = vlaneseq
    %v892 = vshrl.u32 %v891, 7
    %v893 = vsub.s32 %v890, %v892
    %v894 = vrot.slane %v880, %v893
    %v895 = vcombine.low %v870, %v878
    %v896 = vcombine.high %v870, %v878
    %v898 = vunpack.c.l.s4 1934713408
    %v899 = vunpack.c.0.s8 %v898
    %v900 = vlaneseq
    %v901 = vshrl.u32 %v900, 7
    %v902 = vsub.s32 %v899, %v901
    %v903 = vrot.slane %v895, %v902
    %v905 = vunpack.c.l.s4 1934713408
    %v906 = vunpack.c.0.s8 %v905
    %v907 = vlaneseq
    %v908 = vshrl.u32 %v907, 7
    %v909 = vsub.s32 %v906, %v908
    %v910 = vrot.slane %v896, %v909
    %v911 = vcombine.low %v887, %v903
    %v912 = vcombine.high %v887, %v903
    %v913 = vcombine.low %v894, %v910
    %v914 = vcombine.high %v894, %v910
    %919 = vrot.lane.b32.xlu0 %v266, 96
    %v920 = vpop.permute.xlu0 %919
    %921 = vrot.lane.b32.xlu0 %v270, 96
    %v922 = vpop.permute.xlu0 %921
    %923 = vrot.lane.b32.xlu0 %v276, 96
    %v924 = vpop.permute.xlu0 %923
    %925 = vrot.lane.b32.xlu0 %v280, 96
    %v926 = vpop.permute.xlu0 %925
    %931 = vrot.lane.b32.xlu0 %v266, 64
    %v932 = vpop.permute.xlu0 %931
    %933 = vrot.lane.b32.xlu0 %v270, 64
    %v934 = vpop.permute.xlu0 %933
    %935 = vrot.lane.b32.xlu0 %v276, 64
    %v936 = vpop.permute.xlu0 %935
    %937 = vrot.lane.b32.xlu0 %v280, 64
    %v938 = vpop.permute.xlu0 %937
    %943 = vrot.lane.b32.xlu0 %v266, 32
    %v944 = vpop.permute.xlu0 %943
    %945 = vrot.lane.b32.xlu0 %v270, 32
    %v946 = vpop.permute.xlu0 %945
    %947 = vrot.lane.b32.xlu0 %v276, 32
    %v948 = vpop.permute.xlu0 %947
    %949 = vrot.lane.b32.xlu0 %v280, 32
    %v950 = vpop.permute.xlu0 %949
    %v955 = vcombine.low %v266, %v932
    %v956 = vcombine.high %v266, %v932
    %v958 = vunpack.c.l.s4 1983009808
    %v959 = vunpack.c.0.s8 %v958
    %v960 = vlaneseq
    %v961 = vshrl.u32 %v960, 7
    %v962 = vsub.s32 %v959, %v961
    %v963 = vrot.slane %v955, %v962
    %v965 = vunpack.c.l.s4 1983009808
    %v966 = vunpack.c.0.s8 %v965
    %v967 = vlaneseq
    %v968 = vshrl.u32 %v967, 7
    %v969 = vsub.s32 %v966, %v968
    %v970 = vrot.slane %v956, %v969
    %v971 = vcombine.low %v920, %v944
    %v972 = vcombine.high %v920, %v944
    %v974 = vunpack.c.l.s4 1983009808
    %v975 = vunpack.c.0.s8 %v974
    %v976 = vlaneseq
    %v977 = vshrl.u32 %v976, 7
    %v978 = vsub.s32 %v975, %v977
    %v979 = vrot.slane %v971, %v978
    %v981 = vunpack.c.l.s4 1983009808
    %v982 = vunpack.c.0.s8 %v981
    %v983 = vlaneseq
    %v984 = vshrl.u32 %v983, 7
    %v985 = vsub.s32 %v982, %v984
    %v986 = vrot.slane %v972, %v985
    %v987 = vcombine.low %v963, %v979
    %v988 = vcombine.high %v963, %v979
    %v990 = vunpack.c.l.s4 1934713408
    %v991 = vunpack.c.0.s8 %v990
    %v992 = vlaneseq
    %v993 = vshrl.u32 %v992, 7
    %v994 = vsub.s32 %v991, %v993
    %v995 = vrot.slane %v987, %v994
    %v997 = vunpack.c.l.s4 1934713408
    %v998 = vunpack.c.0.s8 %v997
    %v999 = vlaneseq
    %v1000 = vshrl.u32 %v999, 7
    %v1001 = vsub.s32 %v998, %v1000
    %v1002 = vrot.slane %v988, %v1001
    %v1003 = vcombine.low %v970, %v986
    %v1004 = vcombine.high %v970, %v986
    %v1006 = vunpack.c.l.s4 1934713408
    %v1007 = vunpack.c.0.s8 %v1006
    %v1008 = vlaneseq
    %v1009 = vshrl.u32 %v1008, 7
    %v1010 = vsub.s32 %v1007, %v1009
    %v1011 = vrot.slane %v1003, %v1010
    %v1013 = vunpack.c.l.s4 1934713408
    %v1014 = vunpack.c.0.s8 %v1013
    %v1015 = vlaneseq
    %v1016 = vshrl.u32 %v1015, 7
    %v1017 = vsub.s32 %v1014, %v1016
    %v1018 = vrot.slane %v1004, %v1017
    %v1019 = vcombine.high %v995, 0.0
    %v1020 = vcombine.high %v1002, 0.0
    %v1021 = vcombine.high %v1011, 0.0
    %v1022 = vcombine.high %v1018, 0.0
    %v1023 = vcombine.low %v270, %v934
    %v1024 = vcombine.high %v270, %v934
    %v1026 = vunpack.c.l.s4 1983009808
    %v1027 = vunpack.c.0.s8 %v1026
    %v1028 = vlaneseq
    %v1029 = vshrl.u32 %v1028, 7
    %v1030 = vsub.s32 %v1027, %v1029
    %v1031 = vrot.slane %v1023, %v1030
    %v1033 = vunpack.c.l.s4 1983009808
    %v1034 = vunpack.c.0.s8 %v1033
    %v1035 = vlaneseq
    %v1036 = vshrl.u32 %v1035, 7
    %v1037 = vsub.s32 %v1034, %v1036
    %v1038 = vrot.slane %v1024, %v1037
    %v1039 = vcombine.low %v922, %v946
    %v1040 = vcombine.high %v922, %v946
    %v1042 = vunpack.c.l.s4 1983009808
    %v1043 = vunpack.c.0.s8 %v1042
    %v1044 = vlaneseq
    %v1045 = vshrl.u32 %v1044, 7
    %v1046 = vsub.s32 %v1043, %v1045
    %v1047 = vrot.slane %v1039, %v1046
    %v1049 = vunpack.c.l.s4 1983009808
    %v1050 = vunpack.c.0.s8 %v1049
    %v1051 = vlaneseq
    %v1052 = vshrl.u32 %v1051, 7
    %v1053 = vsub.s32 %v1050, %v1052
    %v1054 = vrot.slane %v1040, %v1053
    %v1055 = vcombine.low %v1031, %v1047
    %v1056 = vcombine.high %v1031, %v1047
    %v1058 = vunpack.c.l.s4 1934713408
    %v1059 = vunpack.c.0.s8 %v1058
    %v1060 = vlaneseq
    %v1061 = vshrl.u32 %v1060, 7
    %v1062 = vsub.s32 %v1059, %v1061
    %v1063 = vrot.slane %v1055, %v1062
    %v1065 = vunpack.c.l.s4 1934713408
    %v1066 = vunpack.c.0.s8 %v1065
    %v1067 = vlaneseq
    %v1068 = vshrl.u32 %v1067, 7
    %v1069 = vsub.s32 %v1066, %v1068
    %v1070 = vrot.slane %v1056, %v1069
    %v1071 = vcombine.low %v1038, %v1054
    %v1072 = vcombine.high %v1038, %v1054
    %v1074 = vunpack.c.l.s4 1934713408
    %v1075 = vunpack.c.0.s8 %v1074
    %v1076 = vlaneseq
    %v1077 = vshrl.u32 %v1076, 7
    %v1078 = vsub.s32 %v1075, %v1077
    %v1079 = vrot.slane %v1071, %v1078
    %v1081 = vunpack.c.l.s4 1934713408
    %v1082 = vunpack.c.0.s8 %v1081
    %v1083 = vlaneseq
    %v1084 = vshrl.u32 %v1083, 7
    %v1085 = vsub.s32 %v1082, %v1084
    %v1086 = vrot.slane %v1072, %v1085
    %v1087 = vcombine.high %v1063, 0.0
    %v1088 = vcombine.high %v1070, 0.0
    %v1089 = vcombine.high %v1079, 0.0
    %v1090 = vcombine.high %v1086, 0.0
    %v1091 = vcombine.low %v276, %v936
    %v1092 = vcombine.high %v276, %v936
    %v1094 = vunpack.c.l.s4 1983009808
    %v1095 = vunpack.c.0.s8 %v1094
    %v1096 = vlaneseq
    %v1097 = vshrl.u32 %v1096, 7
    %v1098 = vsub.s32 %v1095, %v1097
    %v1099 = vrot.slane %v1091, %v1098
    %v1101 = vunpack.c.l.s4 1983009808
    %v1102 = vunpack.c.0.s8 %v1101
    %v1103 = vlaneseq
    %v1104 = vshrl.u32 %v1103, 7
    %v1105 = vsub.s32 %v1102, %v1104
    %v1106 = vrot.slane %v1092, %v1105
    %v1107 = vcombine.low %v924, %v948
    %v1108 = vcombine.high %v924, %v948
    %v1110 = vunpack.c.l.s4 1983009808
    %v1111 = vunpack.c.0.s8 %v1110
    %v1112 = vlaneseq
    %v1113 = vshrl.u32 %v1112, 7
    %v1114 = vsub.s32 %v1111, %v1113
    %v1115 = vrot.slane %v1107, %v1114
    %v1117 = vunpack.c.l.s4 1983009808
    %v1118 = vunpack.c.0.s8 %v1117
    %v1119 = vlaneseq
    %v1120 = vshrl.u32 %v1119, 7
    %v1121 = vsub.s32 %v1118, %v1120
    %v1122 = vrot.slane %v1108, %v1121
    %v1123 = vcombine.low %v1099, %v1115
    %v1124 = vcombine.high %v1099, %v1115
    %v1126 = vunpack.c.l.s4 1934713408
    %v1127 = vunpack.c.0.s8 %v1126
    %v1128 = vlaneseq
    %v1129 = vshrl.u32 %v1128, 7
    %v1130 = vsub.s32 %v1127, %v1129
    %v1131 = vrot.slane %v1123, %v1130
    %v1133 = vunpack.c.l.s4 1934713408
    %v1134 = vunpack.c.0.s8 %v1133
    %v1135 = vlaneseq
    %v1136 = vshrl.u32 %v1135, 7
    %v1137 = vsub.s32 %v1134, %v1136
    %v1138 = vrot.slane %v1124, %v1137
    %v1139 = vcombine.low %v1106, %v1122
    %v1140 = vcombine.high %v1106, %v1122
    %v1142 = vunpack.c.l.s4 1934713408
    %v1143 = vunpack.c.0.s8 %v1142
    %v1144 = vlaneseq
    %v1145 = vshrl.u32 %v1144, 7
    %v1146 = vsub.s32 %v1143, %v1145
    %v1147 = vrot.slane %v1139, %v1146
    %v1149 = vunpack.c.l.s4 1934713408
    %v1150 = vunpack.c.0.s8 %v1149
    %v1151 = vlaneseq
    %v1152 = vshrl.u32 %v1151, 7
    %v1153 = vsub.s32 %v1150, %v1152
    %v1154 = vrot.slane %v1140, %v1153
    %v1155 = vcombine.high %v1131, 0.0
    %v1156 = vcombine.high %v1138, 0.0
    %v1157 = vcombine.high %v1147, 0.0
    %v1158 = vcombine.high %v1154, 0.0
    %v1159 = vcombine.low %v280, %v938
    %v1160 = vcombine.high %v280, %v938
    %v1162 = vunpack.c.l.s4 1983009808
    %v1163 = vunpack.c.0.s8 %v1162
    %v1164 = vlaneseq
    %v1165 = vshrl.u32 %v1164, 7
    %v1166 = vsub.s32 %v1163, %v1165
    %v1167 = vrot.slane %v1159, %v1166
    %v1169 = vunpack.c.l.s4 1983009808
    %v1170 = vunpack.c.0.s8 %v1169
    %v1171 = vlaneseq
    %v1172 = vshrl.u32 %v1171, 7
    %v1173 = vsub.s32 %v1170, %v1172
    %v1174 = vrot.slane %v1160, %v1173
    %v1175 = vcombine.low %v926, %v950
    %v1176 = vcombine.high %v926, %v950
    %v1178 = vunpack.c.l.s4 1983009808
    %v1179 = vunpack.c.0.s8 %v1178
    %v1180 = vlaneseq
    %v1181 = vshrl.u32 %v1180, 7
    %v1182 = vsub.s32 %v1179, %v1181
    %v1183 = vrot.slane %v1175, %v1182
    %v1185 = vunpack.c.l.s4 1983009808
    %v1186 = vunpack.c.0.s8 %v1185
    %v1187 = vlaneseq
    %v1188 = vshrl.u32 %v1187, 7
    %v1189 = vsub.s32 %v1186, %v1188
    %v1190 = vrot.slane %v1176, %v1189
    %v1191 = vcombine.low %v1167, %v1183
    %v1192 = vcombine.high %v1167, %v1183
    %v1194 = vunpack.c.l.s4 1934713408
    %v1195 = vunpack.c.0.s8 %v1194
    %v1196 = vlaneseq
    %v1197 = vshrl.u32 %v1196, 7
    %v1198 = vsub.s32 %v1195, %v1197
    %v1199 = vrot.slane %v1191, %v1198
    %v1201 = vunpack.c.l.s4 1934713408
    %v1202 = vunpack.c.0.s8 %v1201
    %v1203 = vlaneseq
    %v1204 = vshrl.u32 %v1203, 7
    %v1205 = vsub.s32 %v1202, %v1204
    %v1206 = vrot.slane %v1192, %v1205
    %v1207 = vcombine.low %v1174, %v1190
    %v1208 = vcombine.high %v1174, %v1190
    %v1210 = vunpack.c.l.s4 1934713408
    %v1211 = vunpack.c.0.s8 %v1210
    %v1212 = vlaneseq
    %v1213 = vshrl.u32 %v1212, 7
    %v1214 = vsub.s32 %v1211, %v1213
    %v1215 = vrot.slane %v1207, %v1214
    %v1217 = vunpack.c.l.s4 1934713408
    %v1218 = vunpack.c.0.s8 %v1217
    %v1219 = vlaneseq
    %v1220 = vshrl.u32 %v1219, 7
    %v1221 = vsub.s32 %v1218, %v1220
    %v1222 = vrot.slane %v1208, %v1221
    %v1223 = vcombine.high %v1199, 0.0
    %v1224 = vcombine.high %v1206, 0.0
    %v1225 = vcombine.high %v1215, 0.0
    %v1226 = vcombine.high %v1222, 0.0
    %v1227 = vcombine.low %v995, %v1002
    %v1229 = vunpack.c.l.s4 1983009808
    %v1230 = vunpack.c.0.s8 %v1229
    %v1231 = vlaneseq
    %v1232 = vshrl.u32 %v1231, 7
    %v1233 = vsub.s32 %v1230, %v1232
    %v1234 = vrot.slane %v1227, %v1233
    %v1235 = vcombine.low %v1019, %v1020
    %v1237 = vunpack.c.l.s4 1983009808
    %v1238 = vunpack.c.0.s8 %v1237
    %v1239 = vlaneseq
    %v1240 = vshrl.u32 %v1239, 7
    %v1241 = vsub.s32 %v1238, %v1240
    %v1242 = vrot.slane %v1235, %v1241
    %v1243 = vcombine.low %v1011, %v1018
    %v1245 = vunpack.c.l.s4 1983009808
    %v1246 = vunpack.c.0.s8 %v1245
    %v1247 = vlaneseq
    %v1248 = vshrl.u32 %v1247, 7
    %v1249 = vsub.s32 %v1246, %v1248
    %v1250 = vrot.slane %v1243, %v1249
    %v1251 = vcombine.low %v1021, %v1022
    %v1253 = vunpack.c.l.s4 1983009808
    %v1254 = vunpack.c.0.s8 %v1253
    %v1255 = vlaneseq
    %v1256 = vshrl.u32 %v1255, 7
    %v1257 = vsub.s32 %v1254, %v1256
    %v1258 = vrot.slane %v1251, %v1257
    %v1259 = vcombine.low %v1234, %v1242
    %v1260 = vcombine.high %v1234, %v1242
    %v1262 = vunpack.c.l.s4 1934713408
    %v1263 = vunpack.c.0.s8 %v1262
    %v1264 = vlaneseq
    %v1265 = vshrl.u32 %v1264, 7
    %v1266 = vsub.s32 %v1263, %v1265
    %v1267 = vrot.slane %v1259, %v1266
    %v1269 = vunpack.c.l.s4 1934713408
    %v1270 = vunpack.c.0.s8 %v1269
    %v1271 = vlaneseq
    %v1272 = vshrl.u32 %v1271, 7
    %v1273 = vsub.s32 %v1270, %v1272
    %v1274 = vrot.slane %v1260, %v1273
    %v1275 = vcombine.low %v1250, %v1258
    %v1276 = vcombine.high %v1250, %v1258
    %v1278 = vunpack.c.l.s4 1934713408
    %v1279 = vunpack.c.0.s8 %v1278
    %v1280 = vlaneseq
    %v1281 = vshrl.u32 %v1280, 7
    %v1282 = vsub.s32 %v1279, %v1281
    %v1283 = vrot.slane %v1275, %v1282
    %v1285 = vunpack.c.l.s4 1934713408
    %v1286 = vunpack.c.0.s8 %v1285
    %v1287 = vlaneseq
    %v1288 = vshrl.u32 %v1287, 7
    %v1289 = vsub.s32 %v1286, %v1288
    %v1290 = vrot.slane %v1276, %v1289
    %v1291 = vcombine.low %v1267, %v1283
    %v1292 = vcombine.high %v1267, %v1283
    %v1293 = vcombine.low %v1274, %v1290
    %v1294 = vcombine.high %v1274, %v1290
    %v1295 = vcombine.low %v1063, %v1070
    %v1297 = vunpack.c.l.s4 1983009808
    %v1298 = vunpack.c.0.s8 %v1297
    %v1299 = vlaneseq
    %v1300 = vshrl.u32 %v1299, 7
    %v1301 = vsub.s32 %v1298, %v1300
    %v1302 = vrot.slane %v1295, %v1301
    %v1303 = vcombine.low %v1087, %v1088
    %v1305 = vunpack.c.l.s4 1983009808
    %v1306 = vunpack.c.0.s8 %v1305
    %v1307 = vlaneseq
    %v1308 = vshrl.u32 %v1307, 7
    %v1309 = vsub.s32 %v1306, %v1308
    %v1310 = vrot.slane %v1303, %v1309
    %v1311 = vcombine.low %v1079, %v1086
    %v1313 = vunpack.c.l.s4 1983009808
    %v1314 = vunpack.c.0.s8 %v1313
    %v1315 = vlaneseq
    %v1316 = vshrl.u32 %v1315, 7
    %v1317 = vsub.s32 %v1314, %v1316
    %v1318 = vrot.slane %v1311, %v1317
    %v1319 = vcombine.low %v1089, %v1090
    %v1321 = vunpack.c.l.s4 1983009808
    %v1322 = vunpack.c.0.s8 %v1321
    %v1323 = vlaneseq
    %v1324 = vshrl.u32 %v1323, 7
    %v1325 = vsub.s32 %v1322, %v1324
    %v1326 = vrot.slane %v1319, %v1325
    %v1327 = vcombine.low %v1302, %v1310
    %v1328 = vcombine.high %v1302, %v1310
    %v1330 = vunpack.c.l.s4 1934713408
    %v1331 = vunpack.c.0.s8 %v1330
    %v1332 = vlaneseq
    %v1333 = vshrl.u32 %v1332, 7
    %v1334 = vsub.s32 %v1331, %v1333
    %v1335 = vrot.slane %v1327, %v1334
    %v1337 = vunpack.c.l.s4 1934713408
    %v1338 = vunpack.c.0.s8 %v1337
    %v1339 = vlaneseq
    %v1340 = vshrl.u32 %v1339, 7
    %v1341 = vsub.s32 %v1338, %v1340
    %v1342 = vrot.slane %v1328, %v1341
    %v1343 = vcombine.low %v1318, %v1326
    %v1344 = vcombine.high %v1318, %v1326
    %v1346 = vunpack.c.l.s4 1934713408
    %v1347 = vunpack.c.0.s8 %v1346
    %v1348 = vlaneseq
    %v1349 = vshrl.u32 %v1348, 7
    %v1350 = vsub.s32 %v1347, %v1349
    %v1351 = vrot.slane %v1343, %v1350
    %v1353 = vunpack.c.l.s4 1934713408
    %v1354 = vunpack.c.0.s8 %v1353
    %v1355 = vlaneseq
    %v1356 = vshrl.u32 %v1355, 7
    %v1357 = vsub.s32 %v1354, %v1356
    %v1358 = vrot.slane %v1344, %v1357
    %v1359 = vcombine.low %v1335, %v1351
    %v1360 = vcombine.high %v1335, %v1351
    %v1361 = vcombine.low %v1342, %v1358
    %v1362 = vcombine.high %v1342, %v1358
    %v1363 = vcombine.low %v1131, %v1138
    %v1365 = vunpack.c.l.s4 1983009808
    %v1366 = vunpack.c.0.s8 %v1365
    %v1367 = vlaneseq
    %v1368 = vshrl.u32 %v1367, 7
    %v1369 = vsub.s32 %v1366, %v1368
    %v1370 = vrot.slane %v1363, %v1369
    %v1371 = vcombine.low %v1155, %v1156
    %v1373 = vunpack.c.l.s4 1983009808
    %v1374 = vunpack.c.0.s8 %v1373
    %v1375 = vlaneseq
    %v1376 = vshrl.u32 %v1375, 7
    %v1377 = vsub.s32 %v1374, %v1376
    %v1378 = vrot.slane %v1371, %v1377
    %v1379 = vcombine.low %v1147, %v1154
    %v1381 = vunpack.c.l.s4 1983009808
    %v1382 = vunpack.c.0.s8 %v1381
    %v1383 = vlaneseq
    %v1384 = vshrl.u32 %v1383, 7
    %v1385 = vsub.s32 %v1382, %v1384
    %v1386 = vrot.slane %v1379, %v1385
    %v1387 = vcombine.low %v1157, %v1158
    %v1389 = vunpack.c.l.s4 1983009808
    %v1390 = vunpack.c.0.s8 %v1389
    %v1391 = vlaneseq
    %v1392 = vshrl.u32 %v1391, 7
    %v1393 = vsub.s32 %v1390, %v1392
    %v1394 = vrot.slane %v1387, %v1393
    %v1395 = vcombine.low %v1370, %v1378
    %v1396 = vcombine.high %v1370, %v1378
    %v1398 = vunpack.c.l.s4 1934713408
    %v1399 = vunpack.c.0.s8 %v1398
    %v1400 = vlaneseq
    %v1401 = vshrl.u32 %v1400, 7
    %v1402 = vsub.s32 %v1399, %v1401
    %v1403 = vrot.slane %v1395, %v1402
    %v1405 = vunpack.c.l.s4 1934713408
    %v1406 = vunpack.c.0.s8 %v1405
    %v1407 = vlaneseq
    %v1408 = vshrl.u32 %v1407, 7
    %v1409 = vsub.s32 %v1406, %v1408
    %v1410 = vrot.slane %v1396, %v1409
    %v1411 = vcombine.low %v1386, %v1394
    %v1412 = vcombine.high %v1386, %v1394
    %v1414 = vunpack.c.l.s4 1934713408
    %v1415 = vunpack.c.0.s8 %v1414
    %v1416 = vlaneseq
    %v1417 = vshrl.u32 %v1416, 7
    %v1418 = vsub.s32 %v1415, %v1417
    %v1419 = vrot.slane %v1411, %v1418
    %v1421 = vunpack.c.l.s4 1934713408
    %v1422 = vunpack.c.0.s8 %v1421
    %v1423 = vlaneseq
    %v1424 = vshrl.u32 %v1423, 7
    %v1425 = vsub.s32 %v1422, %v1424
    %v1426 = vrot.slane %v1412, %v1425
    %v1427 = vcombine.low %v1403, %v1419
    %v1428 = vcombine.high %v1403, %v1419
    %v1429 = vcombine.low %v1410, %v1426
    %v1430 = vcombine.high %v1410, %v1426
    %v1431 = vcombine.low %v1199, %v1206
    %v1433 = vunpack.c.l.s4 1983009808
    %v1434 = vunpack.c.0.s8 %v1433
    %v1435 = vlaneseq
    %v1436 = vshrl.u32 %v1435, 7
    %v1437 = vsub.s32 %v1434, %v1436
    %v1438 = vrot.slane %v1431, %v1437
    %v1439 = vcombine.low %v1223, %v1224
    %v1441 = vunpack.c.l.s4 1983009808
    %v1442 = vunpack.c.0.s8 %v1441
    %v1443 = vlaneseq
    %v1444 = vshrl.u32 %v1443, 7
    %v1445 = vsub.s32 %v1442, %v1444
    %v1446 = vrot.slane %v1439, %v1445
    %v1447 = vcombine.low %v1215, %v1222
    %v1449 = vunpack.c.l.s4 1983009808
    %v1450 = vunpack.c.0.s8 %v1449
    %v1451 = vlaneseq
    %v1452 = vshrl.u32 %v1451, 7
    %v1453 = vsub.s32 %v1450, %v1452
    %v1454 = vrot.slane %v1447, %v1453
    %v1455 = vcombine.low %v1225, %v1226
    %v1457 = vunpack.c.l.s4 1983009808
    %v1458 = vunpack.c.0.s8 %v1457
    %v1459 = vlaneseq
    %v1460 = vshrl.u32 %v1459, 7
    %v1461 = vsub.s32 %v1458, %v1460
    %v1462 = vrot.slane %v1455, %v1461
    %v1463 = vcombine.low %v1438, %v1446
    %v1464 = vcombine.high %v1438, %v1446
    %v1466 = vunpack.c.l.s4 1934713408
    %v1467 = vunpack.c.0.s8 %v1466
    %v1468 = vlaneseq
    %v1469 = vshrl.u32 %v1468, 7
    %v1470 = vsub.s32 %v1467, %v1469
    %v1471 = vrot.slane %v1463, %v1470
    %v1473 = vunpack.c.l.s4 1934713408
    %v1474 = vunpack.c.0.s8 %v1473
    %v1475 = vlaneseq
    %v1476 = vshrl.u32 %v1475, 7
    %v1477 = vsub.s32 %v1474, %v1476
    %v1478 = vrot.slane %v1464, %v1477
    %v1479 = vcombine.low %v1454, %v1462
    %v1480 = vcombine.high %v1454, %v1462
    %v1482 = vunpack.c.l.s4 1934713408
    %v1483 = vunpack.c.0.s8 %v1482
    %v1484 = vlaneseq
    %v1485 = vshrl.u32 %v1484, 7
    %v1486 = vsub.s32 %v1483, %v1485
    %v1487 = vrot.slane %v1479, %v1486
    %v1489 = vunpack.c.l.s4 1934713408
    %v1490 = vunpack.c.0.s8 %v1489
    %v1491 = vlaneseq
    %v1492 = vshrl.u32 %v1491, 7
    %v1493 = vsub.s32 %v1490, %v1492
    %v1494 = vrot.slane %v1480, %v1493
    %v1495 = vcombine.low %v1471, %v1487
    %v1496 = vcombine.high %v1471, %v1487
    %v1497 = vcombine.low %v1478, %v1494
    %v1498 = vcombine.high %v1478, %v1494
    %1503 = vrot.lane.b32.xlu0 %v317, 96
    %v1504 = vpop.permute.xlu0 %1503
    %1505 = vrot.lane.b32.xlu0 %v320, 96
    %v1506 = vpop.permute.xlu0 %1505
    %1507 = vrot.lane.b32.xlu0 %v325, 96
    %v1508 = vpop.permute.xlu0 %1507
    %1509 = vrot.lane.b32.xlu0 %v328, 96
    %v1510 = vpop.permute.xlu0 %1509
    %1515 = vrot.lane.b32.xlu0 %v317, 64
    %v1516 = vpop.permute.xlu0 %1515
    %1517 = vrot.lane.b32.xlu0 %v320, 64
    %v1518 = vpop.permute.xlu0 %1517
    %1519 = vrot.lane.b32.xlu0 %v325, 64
    %v1520 = vpop.permute.xlu0 %1519
    %1521 = vrot.lane.b32.xlu0 %v328, 64
    %v1522 = vpop.permute.xlu0 %1521
    %1527 = vrot.lane.b32.xlu0 %v317, 32
    %v1528 = vpop.permute.xlu0 %1527
    %1529 = vrot.lane.b32.xlu0 %v320, 32
    %v1530 = vpop.permute.xlu0 %1529
    %1531 = vrot.lane.b32.xlu0 %v325, 32
    %v1532 = vpop.permute.xlu0 %1531
    %1533 = vrot.lane.b32.xlu0 %v328, 32
    %v1534 = vpop.permute.xlu0 %1533
    %v1539 = vcombine.low %v317, %v1516
    %v1540 = vcombine.high %v317, %v1516
    %v1542 = vunpack.c.l.s4 1983009808
    %v1543 = vunpack.c.0.s8 %v1542
    %v1544 = vlaneseq
    %v1545 = vshrl.u32 %v1544, 7
    %v1546 = vsub.s32 %v1543, %v1545
    %v1547 = vrot.slane %v1539, %v1546
    %v1549 = vunpack.c.l.s4 1983009808
    %v1550 = vunpack.c.0.s8 %v1549
    %v1551 = vlaneseq
    %v1552 = vshrl.u32 %v1551, 7
    %v1553 = vsub.s32 %v1550, %v1552
    %v1554 = vrot.slane %v1540, %v1553
    %v1555 = vcombine.low %v1504, %v1528
    %v1556 = vcombine.high %v1504, %v1528
    %v1558 = vunpack.c.l.s4 1983009808
    %v1559 = vunpack.c.0.s8 %v1558
    %v1560 = vlaneseq
    %v1561 = vshrl.u32 %v1560, 7
    %v1562 = vsub.s32 %v1559, %v1561
    %v1563 = vrot.slane %v1555, %v1562
    %v1565 = vunpack.c.l.s4 1983009808
    %v1566 = vunpack.c.0.s8 %v1565
    %v1567 = vlaneseq
    %v1568 = vshrl.u32 %v1567, 7
    %v1569 = vsub.s32 %v1566, %v1568
    %v1570 = vrot.slane %v1556, %v1569
    %v1571 = vcombine.low %v1547, %v1563
    %v1572 = vcombine.high %v1547, %v1563
    %v1574 = vunpack.c.l.s4 1934713408
    %v1575 = vunpack.c.0.s8 %v1574
    %v1576 = vlaneseq
    %v1577 = vshrl.u32 %v1576, 7
    %v1578 = vsub.s32 %v1575, %v1577
    %v1579 = vrot.slane %v1571, %v1578
    %v1581 = vunpack.c.l.s4 1934713408
    %v1582 = vunpack.c.0.s8 %v1581
    %v1583 = vlaneseq
    %v1584 = vshrl.u32 %v1583, 7
    %v1585 = vsub.s32 %v1582, %v1584
    %v1586 = vrot.slane %v1572, %v1585
    %v1587 = vcombine.low %v1554, %v1570
    %v1588 = vcombine.high %v1554, %v1570
    %v1590 = vunpack.c.l.s4 1934713408
    %v1591 = vunpack.c.0.s8 %v1590
    %v1592 = vlaneseq
    %v1593 = vshrl.u32 %v1592, 7
    %v1594 = vsub.s32 %v1591, %v1593
    %v1595 = vrot.slane %v1587, %v1594
    %v1597 = vunpack.c.l.s4 1934713408
    %v1598 = vunpack.c.0.s8 %v1597
    %v1599 = vlaneseq
    %v1600 = vshrl.u32 %v1599, 7
    %v1601 = vsub.s32 %v1598, %v1600
    %v1602 = vrot.slane %v1588, %v1601
    %v1603 = vcombine.high %v1579, 0.0
    %v1604 = vcombine.high %v1586, 0.0
    %v1605 = vcombine.high %v1595, 0.0
    %v1606 = vcombine.high %v1602, 0.0
    %v1607 = vcombine.low %v320, %v1518
    %v1608 = vcombine.high %v320, %v1518
    %v1610 = vunpack.c.l.s4 1983009808
    %v1611 = vunpack.c.0.s8 %v1610
    %v1612 = vlaneseq
    %v1613 = vshrl.u32 %v1612, 7
    %v1614 = vsub.s32 %v1611, %v1613
    %v1615 = vrot.slane %v1607, %v1614
    %v1617 = vunpack.c.l.s4 1983009808
    %v1618 = vunpack.c.0.s8 %v1617
    %v1619 = vlaneseq
    %v1620 = vshrl.u32 %v1619, 7
    %v1621 = vsub.s32 %v1618, %v1620
    %v1622 = vrot.slane %v1608, %v1621
    %v1623 = vcombine.low %v1506, %v1530
    %v1624 = vcombine.high %v1506, %v1530
    %v1626 = vunpack.c.l.s4 1983009808
    %v1627 = vunpack.c.0.s8 %v1626
    %v1628 = vlaneseq
    %v1629 = vshrl.u32 %v1628, 7
    %v1630 = vsub.s32 %v1627, %v1629
    %v1631 = vrot.slane %v1623, %v1630
    %v1633 = vunpack.c.l.s4 1983009808
    %v1634 = vunpack.c.0.s8 %v1633
    %v1635 = vlaneseq
    %v1636 = vshrl.u32 %v1635, 7
    %v1637 = vsub.s32 %v1634, %v1636
    %v1638 = vrot.slane %v1624, %v1637
    %v1639 = vcombine.low %v1615, %v1631
    %v1640 = vcombine.high %v1615, %v1631
    %v1642 = vunpack.c.l.s4 1934713408
    %v1643 = vunpack.c.0.s8 %v1642
    %v1644 = vlaneseq
    %v1645 = vshrl.u32 %v1644, 7
    %v1646 = vsub.s32 %v1643, %v1645
    %v1647 = vrot.slane %v1639, %v1646
    %v1649 = vunpack.c.l.s4 1934713408
    %v1650 = vunpack.c.0.s8 %v1649
    %v1651 = vlaneseq
    %v1652 = vshrl.u32 %v1651, 7
    %v1653 = vsub.s32 %v1650, %v1652
    %v1654 = vrot.slane %v1640, %v1653
    %v1655 = vcombine.low %v1622, %v1638
    %v1656 = vcombine.high %v1622, %v1638
    %v1658 = vunpack.c.l.s4 1934713408
    %v1659 = vunpack.c.0.s8 %v1658
    %v1660 = vlaneseq
    %v1661 = vshrl.u32 %v1660, 7
    %v1662 = vsub.s32 %v1659, %v1661
    %v1663 = vrot.slane %v1655, %v1662
    %v1665 = vunpack.c.l.s4 1934713408
    %v1666 = vunpack.c.0.s8 %v1665
    %v1667 = vlaneseq
    %v1668 = vshrl.u32 %v1667, 7
    %v1669 = vsub.s32 %v1666, %v1668
    %v1670 = vrot.slane %v1656, %v1669
    %v1671 = vcombine.high %v1647, 0.0
    %v1672 = vcombine.high %v1654, 0.0
    %v1673 = vcombine.high %v1663, 0.0
    %v1674 = vcombine.high %v1670, 0.0
    %v1675 = vcombine.low %v325, %v1520
    %v1676 = vcombine.high %v325, %v1520
    %v1678 = vunpack.c.l.s4 1983009808
    %v1679 = vunpack.c.0.s8 %v1678
    %v1680 = vlaneseq
    %v1681 = vshrl.u32 %v1680, 7
    %v1682 = vsub.s32 %v1679, %v1681
    %v1683 = vrot.slane %v1675, %v1682
    %v1685 = vunpack.c.l.s4 1983009808
    %v1686 = vunpack.c.0.s8 %v1685
    %v1687 = vlaneseq
    %v1688 = vshrl.u32 %v1687, 7
    %v1689 = vsub.s32 %v1686, %v1688
    %v1690 = vrot.slane %v1676, %v1689
    %v1691 = vcombine.low %v1508, %v1532
    %v1692 = vcombine.high %v1508, %v1532
    %v1694 = vunpack.c.l.s4 1983009808
    %v1695 = vunpack.c.0.s8 %v1694
    %v1696 = vlaneseq
    %v1697 = vshrl.u32 %v1696, 7
    %v1698 = vsub.s32 %v1695, %v1697
    %v1699 = vrot.slane %v1691, %v1698
    %v1701 = vunpack.c.l.s4 1983009808
    %v1702 = vunpack.c.0.s8 %v1701
    %v1703 = vlaneseq
    %v1704 = vshrl.u32 %v1703, 7
    %v1705 = vsub.s32 %v1702, %v1704
    %v1706 = vrot.slane %v1692, %v1705
    %v1707 = vcombine.low %v1683, %v1699
    %v1708 = vcombine.high %v1683, %v1699
    %v1710 = vunpack.c.l.s4 1934713408
    %v1711 = vunpack.c.0.s8 %v1710
    %v1712 = vlaneseq
    %v1713 = vshrl.u32 %v1712, 7
    %v1714 = vsub.s32 %v1711, %v1713
    %v1715 = vrot.slane %v1707, %v1714
    %v1717 = vunpack.c.l.s4 1934713408
    %v1718 = vunpack.c.0.s8 %v1717
    %v1719 = vlaneseq
    %v1720 = vshrl.u32 %v1719, 7
    %v1721 = vsub.s32 %v1718, %v1720
    %v1722 = vrot.slane %v1708, %v1721
    %v1723 = vcombine.low %v1690, %v1706
    %v1724 = vcombine.high %v1690, %v1706
    %v1726 = vunpack.c.l.s4 1934713408
    %v1727 = vunpack.c.0.s8 %v1726
    %v1728 = vlaneseq
    %v1729 = vshrl.u32 %v1728, 7
    %v1730 = vsub.s32 %v1727, %v1729
    %v1731 = vrot.slane %v1723, %v1730
    %v1733 = vunpack.c.l.s4 1934713408
    %v1734 = vunpack.c.0.s8 %v1733
    %v1735 = vlaneseq
    %v1736 = vshrl.u32 %v1735, 7
    %v1737 = vsub.s32 %v1734, %v1736
    %v1738 = vrot.slane %v1724, %v1737
    %v1739 = vcombine.high %v1715, 0.0
    %v1740 = vcombine.high %v1722, 0.0
    %v1741 = vcombine.high %v1731, 0.0
    %v1742 = vcombine.high %v1738, 0.0
    %v1743 = vcombine.low %v328, %v1522
    %v1744 = vcombine.high %v328, %v1522
    %v1746 = vunpack.c.l.s4 1983009808
    %v1747 = vunpack.c.0.s8 %v1746
    %v1748 = vlaneseq
    %v1749 = vshrl.u32 %v1748, 7
    %v1750 = vsub.s32 %v1747, %v1749
    %v1751 = vrot.slane %v1743, %v1750
    %v1753 = vunpack.c.l.s4 1983009808
    %v1754 = vunpack.c.0.s8 %v1753
    %v1755 = vlaneseq
    %v1756 = vshrl.u32 %v1755, 7
    %v1757 = vsub.s32 %v1754, %v1756
    %v1758 = vrot.slane %v1744, %v1757
    %v1759 = vcombine.low %v1510, %v1534
    %v1760 = vcombine.high %v1510, %v1534
    %v1762 = vunpack.c.l.s4 1983009808
    %v1763 = vunpack.c.0.s8 %v1762
    %v1764 = vlaneseq
    %v1765 = vshrl.u32 %v1764, 7
    %v1766 = vsub.s32 %v1763, %v1765
    %v1767 = vrot.slane %v1759, %v1766
    %v1769 = vunpack.c.l.s4 1983009808
    %v1770 = vunpack.c.0.s8 %v1769
    %v1771 = vlaneseq
    %v1772 = vshrl.u32 %v1771, 7
    %v1773 = vsub.s32 %v1770, %v1772
    %v1774 = vrot.slane %v1760, %v1773
    %v1775 = vcombine.low %v1751, %v1767
    %v1776 = vcombine.high %v1751, %v1767
    %v1778 = vunpack.c.l.s4 1934713408
    %v1779 = vunpack.c.0.s8 %v1778
    %v1780 = vlaneseq
    %v1781 = vshrl.u32 %v1780, 7
    %v1782 = vsub.s32 %v1779, %v1781
    %v1783 = vrot.slane %v1775, %v1782
    %v1785 = vunpack.c.l.s4 1934713408
    %v1786 = vunpack.c.0.s8 %v1785
    %v1787 = vlaneseq
    %v1788 = vshrl.u32 %v1787, 7
    %v1789 = vsub.s32 %v1786, %v1788
    %v1790 = vrot.slane %v1776, %v1789
    %v1791 = vcombine.low %v1758, %v1774
    %v1792 = vcombine.high %v1758, %v1774
    %v1794 = vunpack.c.l.s4 1934713408
    %v1795 = vunpack.c.0.s8 %v1794
    %v1796 = vlaneseq
    %v1797 = vshrl.u32 %v1796, 7
    %v1798 = vsub.s32 %v1795, %v1797
    %v1799 = vrot.slane %v1791, %v1798
    %v1801 = vunpack.c.l.s4 1934713408
    %v1802 = vunpack.c.0.s8 %v1801
    %v1803 = vlaneseq
    %v1804 = vshrl.u32 %v1803, 7
    %v1805 = vsub.s32 %v1802, %v1804
    %v1806 = vrot.slane %v1792, %v1805
    %v1807 = vcombine.high %v1783, 0.0
    %v1808 = vcombine.high %v1790, 0.0
    %v1809 = vcombine.high %v1799, 0.0
    %v1810 = vcombine.high %v1806, 0.0
    %v1811 = vcombine.low %v1579, %v1586
    %v1813 = vunpack.c.l.s4 1983009808
    %v1814 = vunpack.c.0.s8 %v1813
    %v1815 = vlaneseq
    %v1816 = vshrl.u32 %v1815, 7
    %v1817 = vsub.s32 %v1814, %v1816
    %v1818 = vrot.slane %v1811, %v1817
    %v1819 = vcombine.low %v1603, %v1604
    %v1821 = vunpack.c.l.s4 1983009808
    %v1822 = vunpack.c.0.s8 %v1821
    %v1823 = vlaneseq
    %v1824 = vshrl.u32 %v1823, 7
    %v1825 = vsub.s32 %v1822, %v1824
    %v1826 = vrot.slane %v1819, %v1825
    %v1827 = vcombine.low %v1595, %v1602
    %v1829 = vunpack.c.l.s4 1983009808
    %v1830 = vunpack.c.0.s8 %v1829
    %v1831 = vlaneseq
    %v1832 = vshrl.u32 %v1831, 7
    %v1833 = vsub.s32 %v1830, %v1832
    %v1834 = vrot.slane %v1827, %v1833
    %v1835 = vcombine.low %v1605, %v1606
    %v1837 = vunpack.c.l.s4 1983009808
    %v1838 = vunpack.c.0.s8 %v1837
    %v1839 = vlaneseq
    %v1840 = vshrl.u32 %v1839, 7
    %v1841 = vsub.s32 %v1838, %v1840
    %v1842 = vrot.slane %v1835, %v1841
    %v1843 = vcombine.low %v1818, %v1826
    %v1844 = vcombine.high %v1818, %v1826
    %v1846 = vunpack.c.l.s4 1934713408
    %v1847 = vunpack.c.0.s8 %v1846
    %v1848 = vlaneseq
    %v1849 = vshrl.u32 %v1848, 7
    %v1850 = vsub.s32 %v1847, %v1849
    %v1851 = vrot.slane %v1843, %v1850
    %v1853 = vunpack.c.l.s4 1934713408
    %v1854 = vunpack.c.0.s8 %v1853
    %v1855 = vlaneseq
    %v1856 = vshrl.u32 %v1855, 7
    %v1857 = vsub.s32 %v1854, %v1856
    %v1858 = vrot.slane %v1844, %v1857
    %v1859 = vcombine.low %v1834, %v1842
    %v1860 = vcombine.high %v1834, %v1842
    %v1862 = vunpack.c.l.s4 1934713408
    %v1863 = vunpack.c.0.s8 %v1862
    %v1864 = vlaneseq
    %v1865 = vshrl.u32 %v1864, 7
    %v1866 = vsub.s32 %v1863, %v1865
    %v1867 = vrot.slane %v1859, %v1866
    %v1869 = vunpack.c.l.s4 1934713408
    %v1870 = vunpack.c.0.s8 %v1869
    %v1871 = vlaneseq
    %v1872 = vshrl.u32 %v1871, 7
    %v1873 = vsub.s32 %v1870, %v1872
    %v1874 = vrot.slane %v1860, %v1873
    %v1875 = vcombine.low %v1851, %v1867
    %v1876 = vcombine.high %v1851, %v1867
    %v1877 = vcombine.low %v1858, %v1874
    %v1878 = vcombine.high %v1858, %v1874
    %v1879 = vcombine.low %v1647, %v1654
    %v1881 = vunpack.c.l.s4 1983009808
    %v1882 = vunpack.c.0.s8 %v1881
    %v1883 = vlaneseq
    %v1884 = vshrl.u32 %v1883, 7
    %v1885 = vsub.s32 %v1882, %v1884
    %v1886 = vrot.slane %v1879, %v1885
    %v1887 = vcombine.low %v1671, %v1672
    %v1889 = vunpack.c.l.s4 1983009808
    %v1890 = vunpack.c.0.s8 %v1889
    %v1891 = vlaneseq
    %v1892 = vshrl.u32 %v1891, 7
    %v1893 = vsub.s32 %v1890, %v1892
    %v1894 = vrot.slane %v1887, %v1893
    %v1895 = vcombine.low %v1663, %v1670
    %v1897 = vunpack.c.l.s4 1983009808
    %v1898 = vunpack.c.0.s8 %v1897
    %v1899 = vlaneseq
    %v1900 = vshrl.u32 %v1899, 7
    %v1901 = vsub.s32 %v1898, %v1900
    %v1902 = vrot.slane %v1895, %v1901
    %v1903 = vcombine.low %v1673, %v1674
    %v1905 = vunpack.c.l.s4 1983009808
    %v1906 = vunpack.c.0.s8 %v1905
    %v1907 = vlaneseq
    %v1908 = vshrl.u32 %v1907, 7
    %v1909 = vsub.s32 %v1906, %v1908
    %v1910 = vrot.slane %v1903, %v1909
    %v1911 = vcombine.low %v1886, %v1894
    %v1912 = vcombine.high %v1886, %v1894
    %v1914 = vunpack.c.l.s4 1934713408
    %v1915 = vunpack.c.0.s8 %v1914
    %v1916 = vlaneseq
    %v1917 = vshrl.u32 %v1916, 7
    %v1918 = vsub.s32 %v1915, %v1917
    %v1919 = vrot.slane %v1911, %v1918
    %v1921 = vunpack.c.l.s4 1934713408
    %v1922 = vunpack.c.0.s8 %v1921
    %v1923 = vlaneseq
    %v1924 = vshrl.u32 %v1923, 7
    %v1925 = vsub.s32 %v1922, %v1924
    %v1926 = vrot.slane %v1912, %v1925
    %v1927 = vcombine.low %v1902, %v1910
    %v1928 = vcombine.high %v1902, %v1910
    %v1930 = vunpack.c.l.s4 1934713408
    %v1931 = vunpack.c.0.s8 %v1930
    %v1932 = vlaneseq
    %v1933 = vshrl.u32 %v1932, 7
    %v1934 = vsub.s32 %v1931, %v1933
    %v1935 = vrot.slane %v1927, %v1934
    %v1937 = vunpack.c.l.s4 1934713408
    %v1938 = vunpack.c.0.s8 %v1937
    %v1939 = vlaneseq
    %v1940 = vshrl.u32 %v1939, 7
    %v1941 = vsub.s32 %v1938, %v1940
    %v1942 = vrot.slane %v1928, %v1941
    %v1943 = vcombine.low %v1919, %v1935
    %v1944 = vcombine.high %v1919, %v1935
    %v1945 = vcombine.low %v1926, %v1942
    %v1946 = vcombine.high %v1926, %v1942
    %v1947 = vcombine.low %v1715, %v1722
    %v1949 = vunpack.c.l.s4 1983009808
    %v1950 = vunpack.c.0.s8 %v1949
    %v1951 = vlaneseq
    %v1952 = vshrl.u32 %v1951, 7
    %v1953 = vsub.s32 %v1950, %v1952
    %v1954 = vrot.slane %v1947, %v1953
    %v1955 = vcombine.low %v1739, %v1740
    %v1957 = vunpack.c.l.s4 1983009808
    %v1958 = vunpack.c.0.s8 %v1957
    %v1959 = vlaneseq
    %v1960 = vshrl.u32 %v1959, 7
    %v1961 = vsub.s32 %v1958, %v1960
    %v1962 = vrot.slane %v1955, %v1961
    %v1963 = vcombine.low %v1731, %v1738
    %v1965 = vunpack.c.l.s4 1983009808
    %v1966 = vunpack.c.0.s8 %v1965
    %v1967 = vlaneseq
    %v1968 = vshrl.u32 %v1967, 7
    %v1969 = vsub.s32 %v1966, %v1968
    %v1970 = vrot.slane %v1963, %v1969
    %v1971 = vcombine.low %v1741, %v1742
    %v1973 = vunpack.c.l.s4 1983009808
    %v1974 = vunpack.c.0.s8 %v1973
    %v1975 = vlaneseq
    %v1976 = vshrl.u32 %v1975, 7
    %v1977 = vsub.s32 %v1974, %v1976
    %v1978 = vrot.slane %v1971, %v1977
    %v1979 = vcombine.low %v1954, %v1962
    %v1980 = vcombine.high %v1954, %v1962
    %v1982 = vunpack.c.l.s4 1934713408
    %v1983 = vunpack.c.0.s8 %v1982
    %v1984 = vlaneseq
    %v1985 = vshrl.u32 %v1984, 7
    %v1986 = vsub.s32 %v1983, %v1985
    %v1987 = vrot.slane %v1979, %v1986
    %v1989 = vunpack.c.l.s4 1934713408
    %v1990 = vunpack.c.0.s8 %v1989
    %v1991 = vlaneseq
    %v1992 = vshrl.u32 %v1991, 7
    %v1993 = vsub.s32 %v1990, %v1992
    %v1994 = vrot.slane %v1980, %v1993
    %v1995 = vcombine.low %v1970, %v1978
    %v1996 = vcombine.high %v1970, %v1978
    %v1998 = vunpack.c.l.s4 1934713408
    %v1999 = vunpack.c.0.s8 %v1998
    %v2000 = vlaneseq
    %v2001 = vshrl.u32 %v2000, 7
    %v2002 = vsub.s32 %v1999, %v2001
    %v2003 = vrot.slane %v1995, %v2002
    %v2005 = vunpack.c.l.s4 1934713408
    %v2006 = vunpack.c.0.s8 %v2005
    %v2007 = vlaneseq
    %v2008 = vshrl.u32 %v2007, 7
    %v2009 = vsub.s32 %v2006, %v2008
    %v2010 = vrot.slane %v1996, %v2009
    %v2011 = vcombine.low %v1987, %v2003
    %v2012 = vcombine.high %v1987, %v2003
    %v2013 = vcombine.low %v1994, %v2010
    %v2014 = vcombine.high %v1994, %v2010
    %v2015 = vcombine.low %v1783, %v1790
    %v2017 = vunpack.c.l.s4 1983009808
    %v2018 = vunpack.c.0.s8 %v2017
    %v2019 = vlaneseq
    %v2020 = vshrl.u32 %v2019, 7
    %v2021 = vsub.s32 %v2018, %v2020
    %v2022 = vrot.slane %v2015, %v2021
    %v2023 = vcombine.low %v1807, %v1808
    %v2025 = vunpack.c.l.s4 1983009808
    %v2026 = vunpack.c.0.s8 %v2025
    %v2027 = vlaneseq
    %v2028 = vshrl.u32 %v2027, 7
    %v2029 = vsub.s32 %v2026, %v2028
    %v2030 = vrot.slane %v2023, %v2029
    %v2031 = vcombine.low %v1799, %v1806
    %v2033 = vunpack.c.l.s4 1983009808
    %v2034 = vunpack.c.0.s8 %v2033
    %v2035 = vlaneseq
    %v2036 = vshrl.u32 %v2035, 7
    %v2037 = vsub.s32 %v2034, %v2036
    %v2038 = vrot.slane %v2031, %v2037
    %v2039 = vcombine.low %v1809, %v1810
    %v2041 = vunpack.c.l.s4 1983009808
    %v2042 = vunpack.c.0.s8 %v2041
    %v2043 = vlaneseq
    %v2044 = vshrl.u32 %v2043, 7
    %v2045 = vsub.s32 %v2042, %v2044
    %v2046 = vrot.slane %v2039, %v2045
    %v2047 = vcombine.low %v2022, %v2030
    %v2048 = vcombine.high %v2022, %v2030
    %v2050 = vunpack.c.l.s4 1934713408
    %v2051 = vunpack.c.0.s8 %v2050
    %v2052 = vlaneseq
    %v2053 = vshrl.u32 %v2052, 7
    %v2054 = vsub.s32 %v2051, %v2053
    %v2055 = vrot.slane %v2047, %v2054
    %v2057 = vunpack.c.l.s4 1934713408
    %v2058 = vunpack.c.0.s8 %v2057
    %v2059 = vlaneseq
    %v2060 = vshrl.u32 %v2059, 7
    %v2061 = vsub.s32 %v2058, %v2060
    %v2062 = vrot.slane %v2048, %v2061
    %v2063 = vcombine.low %v2038, %v2046
    %v2064 = vcombine.high %v2038, %v2046
    %v2066 = vunpack.c.l.s4 1934713408
    %v2067 = vunpack.c.0.s8 %v2066
    %v2068 = vlaneseq
    %v2069 = vshrl.u32 %v2068, 7
    %v2070 = vsub.s32 %v2067, %v2069
    %v2071 = vrot.slane %v2063, %v2070
    %v2073 = vunpack.c.l.s4 1934713408
    %v2074 = vunpack.c.0.s8 %v2073
    %v2075 = vlaneseq
    %v2076 = vshrl.u32 %v2075, 7
    %v2077 = vsub.s32 %v2074, %v2076
    %v2078 = vrot.slane %v2064, %v2077
    %v2079 = vcombine.low %v2055, %v2071
    %v2080 = vcombine.high %v2055, %v2071
    %v2081 = vcombine.low %v2062, %v2078
    %v2082 = vcombine.high %v2062, %v2078
    %v2083 = vpack.c.bf16 %v775, %v707
    %v2084 = vpack.c.bf16 %v776, %v708
    %v2085 = vpack.c.bf16 %v777, %v709
    %v2086 = vpack.c.bf16 %v778, %v710
    %v2087 = vpack.c.bf16 %v911, %v843
    %v2088 = vpack.c.bf16 %v912, %v844
    %v2089 = vpack.c.bf16 %v913, %v845
    %v2090 = vpack.c.bf16 %v914, %v846
    %v2091 = vpack.c.bf16 %v1359, %v1291
    %v2092 = vpack.c.bf16 %v1360, %v1292
    %v2093 = vpack.c.bf16 %v1361, %v1293
    %v2094 = vpack.c.bf16 %v1362, %v1294
    %v2095 = vpack.c.bf16 %v1495, %v1427
    %v2096 = vpack.c.bf16 %v1496, %v1428
    %v2097 = vpack.c.bf16 %v1497, %v1429
    %v2098 = vpack.c.bf16 %v1498, %v1430
    %vm2099 = vcmask 261120
    %v2101 = vsel %vm2099, %v2083, 0
    %v2104 = vsel %vm2099, %v2091, 0
    %2106 = vmatprep.subr.bf16.mxu0 0
    %2107 = vmatpush1.bf16.xpose.msra.mxu0 0
    %2108 = vmatprep.subr.bf16.mxu0 0
    %2109 = vmatpush1.bf16.xpose.msra.mxu0 0
    %2110 = vmatprep.subr.bf16.mxu0 0
    %2111 = vmatpush1.bf16.xpose.msra.mxu0 0
    %2112 = vmatprep.subr.bf16.mxu0 0
    %2113 = vmatpush1.bf16.xpose.msra.mxu0 0
    %2114 = vmatprep.subr.bf16.mxu0 0
    %2115 = vmatpush1.bf16.xpose.msra.mxu0 0
    %2116 = vmatprep.subr.bf16.mxu0 0
    %2117 = vmatpush1.bf16.xpose.msra.mxu0 0
    %2118 = vmatprep.subr.bf16.mxu0 0
    %2119 = vmatpush1.bf16.xpose.msra.mxu0 0
    %2120 = vmatprep.subr.bf16.mxu0 0
    %2121 = vmatpush1.bf16.xpose.msra.mxu0 %v2104
    %2122 = vmatprep.subr.bf16.mxu0 0
    %2123 = vmatpush2.bf16.xpose.msra.mxu0 0
    %2124 = vmatprep.subr.bf16.mxu0 0
    %2125 = vmatpush2.bf16.xpose.msra.mxu0 0
    %2126 = vmatprep.subr.bf16.mxu0 0
    %2127 = vmatpush2.bf16.xpose.msra.mxu0 0
    %2128 = vmatprep.subr.bf16.mxu0 0
    %2129 = vmatpush2.bf16.xpose.msra.mxu0 0
    %2130 = vmatprep.subr.bf16.mxu0 0
    %2131 = vmatpush2.bf16.xpose.msra.mxu0 0
    %2132 = vmatprep.subr.bf16.mxu0 0
    %2133 = vmatpush2.bf16.xpose.msra.mxu0 0
    %2134 = vmatprep.subr.bf16.mxu0 0
    %2135 = vmatpush2.bf16.xpose.msra.mxu0 0
    %2136 = vmatprep.subr.bf16.mxu0 0
    %2137 = vmatpush2.bf16.xpose.msra.mxu0 0
    %2138 = vmatprep.mubr.bf16.mxu0 0
    %2139 = vmatmul.mubr.bf16.gmra.mxu0 %v2101
    %v2140 = vpop.f32.mrf.mxu0
    %v2141 = vadd.f32 0.0, %v2140
    %v2142 = vpop.f32.mrf.mxu0
    %v2143 = vpop.f32.mrf.mxu0
    %v2144 = vadd.f32 0.0, %v2143
    %v2145 = vpop.f32.mrf.mxu0
    %2146 = vdwg.mxu0
    %v2148 = vsel %vm2099, %v2084, 0
    %v2151 = vsel %vm2099, %v2092, 0
    %2153 = vmatprep.subr.bf16.mxu0 0
    %2154 = vmatpush1.bf16.xpose.msra.mxu0 0
    %2155 = vmatprep.subr.bf16.mxu0 0
    %2156 = vmatpush1.bf16.xpose.msra.mxu0 0
    %2157 = vmatprep.subr.bf16.mxu0 0
    %2158 = vmatpush1.bf16.xpose.msra.mxu0 0
    %2159 = vmatprep.subr.bf16.mxu0 0
    %2160 = vmatpush1.bf16.xpose.msra.mxu0 0
    %2161 = vmatprep.subr.bf16.mxu0 0
    %2162 = vmatpush1.bf16.xpose.msra.mxu0 0
    %2163 = vmatprep.subr.bf16.mxu0 0
    %2164 = vmatpush1.bf16.xpose.msra.mxu0 0
    %2165 = vmatprep.subr.bf16.mxu0 0
    %2166 = vmatpush1.bf16.xpose.msra.mxu0 0
    %2167 = vmatprep.subr.bf16.mxu0 0
    %2168 = vmatpush1.bf16.xpose.msra.mxu0 %v2151
    %2169 = vmatprep.subr.bf16.mxu0 0
    %2170 = vmatpush2.bf16.xpose.msra.mxu0 0
    %2171 = vmatprep.subr.bf16.mxu0 0
    %2172 = vmatpush2.bf16.xpose.msra.mxu0 0
    %2173 = vmatprep.subr.bf16.mxu0 0
    %2174 = vmatpush2.bf16.xpose.msra.mxu0 0
    %2175 = vmatprep.subr.bf16.mxu0 0
    %2176 = vmatpush2.bf16.xpose.msra.mxu0 0
    %2177 = vmatprep.subr.bf16.mxu0 0
    %2178 = vmatpush2.bf16.xpose.msra.mxu0 0
    %2179 = vmatprep.subr.bf16.mxu0 0
    %2180 = vmatpush2.bf16.xpose.msra.mxu0 0
    %2181 = vmatprep.subr.bf16.mxu0 0
    %2182 = vmatpush2.bf16.xpose.msra.mxu0 0
    %2183 = vmatprep.subr.bf16.mxu0 0
    %2184 = vmatpush2.bf16.xpose.msra.mxu0 0
    %2185 = vmatprep.mubr.bf16.mxu0 0
    %2186 = vmatmul.mubr.bf16.gmra.mxu0 %v2148
    %v2187 = vpop.f32.mrf.mxu0
    %v2188 = vadd.f32 0.0, %v2187
    %v2189 = vpop.f32.mrf.mxu0
    %v2190 = vpop.f32.mrf.mxu0
    %v2191 = vadd.f32 0.0, %v2190
    %v2192 = vpop.f32.mrf.mxu0
    %2193 = vdwg.mxu0
    %v2195 = vsel %vm2099, %v2085, 0
    %v2198 = vsel %vm2099, %v2093, 0
    %2200 = vmatprep.subr.bf16.mxu0 0
    %2201 = vmatpush1.bf16.xpose.msra.mxu0 0
    %2202 = vmatprep.subr.bf16.mxu0 0
    %2203 = vmatpush1.bf16.xpose.msra.mxu0 0
    %2204 = vmatprep.subr.bf16.mxu0 0
    %2205 = vmatpush1.bf16.xpose.msra.mxu0 0
    %2206 = vmatprep.subr.bf16.mxu0 0
    %2207 = vmatpush1.bf16.xpose.msra.mxu0 0
    %2208 = vmatprep.subr.bf16.mxu0 0
    %2209 = vmatpush1.bf16.xpose.msra.mxu0 0
    %2210 = vmatprep.subr.bf16.mxu0 0
    %2211 = vmatpush1.bf16.xpose.msra.mxu0 0
    %2212 = vmatprep.subr.bf16.mxu0 0
    %2213 = vmatpush1.bf16.xpose.msra.mxu0 0
    %2214 = vmatprep.subr.bf16.mxu0 0
    %2215 = vmatpush1.bf16.xpose.msra.mxu0 %v2198
    %2216 = vmatprep.subr.bf16.mxu0 0
    %2217 = vmatpush2.bf16.xpose.msra.mxu0 0
    %2218 = vmatprep.subr.bf16.mxu0 0
    %2219 = vmatpush2.bf16.xpose.msra.mxu0 0
    %2220 = vmatprep.subr.bf16.mxu0 0
    %2221 = vmatpush2.bf16.xpose.msra.mxu0 0
    %2222 = vmatprep.subr.bf16.mxu0 0
    %2223 = vmatpush2.bf16.xpose.msra.mxu0 0
    %2224 = vmatprep.subr.bf16.mxu0 0
    %2225 = vmatpush2.bf16.xpose.msra.mxu0 0
    %2226 = vmatprep.subr.bf16.mxu0 0
    %2227 = vmatpush2.bf16.xpose.msra.mxu0 0
    %2228 = vmatprep.subr.bf16.mxu0 0
    %2229 = vmatpush2.bf16.xpose.msra.mxu0 0
    %2230 = vmatprep.subr.bf16.mxu0 0
    %2231 = vmatpush2.bf16.xpose.msra.mxu0 0
    %2232 = vmatprep.mubr.bf16.mxu0 0
    %2233 = vmatmul.mubr.bf16.gmra.mxu0 %v2195
    %v2234 = vpop.f32.mrf.mxu0
    %v2235 = vadd.f32 0.0, %v2234
    %v2236 = vpop.f32.mrf.mxu0
    %v2237 = vpop.f32.mrf.mxu0
    %v2238 = vadd.f32 0.0, %v2237
    %v2239 = vpop.f32.mrf.mxu0
    %2240 = vdwg.mxu0
    %v2242 = vsel %vm2099, %v2086, 0
    %v2245 = vsel %vm2099, %v2094, 0
    %2247 = vmatprep.subr.bf16.mxu0 0
    %2248 = vmatpush1.bf16.xpose.msra.mxu0 0
    %2249 = vmatprep.subr.bf16.mxu0 0
    %2250 = vmatpush1.bf16.xpose.msra.mxu0 0
    %2251 = vmatprep.subr.bf16.mxu0 0
    %2252 = vmatpush1.bf16.xpose.msra.mxu0 0
    %2253 = vmatprep.subr.bf16.mxu0 0
    %2254 = vmatpush1.bf16.xpose.msra.mxu0 0
    %2255 = vmatprep.subr.bf16.mxu0 0
    %2256 = vmatpush1.bf16.xpose.msra.mxu0 0
    %2257 = vmatprep.subr.bf16.mxu0 0
    %2258 = vmatpush1.bf16.xpose.msra.mxu0 0
    %2259 = vmatprep.subr.bf16.mxu0 0
    %2260 = vmatpush1.bf16.xpose.msra.mxu0 0
    %2261 = vmatprep.subr.bf16.mxu0 0
    %2262 = vmatpush1.bf16.xpose.msra.mxu0 %v2245
    %2263 = vmatprep.subr.bf16.mxu0 0
    %2264 = vmatpush2.bf16.xpose.msra.mxu0 0
    %2265 = vmatprep.subr.bf16.mxu0 0
    %2266 = vmatpush2.bf16.xpose.msra.mxu0 0
    %2267 = vmatprep.subr.bf16.mxu0 0
    %2268 = vmatpush2.bf16.xpose.msra.mxu0 0
    %2269 = vmatprep.subr.bf16.mxu0 0
    %2270 = vmatpush2.bf16.xpose.msra.mxu0 0
    %2271 = vmatprep.subr.bf16.mxu0 0
    %2272 = vmatpush2.bf16.xpose.msra.mxu0 0
    %2273 = vmatprep.subr.bf16.mxu0 0
    %2274 = vmatpush2.bf16.xpose.msra.mxu0 0
    %2275 = vmatprep.subr.bf16.mxu0 0
    %2276 = vmatpush2.bf16.xpose.msra.mxu0 0
    %2277 = vmatprep.subr.bf16.mxu0 0
    %2278 = vmatpush2.bf16.xpose.msra.mxu0 0
    %2279 = vmatprep.mubr.bf16.mxu0 0
    %2280 = vmatmul.mubr.bf16.gmra.mxu0 %v2242
    %v2281 = vpop.f32.mrf.mxu0
    %v2282 = vadd.f32 0.0, %v2281
    %v2283 = vpop.f32.mrf.mxu0
    %v2284 = vpop.f32.mrf.mxu0
    %v2285 = vadd.f32 0.0, %v2284
    %v2286 = vpop.f32.mrf.mxu0
    %2287 = vdwg.mxu0
    %v2289 = vsel %vm2099, %v2087, 0
    %v2292 = vsel %vm2099, %v2095, 0
    %2294 = vmatprep.subr.bf16.mxu0 0
    %2295 = vmatpush1.bf16.xpose.msra.mxu0 0
    %2296 = vmatprep.subr.bf16.mxu0 0
    %2297 = vmatpush1.bf16.xpose.msra.mxu0 0
    %2298 = vmatprep.subr.bf16.mxu0 0
    %2299 = vmatpush1.bf16.xpose.msra.mxu0 0
    %2300 = vmatprep.subr.bf16.mxu0 0
    %2301 = vmatpush1.bf16.xpose.msra.mxu0 0
    %2302 = vmatprep.subr.bf16.mxu0 0
    %2303 = vmatpush1.bf16.xpose.msra.mxu0 0
    %2304 = vmatprep.subr.bf16.mxu0 0
    %2305 = vmatpush1.bf16.xpose.msra.mxu0 0
    %2306 = vmatprep.subr.bf16.mxu0 0
    %2307 = vmatpush1.bf16.xpose.msra.mxu0 0
    %2308 = vmatprep.subr.bf16.mxu0 0
    %2309 = vmatpush1.bf16.xpose.msra.mxu0 %v2292
    %2310 = vmatprep.subr.bf16.mxu0 0
    %2311 = vmatpush2.bf16.xpose.msra.mxu0 0
    %2312 = vmatprep.subr.bf16.mxu0 0
    %2313 = vmatpush2.bf16.xpose.msra.mxu0 0
    %2314 = vmatprep.subr.bf16.mxu0 0
    %2315 = vmatpush2.bf16.xpose.msra.mxu0 0
    %2316 = vmatprep.subr.bf16.mxu0 0
    %2317 = vmatpush2.bf16.xpose.msra.mxu0 0
    %2318 = vmatprep.subr.bf16.mxu0 0
    %2319 = vmatpush2.bf16.xpose.msra.mxu0 0
    %2320 = vmatprep.subr.bf16.mxu0 0
    %2321 = vmatpush2.bf16.xpose.msra.mxu0 0
    %2322 = vmatprep.subr.bf16.mxu0 0
    %2323 = vmatpush2.bf16.xpose.msra.mxu0 0
    %2324 = vmatprep.subr.bf16.mxu0 0
    %2325 = vmatpush2.bf16.xpose.msra.mxu0 0
    %2326 = vmatprep.mubr.bf16.mxu0 0
    %2327 = vmatmul.mubr.bf16.gmra.mxu0 %v2289
    %v2328 = vpop.f32.mrf.mxu0
    %v2329 = vadd.f32 0.0, %v2328
    %v2330 = vpop.f32.mrf.mxu0
    %v2331 = vpop.f32.mrf.mxu0
    %v2332 = vadd.f32 0.0, %v2331
    %v2333 = vpop.f32.mrf.mxu0
    %2334 = vdwg.mxu0
    %v2336 = vsel %vm2099, %v2088, 0
    %v2339 = vsel %vm2099, %v2096, 0
    %2341 = vmatprep.subr.bf16.mxu0 0
    %2342 = vmatpush1.bf16.xpose.msra.mxu0 0
    %2343 = vmatprep.subr.bf16.mxu0 0
    %2344 = vmatpush1.bf16.xpose.msra.mxu0 0
    %2345 = vmatprep.subr.bf16.mxu0 0
    %2346 = vmatpush1.bf16.xpose.msra.mxu0 0
    %2347 = vmatprep.subr.bf16.mxu0 0
    %2348 = vmatpush1.bf16.xpose.msra.mxu0 0
    %2349 = vmatprep.subr.bf16.mxu0 0
    %2350 = vmatpush1.bf16.xpose.msra.mxu0 0
    %2351 = vmatprep.subr.bf16.mxu0 0
    %2352 = vmatpush1.bf16.xpose.msra.mxu0 0
    %2353 = vmatprep.subr.bf16.mxu0 0
    %2354 = vmatpush1.bf16.xpose.msra.mxu0 0
    %2355 = vmatprep.subr.bf16.mxu0 0
    %2356 = vmatpush1.bf16.xpose.msra.mxu0 %v2339
    %2357 = vmatprep.subr.bf16.mxu0 0
    %2358 = vmatpush2.bf16.xpose.msra.mxu0 0
    %2359 = vmatprep.subr.bf16.mxu0 0
    %2360 = vmatpush2.bf16.xpose.msra.mxu0 0
    %2361 = vmatprep.subr.bf16.mxu0 0
    %2362 = vmatpush2.bf16.xpose.msra.mxu0 0
    %2363 = vmatprep.subr.bf16.mxu0 0
    %2364 = vmatpush2.bf16.xpose.msra.mxu0 0
    %2365 = vmatprep.subr.bf16.mxu0 0
    %2366 = vmatpush2.bf16.xpose.msra.mxu0 0
    %2367 = vmatprep.subr.bf16.mxu0 0
    %2368 = vmatpush2.bf16.xpose.msra.mxu0 0
    %2369 = vmatprep.subr.bf16.mxu0 0
    %2370 = vmatpush2.bf16.xpose.msra.mxu0 0
    %2371 = vmatprep.subr.bf16.mxu0 0
    %2372 = vmatpush2.bf16.xpose.msra.mxu0 0
    %2373 = vmatprep.mubr.bf16.mxu0 0
    %2374 = vmatmul.mubr.bf16.gmra.mxu0 %v2336
    %v2375 = vpop.f32.mrf.mxu0
    %v2376 = vadd.f32 0.0, %v2375
    %v2377 = vpop.f32.mrf.mxu0
    %v2378 = vpop.f32.mrf.mxu0
    %v2379 = vadd.f32 0.0, %v2378
    %v2380 = vpop.f32.mrf.mxu0
    %2381 = vdwg.mxu0
    %v2383 = vsel %vm2099, %v2089, 0
    %v2386 = vsel %vm2099, %v2097, 0
    %2388 = vmatprep.subr.bf16.mxu0 0
    %2389 = vmatpush1.bf16.xpose.msra.mxu0 0
    %2390 = vmatprep.subr.bf16.mxu0 0
    %2391 = vmatpush1.bf16.xpose.msra.mxu0 0
    %2392 = vmatprep.subr.bf16.mxu0 0
    %2393 = vmatpush1.bf16.xpose.msra.mxu0 0
    %2394 = vmatprep.subr.bf16.mxu0 0
    %2395 = vmatpush1.bf16.xpose.msra.mxu0 0
    %2396 = vmatprep.subr.bf16.mxu0 0
    %2397 = vmatpush1.bf16.xpose.msra.mxu0 0
    %2398 = vmatprep.subr.bf16.mxu0 0
    %2399 = vmatpush1.bf16.xpose.msra.mxu0 0
    %2400 = vmatprep.subr.bf16.mxu0 0
    %2401 = vmatpush1.bf16.xpose.msra.mxu0 0
    %2402 = vmatprep.subr.bf16.mxu0 0
    %2403 = vmatpush1.bf16.xpose.msra.mxu0 %v2386
    %2404 = vmatprep.subr.bf16.mxu0 0
    %2405 = vmatpush2.bf16.xpose.msra.mxu0 0
    %2406 = vmatprep.subr.bf16.mxu0 0
    %2407 = vmatpush2.bf16.xpose.msra.mxu0 0
    %2408 = vmatprep.subr.bf16.mxu0 0
    %2409 = vmatpush2.bf16.xpose.msra.mxu0 0
    %2410 = vmatprep.subr.bf16.mxu0 0
    %2411 = vmatpush2.bf16.xpose.msra.mxu0 0
    %2412 = vmatprep.subr.bf16.mxu0 0
    %2413 = vmatpush2.bf16.xpose.msra.mxu0 0
    %2414 = vmatprep.subr.bf16.mxu0 0
    %2415 = vmatpush2.bf16.xpose.msra.mxu0 0
    %2416 = vmatprep.subr.bf16.mxu0 0
    %2417 = vmatpush2.bf16.xpose.msra.mxu0 0
    %2418 = vmatprep.subr.bf16.mxu0 0
    %2419 = vmatpush2.bf16.xpose.msra.mxu0 0
    %2420 = vmatprep.mubr.bf16.mxu0 0
    %2421 = vmatmul.mubr.bf16.gmra.mxu0 %v2383
    %v2422 = vpop.f32.mrf.mxu0
    %v2423 = vadd.f32 0.0, %v2422
    %v2424 = vpop.f32.mrf.mxu0
    %v2425 = vpop.f32.mrf.mxu0
    %v2426 = vadd.f32 0.0, %v2425
    %v2427 = vpop.f32.mrf.mxu0
    %2428 = vdwg.mxu0
    %v2430 = vsel %vm2099, %v2090, 0
    %v2433 = vsel %vm2099, %v2098, 0
    %2435 = vmatprep.subr.bf16.mxu0 0
    %2436 = vmatpush1.bf16.xpose.msra.mxu0 0
    %2437 = vmatprep.subr.bf16.mxu0 0
    %2438 = vmatpush1.bf16.xpose.msra.mxu0 0
    %2439 = vmatprep.subr.bf16.mxu0 0
    %2440 = vmatpush1.bf16.xpose.msra.mxu0 0
    %2441 = vmatprep.subr.bf16.mxu0 0
    %2442 = vmatpush1.bf16.xpose.msra.mxu0 0
    %2443 = vmatprep.subr.bf16.mxu0 0
    %2444 = vmatpush1.bf16.xpose.msra.mxu0 0
    %2445 = vmatprep.subr.bf16.mxu0 0
    %2446 = vmatpush1.bf16.xpose.msra.mxu0 0
    %2447 = vmatprep.subr.bf16.mxu0 0
    %2448 = vmatpush1.bf16.xpose.msra.mxu0 0
    %2449 = vmatprep.subr.bf16.mxu0 0
    %2450 = vmatpush1.bf16.xpose.msra.mxu0 %v2433
    %2451 = vmatprep.subr.bf16.mxu0 0
    %2452 = vmatpush2.bf16.xpose.msra.mxu0 0
    %2453 = vmatprep.subr.bf16.mxu0 0
    %2454 = vmatpush2.bf16.xpose.msra.mxu0 0
    %2455 = vmatprep.subr.bf16.mxu0 0
    %2456 = vmatpush2.bf16.xpose.msra.mxu0 0
    %2457 = vmatprep.subr.bf16.mxu0 0
    %2458 = vmatpush2.bf16.xpose.msra.mxu0 0
    %2459 = vmatprep.subr.bf16.mxu0 0
    %2460 = vmatpush2.bf16.xpose.msra.mxu0 0
    %2461 = vmatprep.subr.bf16.mxu0 0
    %2462 = vmatpush2.bf16.xpose.msra.mxu0 0
    %2463 = vmatprep.subr.bf16.mxu0 0
    %2464 = vmatpush2.bf16.xpose.msra.mxu0 0
    %2465 = vmatprep.subr.bf16.mxu0 0
    %2466 = vmatpush2.bf16.xpose.msra.mxu0 0
    %2467 = vmatprep.mubr.bf16.mxu0 0
    %2468 = vmatmul.mubr.bf16.gmra.mxu0 %v2430
    %v2469 = vpop.f32.mrf.mxu0
    %v2470 = vadd.f32 0.0, %v2469
    %v2471 = vpop.f32.mrf.mxu0
    %v2472 = vpop.f32.mrf.mxu0
    %v2473 = vadd.f32 0.0, %v2472
    %v2474 = vpop.f32.mrf.mxu0
    %2475 = vdwg.mxu0
    %v2476 = vlaneseq
    %v2477 = vand.u32 %v2476, 127
    %vm2478 = vcmp.lt.s32.totalorder %v2477, 13
    %v2479 = vsel %vm2478, 1, 0
    %vm2480 = vcmp.eq.s32.totalorder %v2479, 1
    %v2481 = vsel %vm2480, %v2141, -1e+30
    %v2482 = vsel %vm2480, %v2144, -1e+30
    %v2483 = vsel %vm2480, %v2188, -1e+30
    %v2484 = vsel %vm2480, %v2191, -1e+30
    %v2485 = vsel %vm2480, %v2235, -1e+30
    %v2486 = vsel %vm2480, %v2238, -1e+30
    %v2487 = vsel %vm2480, %v2282, -1e+30
    %v2488 = vsel %vm2480, %v2285, -1e+30
    %v2489 = vsel %vm2480, %v2329, -1e+30
    %v2490 = vsel %vm2480, %v2332, -1e+30
    %v2491 = vsel %vm2480, %v2376, -1e+30
    %v2492 = vsel %vm2480, %v2379, -1e+30
    %v2493 = vsel %vm2480, %v2423, -1e+30
    %v2494 = vsel %vm2480, %v2426, -1e+30
    %v2495 = vsel %vm2480, %v2470, -1e+30
    %v2496 = vsel %vm2480, %v2473, -1e+30
    %vm2497 = vcmask 130048
    %v2498 = vsel %vm2497, %v2481, -inf
    %2499 = vmax.xlane.f32.xlu0 %v2498
    %v2500 = vpop.xlane.xlu0 %2499
    %v2501 = vsel %vm2497, %v2482, -inf
    %2502 = vmax.xlane.f32.xlu0 %v2501
    %v2503 = vpop.xlane.xlu0 %2502
    %v2504 = vsel %vm2497, %v2483, -inf
    %2505 = vmax.xlane.f32.xlu0 %v2504
    %v2506 = vpop.xlane.xlu0 %2505
    %v2507 = vsel %vm2497, %v2484, -inf
    %2508 = vmax.xlane.f32.xlu0 %v2507
    %v2509 = vpop.xlane.xlu0 %2508
    %v2510 = vsel %vm2497, %v2485, -inf
    %2511 = vmax.xlane.f32.xlu0 %v2510
    %v2512 = vpop.xlane.xlu0 %2511
    %v2513 = vsel %vm2497, %v2486, -inf
    %2514 = vmax.xlane.f32.xlu0 %v2513
    %v2515 = vpop.xlane.xlu0 %2514
    %v2516 = vsel %vm2497, %v2487, -inf
    %2517 = vmax.xlane.f32.xlu0 %v2516
    %v2518 = vpop.xlane.xlu0 %2517
    %v2519 = vsel %vm2497, %v2488, -inf
    %2520 = vmax.xlane.f32.xlu0 %v2519
    %v2521 = vpop.xlane.xlu0 %2520
    %v2522 = vsel %vm2497, %v2489, -inf
    %2523 = vmax.xlane.f32.xlu0 %v2522
    %v2524 = vpop.xlane.xlu0 %2523
    %v2525 = vsel %vm2497, %v2490, -inf
    %2526 = vmax.xlane.f32.xlu0 %v2525
    %v2527 = vpop.xlane.xlu0 %2526
    %v2528 = vsel %vm2497, %v2491, -inf
    %2529 = vmax.xlane.f32.xlu0 %v2528
    %v2530 = vpop.xlane.xlu0 %2529
    %v2531 = vsel %vm2497, %v2492, -inf
    %2532 = vmax.xlane.f32.xlu0 %v2531
    %v2533 = vpop.xlane.xlu0 %2532
    %v2534 = vsel %vm2497, %v2493, -inf
    %2535 = vmax.xlane.f32.xlu0 %v2534
    %v2536 = vpop.xlane.xlu0 %2535
    %v2537 = vsel %vm2497, %v2494, -inf
    %2538 = vmax.xlane.f32.xlu0 %v2537
    %v2539 = vpop.xlane.xlu0 %2538
    %v2540 = vsel %vm2497, %v2495, -inf
    %2541 = vmax.xlane.f32.xlu0 %v2540
    %v2542 = vpop.xlane.xlu0 %2541
    %v2543 = vsel %vm2497, %v2496, -inf
    %2544 = vmax.xlane.f32.xlu0 %v2543
    %v2545 = vpop.xlane.xlu0 %2544
    %v2546 = vsub.f32 %v2481, %v2500
    %v2547 = vsub.f32 %v2482, %v2503
    %v2548 = vsub.f32 %v2483, %v2506
    %v2549 = vsub.f32 %v2484, %v2509
    %v2550 = vsub.f32 %v2485, %v2512
    %v2551 = vsub.f32 %v2486, %v2515
    %v2552 = vsub.f32 %v2487, %v2518
    %v2553 = vsub.f32 %v2488, %v2521
    %v2554 = vsub.f32 %v2489, %v2524
    %v2555 = vsub.f32 %v2490, %v2527
    %v2556 = vsub.f32 %v2491, %v2530
    %v2557 = vsub.f32 %v2492, %v2533
    %v2558 = vsub.f32 %v2493, %v2536
    %v2559 = vsub.f32 %v2494, %v2539
    %v2560 = vsub.f32 %v2495, %v2542
    %v2561 = vsub.f32 %v2496, %v2545
    %v2562 = vmul.f32 %v2546, 1.442695
    %v2563 = vpow.pop %v2562
    %v2564 = vmul.f32 %v2547, 1.442695
    %v2565 = vpow.pop %v2564
    %v2566 = vmul.f32 %v2548, 1.442695
    %v2567 = vpow.pop %v2566
    %v2568 = vmul.f32 %v2549, 1.442695
    %v2569 = vpow.pop %v2568
    %v2570 = vmul.f32 %v2550, 1.442695
    %v2571 = vpow.pop %v2570
    %v2572 = vmul.f32 %v2551, 1.442695
    %v2573 = vpow.pop %v2572
    %v2574 = vmul.f32 %v2552, 1.442695
    %v2575 = vpow.pop %v2574
    %v2576 = vmul.f32 %v2553, 1.442695
    %v2577 = vpow.pop %v2576
    %v2578 = vmul.f32 %v2554, 1.442695
    %v2579 = vpow.pop %v2578
    %v2580 = vmul.f32 %v2555, 1.442695
    %v2581 = vpow.pop %v2580
    %v2582 = vmul.f32 %v2556, 1.442695
    %v2583 = vpow.pop %v2582
    %v2584 = vmul.f32 %v2557, 1.442695
    %v2585 = vpow.pop %v2584
    %v2586 = vmul.f32 %v2558, 1.442695
    %v2587 = vpow.pop %v2586
    %v2588 = vmul.f32 %v2559, 1.442695
    %v2589 = vpow.pop %v2588
    %v2590 = vmul.f32 %v2560, 1.442695
    %v2591 = vpow.pop %v2590
    %v2592 = vmul.f32 %v2561, 1.442695
    %v2593 = vpow.pop %v2592
    %v2594 = vsel %vm2497, %v2563, 0.0
    %2595 = vadd.xlane.f32.xlu0 %v2594
    %v2596 = vpop.xlane.xlu0 %2595
    %v2597 = vsel %vm2497, %v2565, 0.0
    %2598 = vadd.xlane.f32.xlu0 %v2597
    %v2599 = vpop.xlane.xlu0 %2598
    %v2600 = vsel %vm2497, %v2567, 0.0
    %2601 = vadd.xlane.f32.xlu0 %v2600
    %v2602 = vpop.xlane.xlu0 %2601
    %v2603 = vsel %vm2497, %v2569, 0.0
    %2604 = vadd.xlane.f32.xlu0 %v2603
    %v2605 = vpop.xlane.xlu0 %2604
    %v2606 = vsel %vm2497, %v2571, 0.0
    %2607 = vadd.xlane.f32.xlu0 %v2606
    %v2608 = vpop.xlane.xlu0 %2607
    %v2609 = vsel %vm2497, %v2573, 0.0
    %2610 = vadd.xlane.f32.xlu0 %v2609
    %v2611 = vpop.xlane.xlu0 %2610
    %v2612 = vsel %vm2497, %v2575, 0.0
    %2613 = vadd.xlane.f32.xlu0 %v2612
    %v2614 = vpop.xlane.xlu0 %2613
    %v2615 = vsel %vm2497, %v2577, 0.0
    %2616 = vadd.xlane.f32.xlu0 %v2615
    %v2617 = vpop.xlane.xlu0 %2616
    %v2618 = vsel %vm2497, %v2579, 0.0
    %2619 = vadd.xlane.f32.xlu0 %v2618
    %v2620 = vpop.xlane.xlu0 %2619
    %v2621 = vsel %vm2497, %v2581, 0.0
    %2622 = vadd.xlane.f32.xlu0 %v2621
    %v2623 = vpop.xlane.xlu0 %2622
    %v2624 = vsel %vm2497, %v2583, 0.0
    %2625 = vadd.xlane.f32.xlu0 %v2624
    %v2626 = vpop.xlane.xlu0 %2625
    %v2627 = vsel %vm2497, %v2585, 0.0
    %2628 = vadd.xlane.f32.xlu0 %v2627
    %v2629 = vpop.xlane.xlu0 %2628
    %v2630 = vsel %vm2497, %v2587, 0.0
    %2631 = vadd.xlane.f32.xlu0 %v2630
    %v2632 = vpop.xlane.xlu0 %2631
    %v2633 = vsel %vm2497, %v2589, 0.0
    %2634 = vadd.xlane.f32.xlu0 %v2633
    %v2635 = vpop.xlane.xlu0 %2634
    %v2636 = vsel %vm2497, %v2591, 0.0
    %2637 = vadd.xlane.f32.xlu0 %v2636
    %v2638 = vpop.xlane.xlu0 %2637
    %v2639 = vsel %vm2497, %v2593, 0.0
    %2640 = vadd.xlane.f32.xlu0 %v2639
    %v2641 = vpop.xlane.xlu0 %2640
    %v2642 = vrcp.pop %v2596
    %v2643 = vrcp.pop %v2599
    %v2644 = vrcp.pop %v2602
    %v2645 = vrcp.pop %v2605
    %v2646 = vrcp.pop %v2608
    %v2647 = vrcp.pop %v2611
    %v2648 = vrcp.pop %v2614
    %v2649 = vrcp.pop %v2617
    %v2650 = vrcp.pop %v2620
    %v2651 = vrcp.pop %v2623
    %v2652 = vrcp.pop %v2626
    %v2653 = vrcp.pop %v2629
    %v2654 = vrcp.pop %v2632
    %v2655 = vrcp.pop %v2635
    %v2656 = vrcp.pop %v2638
    %v2657 = vrcp.pop %v2641
    %v2658 = vmul.f32 %v2563, %v2642
    %v2659 = vmul.f32 %v2565, %v2643
    %v2660 = vmul.f32 %v2567, %v2644
    %v2661 = vmul.f32 %v2569, %v2645
    %v2662 = vmul.f32 %v2571, %v2646
    %v2663 = vmul.f32 %v2573, %v2647
    %v2664 = vmul.f32 %v2575, %v2648
    %v2665 = vmul.f32 %v2577, %v2649
    %v2666 = vmul.f32 %v2579, %v2650
    %v2667 = vmul.f32 %v2581, %v2651
    %v2668 = vmul.f32 %v2583, %v2652
    %v2669 = vmul.f32 %v2585, %v2653
    %v2670 = vmul.f32 %v2587, %v2654
    %v2671 = vmul.f32 %v2589, %v2655
    %v2672 = vmul.f32 %v2591, %v2656
    %v2673 = vmul.f32 %v2593, %v2657
    %2674 = vst.msk [vmem:[#allocation9] sm:$0xff] %vm2497, %v2658
    %2675 = vst.msk [vmem:[#allocation9 + $0x8] sm:$0xff] %vm2497, %v2659
    %2676 = vst.msk [vmem:[#allocation9 + $0x10] sm:$0xff] %vm2497, %v2660
    %2677 = vst.msk [vmem:[#allocation9 + $0x18] sm:$0xff] %vm2497, %v2661
    %2678 = vst.msk [vmem:[#allocation9 + $0x20] sm:$0xff] %vm2497, %v2662
    %2679 = vst.msk [vmem:[#allocation9 + $0x28] sm:$0xff] %vm2497, %v2663
    %2680 = vst.msk [vmem:[#allocation9 + $0x30] sm:$0xff] %vm2497, %v2664
    %2681 = vst.msk [vmem:[#allocation9 + $0x38] sm:$0xff] %vm2497, %v2665
    %2682 = vst.msk [vmem:[#allocation9 + $0x40] sm:$0xff] %vm2497, %v2666
    %2683 = vst.msk [vmem:[#allocation9 + $0x48] sm:$0xff] %vm2497, %v2667
    %2684 = vst.msk [vmem:[#allocation9 + $0x50] sm:$0xff] %vm2497, %v2668
    %2685 = vst.msk [vmem:[#allocation9 + $0x58] sm:$0xff] %vm2497, %v2669
    %2686 = vst.msk [vmem:[#allocation9 + $0x60] sm:$0xff] %vm2497, %v2670
    %2687 = vst.msk [vmem:[#allocation9 + $0x68] sm:$0xff] %vm2497, %v2671
    %2688 = vst.msk [vmem:[#allocation9 + $0x70] sm:$0xff] %vm2497, %v2672
    %2689 = vst.msk [vmem:[#allocation9 + $0x78] sm:$0xff] %vm2497, %v2673
    %v2690 = vpack.c.bf16 %v2659, %v2658
    %v2691 = vpack.c.bf16 %v2661, %v2660
    %v2692 = vpack.c.bf16 %v2663, %v2662
    %v2693 = vpack.c.bf16 %v2665, %v2664
    %v2694 = vpack.c.bf16 %v2667, %v2666
    %v2695 = vpack.c.bf16 %v2669, %v2668
    %v2696 = vpack.c.bf16 %v2671, %v2670
    %v2697 = vpack.c.bf16 %v2673, %v2672
    %v2698 = vpack.c.bf16 %v1943, %v1875
    %v2699 = vpack.c.bf16 %v1944, %v1876
    %v2700 = vpack.c.bf16 %v1945, %v1877
    %v2701 = vpack.c.bf16 %v1946, %v1878
    %v2702 = vpack.c.bf16 %v2079, %v2011
    %v2703 = vpack.c.bf16 %v2080, %v2012
    %v2704 = vpack.c.bf16 %v2081, %v2013
    %v2705 = vpack.c.bf16 %v2082, %v2014
    %v2707 = vsel %vm2497, %v2690, 0
    %2709 = vmatprep.subr.bf16.mxu0 0
    %2710 = vmatpush1.bf16.msra.mxu0 0
    %2711 = vmatprep.subr.bf16.mxu0 0
    %2712 = vmatpush1.bf16.msra.mxu0 0
    %2713 = vmatprep.subr.bf16.mxu0 0
    %2714 = vmatpush1.bf16.msra.mxu0 0
    %2715 = vmatprep.subr.bf16.mxu0 0
    %2716 = vmatpush1.bf16.msra.mxu0 0
    %2717 = vmatprep.subr.bf16.mxu0 0
    %2718 = vmatpush1.bf16.msra.mxu0 0
    %2719 = vmatprep.subr.bf16.mxu0 0
    %2720 = vmatpush1.bf16.msra.mxu0 0
    %2721 = vmatprep.subr.bf16.mxu0 0
    %2722 = vmatpush1.bf16.msra.mxu0 0
    %2723 = vmatprep.subr.bf16.mxu0 0
    %2724 = vmatpush1.bf16.msra.mxu0 %v2698
    %2725 = vmatprep.subr.bf16.mxu0 0
    %2726 = vmatpush2.bf16.msra.mxu0 0
    %2727 = vmatprep.subr.bf16.mxu0 0
    %2728 = vmatpush2.bf16.msra.mxu0 0
    %2729 = vmatprep.subr.bf16.mxu0 0
    %2730 = vmatpush2.bf16.msra.mxu0 0
    %2731 = vmatprep.subr.bf16.mxu0 0
    %2732 = vmatpush2.bf16.msra.mxu0 0
    %2733 = vmatprep.subr.bf16.mxu0 0
    %2734 = vmatpush2.bf16.msra.mxu0 0
    %2735 = vmatprep.subr.bf16.mxu0 0
    %2736 = vmatpush2.bf16.msra.mxu0 0
    %2737 = vmatprep.subr.bf16.mxu0 0
    %2738 = vmatpush2.bf16.msra.mxu0 0
    %2739 = vmatprep.subr.bf16.mxu0 0
    %2740 = vmatpush2.bf16.msra.mxu0 0
    %2741 = vmatprep.mubr.bf16.mxu0 0
    %2742 = vmatmul.mubr.bf16.gmra.mxu0 %v2707
    %v2743 = vpop.f32.mrf.mxu0
    %v2744 = vadd.f32 0.0, %v2743
    %v2745 = vpop.f32.mrf.mxu0
    %v2746 = vpop.f32.mrf.mxu0
    %v2747 = vadd.f32 0.0, %v2746
    %v2748 = vpop.f32.mrf.mxu0
    %2749 = vdwg.mxu0
    %v2751 = vsel %vm2497, %v2691, 0
    %2753 = vmatprep.subr.bf16.mxu0 0
    %2754 = vmatpush1.bf16.msra.mxu0 0
    %2755 = vmatprep.subr.bf16.mxu0 0
    %2756 = vmatpush1.bf16.msra.mxu0 0
    %2757 = vmatprep.subr.bf16.mxu0 0
    %2758 = vmatpush1.bf16.msra.mxu0 0
    %2759 = vmatprep.subr.bf16.mxu0 0
    %2760 = vmatpush1.bf16.msra.mxu0 0
    %2761 = vmatprep.subr.bf16.mxu0 0
    %2762 = vmatpush1.bf16.msra.mxu0 0
    %2763 = vmatprep.subr.bf16.mxu0 0
    %2764 = vmatpush1.bf16.msra.mxu0 0
    %2765 = vmatprep.subr.bf16.mxu0 0
    %2766 = vmatpush1.bf16.msra.mxu0 0
    %2767 = vmatprep.subr.bf16.mxu0 0
    %2768 = vmatpush1.bf16.msra.mxu0 %v2699
    %2769 = vmatprep.subr.bf16.mxu0 0
    %2770 = vmatpush2.bf16.msra.mxu0 0
    %2771 = vmatprep.subr.bf16.mxu0 0
    %2772 = vmatpush2.bf16.msra.mxu0 0
    %2773 = vmatprep.subr.bf16.mxu0 0
    %2774 = vmatpush2.bf16.msra.mxu0 0
    %2775 = vmatprep.subr.bf16.mxu0 0
    %2776 = vmatpush2.bf16.msra.mxu0 0
    %2777 = vmatprep.subr.bf16.mxu0 0
    %2778 = vmatpush2.bf16.msra.mxu0 0
    %2779 = vmatprep.subr.bf16.mxu0 0
    %2780 = vmatpush2.bf16.msra.mxu0 0
    %2781 = vmatprep.subr.bf16.mxu0 0
    %2782 = vmatpush2.bf16.msra.mxu0 0
    %2783 = vmatprep.subr.bf16.mxu0 0
    %2784 = vmatpush2.bf16.msra.mxu0 0
    %2785 = vmatprep.mubr.bf16.mxu0 0
    %2786 = vmatmul.mubr.bf16.gmra.mxu0 %v2751
    %v2787 = vpop.f32.mrf.mxu0
    %v2788 = vadd.f32 0.0, %v2787
    %v2789 = vpop.f32.mrf.mxu0
    %v2790 = vpop.f32.mrf.mxu0
    %v2791 = vadd.f32 0.0, %v2790
    %v2792 = vpop.f32.mrf.mxu0
    %2793 = vdwg.mxu0
    %v2795 = vsel %vm2497, %v2692, 0
    %2797 = vmatprep.subr.bf16.mxu0 0
    %2798 = vmatpush1.bf16.msra.mxu0 0
    %2799 = vmatprep.subr.bf16.mxu0 0
    %2800 = vmatpush1.bf16.msra.mxu0 0
    %2801 = vmatprep.subr.bf16.mxu0 0
    %2802 = vmatpush1.bf16.msra.mxu0 0
    %2803 = vmatprep.subr.bf16.mxu0 0
    %2804 = vmatpush1.bf16.msra.mxu0 0
    %2805 = vmatprep.subr.bf16.mxu0 0
    %2806 = vmatpush1.bf16.msra.mxu0 0
    %2807 = vmatprep.subr.bf16.mxu0 0
    %2808 = vmatpush1.bf16.msra.mxu0 0
    %2809 = vmatprep.subr.bf16.mxu0 0
    %2810 = vmatpush1.bf16.msra.mxu0 0
    %2811 = vmatprep.subr.bf16.mxu0 0
    %2812 = vmatpush1.bf16.msra.mxu0 %v2700
    %2813 = vmatprep.subr.bf16.mxu0 0
    %2814 = vmatpush2.bf16.msra.mxu0 0
    %2815 = vmatprep.subr.bf16.mxu0 0
    %2816 = vmatpush2.bf16.msra.mxu0 0
    %2817 = vmatprep.subr.bf16.mxu0 0
    %2818 = vmatpush2.bf16.msra.mxu0 0
    %2819 = vmatprep.subr.bf16.mxu0 0
    %2820 = vmatpush2.bf16.msra.mxu0 0
    %2821 = vmatprep.subr.bf16.mxu0 0
    %2822 = vmatpush2.bf16.msra.mxu0 0
    %2823 = vmatprep.subr.bf16.mxu0 0
    %2824 = vmatpush2.bf16.msra.mxu0 0
    %2825 = vmatprep.subr.bf16.mxu0 0
    %2826 = vmatpush2.bf16.msra.mxu0 0
    %2827 = vmatprep.subr.bf16.mxu0 0
    %2828 = vmatpush2.bf16.msra.mxu0 0
    %2829 = vmatprep.mubr.bf16.mxu0 0
    %2830 = vmatmul.mubr.bf16.gmra.mxu0 %v2795
    %v2831 = vpop.f32.mrf.mxu0
    %v2832 = vadd.f32 0.0, %v2831
    %v2833 = vpop.f32.mrf.mxu0
    %v2834 = vpop.f32.mrf.mxu0
    %v2835 = vadd.f32 0.0, %v2834
    %v2836 = vpop.f32.mrf.mxu0
    %2837 = vdwg.mxu0
    %v2839 = vsel %vm2497, %v2693, 0
    %2841 = vmatprep.subr.bf16.mxu0 0
    %2842 = vmatpush1.bf16.msra.mxu0 0
    %2843 = vmatprep.subr.bf16.mxu0 0
    %2844 = vmatpush1.bf16.msra.mxu0 0
    %2845 = vmatprep.subr.bf16.mxu0 0
    %2846 = vmatpush1.bf16.msra.mxu0 0
    %2847 = vmatprep.subr.bf16.mxu0 0
    %2848 = vmatpush1.bf16.msra.mxu0 0
    %2849 = vmatprep.subr.bf16.mxu0 0
    %2850 = vmatpush1.bf16.msra.mxu0 0
    %2851 = vmatprep.subr.bf16.mxu0 0
    %2852 = vmatpush1.bf16.msra.mxu0 0
    %2853 = vmatprep.subr.bf16.mxu0 0
    %2854 = vmatpush1.bf16.msra.mxu0 0
    %2855 = vmatprep.subr.bf16.mxu0 0
    %2856 = vmatpush1.bf16.msra.mxu0 %v2701
    %2857 = vmatprep.subr.bf16.mxu0 0
    %2858 = vmatpush2.bf16.msra.mxu0 0
    %2859 = vmatprep.subr.bf16.mxu0 0
    %2860 = vmatpush2.bf16.msra.mxu0 0
    %2861 = vmatprep.subr.bf16.mxu0 0
    %2862 = vmatpush2.bf16.msra.mxu0 0
    %2863 = vmatprep.subr.bf16.mxu0 0
    %2864 = vmatpush2.bf16.msra.mxu0 0
    %2865 = vmatprep.subr.bf16.mxu0 0
    %2866 = vmatpush2.bf16.msra.mxu0 0
    %2867 = vmatprep.subr.bf16.mxu0 0
    %2868 = vmatpush2.bf16.msra.mxu0 0
    %2869 = vmatprep.subr.bf16.mxu0 0
    %2870 = vmatpush2.bf16.msra.mxu0 0
    %2871 = vmatprep.subr.bf16.mxu0 0
    %2872 = vmatpush2.bf16.msra.mxu0 0
    %2873 = vmatprep.mubr.bf16.mxu0 0
    %2874 = vmatmul.mubr.bf16.gmra.mxu0 %v2839
    %v2875 = vpop.f32.mrf.mxu0
    %v2876 = vadd.f32 0.0, %v2875
    %v2877 = vpop.f32.mrf.mxu0
    %v2878 = vpop.f32.mrf.mxu0
    %v2879 = vadd.f32 0.0, %v2878
    %v2880 = vpop.f32.mrf.mxu0
    %2881 = vdwg.mxu0
    %v2883 = vsel %vm2497, %v2694, 0
    %2885 = vmatprep.subr.bf16.mxu0 0
    %2886 = vmatpush1.bf16.msra.mxu0 0
    %2887 = vmatprep.subr.bf16.mxu0 0
    %2888 = vmatpush1.bf16.msra.mxu0 0
    %2889 = vmatprep.subr.bf16.mxu0 0
    %2890 = vmatpush1.bf16.msra.mxu0 0
    %2891 = vmatprep.subr.bf16.mxu0 0
    %2892 = vmatpush1.bf16.msra.mxu0 0
    %2893 = vmatprep.subr.bf16.mxu0 0
    %2894 = vmatpush1.bf16.msra.mxu0 0
    %2895 = vmatprep.subr.bf16.mxu0 0
    %2896 = vmatpush1.bf16.msra.mxu0 0
    %2897 = vmatprep.subr.bf16.mxu0 0
    %2898 = vmatpush1.bf16.msra.mxu0 0
    %2899 = vmatprep.subr.bf16.mxu0 0
    %2900 = vmatpush1.bf16.msra.mxu0 %v2702
    %2901 = vmatprep.subr.bf16.mxu0 0
    %2902 = vmatpush2.bf16.msra.mxu0 0
    %2903 = vmatprep.subr.bf16.mxu0 0
    %2904 = vmatpush2.bf16.msra.mxu0 0
    %2905 = vmatprep.subr.bf16.mxu0 0
    %2906 = vmatpush2.bf16.msra.mxu0 0
    %2907 = vmatprep.subr.bf16.mxu0 0
    %2908 = vmatpush2.bf16.msra.mxu0 0
    %2909 = vmatprep.subr.bf16.mxu0 0
    %2910 = vmatpush2.bf16.msra.mxu0 0
    %2911 = vmatprep.subr.bf16.mxu0 0
    %2912 = vmatpush2.bf16.msra.mxu0 0
    %2913 = vmatprep.subr.bf16.mxu0 0
    %2914 = vmatpush2.bf16.msra.mxu0 0
    %2915 = vmatprep.subr.bf16.mxu0 0
    %2916 = vmatpush2.bf16.msra.mxu0 0
    %2917 = vmatprep.mubr.bf16.mxu0 0
    %2918 = vmatmul.mubr.bf16.gmra.mxu0 %v2883
    %v2919 = vpop.f32.mrf.mxu0
    %v2920 = vadd.f32 0.0, %v2919
    %v2921 = vpop.f32.mrf.mxu0
    %v2922 = vpop.f32.mrf.mxu0
    %v2923 = vadd.f32 0.0, %v2922
    %v2924 = vpop.f32.mrf.mxu0
    %2925 = vdwg.mxu0
    %v2927 = vsel %vm2497, %v2695, 0
    %2929 = vmatprep.subr.bf16.mxu0 0
    %2930 = vmatpush1.bf16.msra.mxu0 0
    %2931 = vmatprep.subr.bf16.mxu0 0
    %2932 = vmatpush1.bf16.msra.mxu0 0
    %2933 = vmatprep.subr.bf16.mxu0 0
    %2934 = vmatpush1.bf16.msra.mxu0 0
    %2935 = vmatprep.subr.bf16.mxu0 0
    %2936 = vmatpush1.bf16.msra.mxu0 0
    %2937 = vmatprep.subr.bf16.mxu0 0
    %2938 = vmatpush1.bf16.msra.mxu0 0
    %2939 = vmatprep.subr.bf16.mxu0 0
    %2940 = vmatpush1.bf16.msra.mxu0 0
    %2941 = vmatprep.subr.bf16.mxu0 0
    %2942 = vmatpush1.bf16.msra.mxu0 0
    %2943 = vmatprep.subr.bf16.mxu0 0
    %2944 = vmatpush1.bf16.msra.mxu0 %v2703
    %2945 = vmatprep.subr.bf16.mxu0 0
    %2946 = vmatpush2.bf16.msra.mxu0 0
    %2947 = vmatprep.subr.bf16.mxu0 0
    %2948 = vmatpush2.bf16.msra.mxu0 0
    %2949 = vmatprep.subr.bf16.mxu0 0
    %2950 = vmatpush2.bf16.msra.mxu0 0
    %2951 = vmatprep.subr.bf16.mxu0 0
    %2952 = vmatpush2.bf16.msra.mxu0 0
    %2953 = vmatprep.subr.bf16.mxu0 0
    %2954 = vmatpush2.bf16.msra.mxu0 0
    %2955 = vmatprep.subr.bf16.mxu0 0
    %2956 = vmatpush2.bf16.msra.mxu0 0
    %2957 = vmatprep.subr.bf16.mxu0 0
    %2958 = vmatpush2.bf16.msra.mxu0 0
    %2959 = vmatprep.subr.bf16.mxu0 0
    %2960 = vmatpush2.bf16.msra.mxu0 0
    %2961 = vmatprep.mubr.bf16.mxu0 0
    %2962 = vmatmul.mubr.bf16.gmra.mxu0 %v2927
    %v2963 = vpop.f32.mrf.mxu0
    %v2964 = vadd.f32 0.0, %v2963
    %v2965 = vpop.f32.mrf.mxu0
    %v2966 = vpop.f32.mrf.mxu0
    %v2967 = vadd.f32 0.0, %v2966
    %v2968 = vpop.f32.mrf.mxu0
    %2969 = vdwg.mxu0
    %v2971 = vsel %vm2497, %v2696, 0
    %2973 = vmatprep.subr.bf16.mxu0 0
    %2974 = vmatpush1.bf16.msra.mxu0 0
    %2975 = vmatprep.subr.bf16.mxu0 0
    %2976 = vmatpush1.bf16.msra.mxu0 0
    %2977 = vmatprep.subr.bf16.mxu0 0
    %2978 = vmatpush1.bf16.msra.mxu0 0
    %2979 = vmatprep.subr.bf16.mxu0 0
    %2980 = vmatpush1.bf16.msra.mxu0 0
    %2981 = vmatprep.subr.bf16.mxu0 0
    %2982 = vmatpush1.bf16.msra.mxu0 0
    %2983 = vmatprep.subr.bf16.mxu0 0
    %2984 = vmatpush1.bf16.msra.mxu0 0
    %2985 = vmatprep.subr.bf16.mxu0 0
    %2986 = vmatpush1.bf16.msra.mxu0 0
    %2987 = vmatprep.subr.bf16.mxu0 0
    %2988 = vmatpush1.bf16.msra.mxu0 %v2704
    %2989 = vmatprep.subr.bf16.mxu0 0
    %2990 = vmatpush2.bf16.msra.mxu0 0
    %2991 = vmatprep.subr.bf16.mxu0 0
    %2992 = vmatpush2.bf16.msra.mxu0 0
    %2993 = vmatprep.subr.bf16.mxu0 0
    %2994 = vmatpush2.bf16.msra.mxu0 0
    %2995 = vmatprep.subr.bf16.mxu0 0
    %2996 = vmatpush2.bf16.msra.mxu0 0
    %2997 = vmatprep.subr.bf16.mxu0 0
    %2998 = vmatpush2.bf16.msra.mxu0 0
    %2999 = vmatprep.subr.bf16.mxu0 0
    %3000 = vmatpush2.bf16.msra.mxu0 0
    %3001 = vmatprep.subr.bf16.mxu0 0
    %3002 = vmatpush2.bf16.msra.mxu0 0
    %3003 = vmatprep.subr.bf16.mxu0 0
    %3004 = vmatpush2.bf16.msra.mxu0 0
    %3005 = vmatprep.mubr.bf16.mxu0 0
    %3006 = vmatmul.mubr.bf16.gmra.mxu0 %v2971
    %v3007 = vpop.f32.mrf.mxu0
    %v3008 = vadd.f32 0.0, %v3007
    %v3009 = vpop.f32.mrf.mxu0
    %v3010 = vpop.f32.mrf.mxu0
    %v3011 = vadd.f32 0.0, %v3010
    %v3012 = vpop.f32.mrf.mxu0
    %3013 = vdwg.mxu0
    %v3015 = vsel %vm2497, %v2697, 0
    %3017 = vmatprep.subr.bf16.mxu0 0
    %3018 = vmatpush1.bf16.msra.mxu0 0
    %3019 = vmatprep.subr.bf16.mxu0 0
    %3020 = vmatpush1.bf16.msra.mxu0 0
    %3021 = vmatprep.subr.bf16.mxu0 0
    %3022 = vmatpush1.bf16.msra.mxu0 0
    %3023 = vmatprep.subr.bf16.mxu0 0
    %3024 = vmatpush1.bf16.msra.mxu0 0
    %3025 = vmatprep.subr.bf16.mxu0 0
    %3026 = vmatpush1.bf16.msra.mxu0 0
    %3027 = vmatprep.subr.bf16.mxu0 0
    %3028 = vmatpush1.bf16.msra.mxu0 0
    %3029 = vmatprep.subr.bf16.mxu0 0
    %3030 = vmatpush1.bf16.msra.mxu0 0
    %3031 = vmatprep.subr.bf16.mxu0 0
    %3032 = vmatpush1.bf16.msra.mxu0 %v2705
    %3033 = vmatprep.subr.bf16.mxu0 0
    %3034 = vmatpush2.bf16.msra.mxu0 0
    %3035 = vmatprep.subr.bf16.mxu0 0
    %3036 = vmatpush2.bf16.msra.mxu0 0
    %3037 = vmatprep.subr.bf16.mxu0 0
    %3038 = vmatpush2.bf16.msra.mxu0 0
    %3039 = vmatprep.subr.bf16.mxu0 0
    %3040 = vmatpush2.bf16.msra.mxu0 0
    %3041 = vmatprep.subr.bf16.mxu0 0
    %3042 = vmatpush2.bf16.msra.mxu0 0
    %3043 = vmatprep.subr.bf16.mxu0 0
    %3044 = vmatpush2.bf16.msra.mxu0 0
    %3045 = vmatprep.subr.bf16.mxu0 0
    %3046 = vmatpush2.bf16.msra.mxu0 0
    %3047 = vmatprep.subr.bf16.mxu0 0
    %3048 = vmatpush2.bf16.msra.mxu0 0
    %3049 = vmatprep.mubr.bf16.mxu0 0
    %3050 = vmatmul.mubr.bf16.gmra.mxu0 %v3015
    %v3051 = vpop.f32.mrf.mxu0
    %v3052 = vadd.f32 0.0, %v3051
    %v3053 = vpop.f32.mrf.mxu0
    %v3054 = vpop.f32.mrf.mxu0
    %v3055 = vadd.f32 0.0, %v3054
    %v3056 = vpop.f32.mrf.mxu0
    %3057 = vdwg.mxu0
    %v3058 = vcombine.low %v2744, %v2832
    %v3059 = vcombine.high %v2744, %v2832
    %v3061 = vunpack.c.l.s4 1983009808
    %v3062 = vunpack.c.0.s8 %v3061
    %v3063 = vlaneseq
    %v3064 = vshrl.u32 %v3063, 7
    %v3065 = vsub.s32 %v3062, %v3064
    %v3066 = vrot.slane %v3058, %v3065
    %v3068 = vunpack.c.l.s4 1983009808
    %v3069 = vunpack.c.0.s8 %v3068
    %v3070 = vlaneseq
    %v3071 = vshrl.u32 %v3070, 7
    %v3072 = vsub.s32 %v3069, %v3071
    %v3073 = vrot.slane %v3059, %v3072
    %v3074 = vcombine.low %v2788, %v2876
    %v3075 = vcombine.high %v2788, %v2876
    %v3077 = vunpack.c.l.s4 1983009808
    %v3078 = vunpack.c.0.s8 %v3077
    %v3079 = vlaneseq
    %v3080 = vshrl.u32 %v3079, 7
    %v3081 = vsub.s32 %v3078, %v3080
    %v3082 = vrot.slane %v3074, %v3081
    %v3084 = vunpack.c.l.s4 1983009808
    %v3085 = vunpack.c.0.s8 %v3084
    %v3086 = vlaneseq
    %v3087 = vshrl.u32 %v3086, 7
    %v3088 = vsub.s32 %v3085, %v3087
    %v3089 = vrot.slane %v3075, %v3088
    %v3090 = vcombine.low %v3066, %v3082
    %v3091 = vcombine.high %v3066, %v3082
    %v3093 = vunpack.c.l.s4 1934713408
    %v3094 = vunpack.c.0.s8 %v3093
    %v3095 = vlaneseq
    %v3096 = vshrl.u32 %v3095, 7
    %v3097 = vsub.s32 %v3094, %v3096
    %v3098 = vrot.slane %v3090, %v3097
    %v3100 = vunpack.c.l.s4 1934713408
    %v3101 = vunpack.c.0.s8 %v3100
    %v3102 = vlaneseq
    %v3103 = vshrl.u32 %v3102, 7
    %v3104 = vsub.s32 %v3101, %v3103
    %v3105 = vrot.slane %v3091, %v3104
    %v3106 = vcombine.low %v3073, %v3089
    %v3107 = vcombine.high %v3073, %v3089
    %v3109 = vunpack.c.l.s4 1934713408
    %v3110 = vunpack.c.0.s8 %v3109
    %v3111 = vlaneseq
    %v3112 = vshrl.u32 %v3111, 7
    %v3113 = vsub.s32 %v3110, %v3112
    %v3114 = vrot.slane %v3106, %v3113
    %v3116 = vunpack.c.l.s4 1934713408
    %v3117 = vunpack.c.0.s8 %v3116
    %v3118 = vlaneseq
    %v3119 = vshrl.u32 %v3118, 7
    %v3120 = vsub.s32 %v3117, %v3119
    %v3121 = vrot.slane %v3107, %v3120
    %v3122 = vcombine.high %v3098, 0.0
    %v3123 = vcombine.high %v3105, 0.0
    %v3124 = vcombine.high %v3114, 0.0
    %v3125 = vcombine.high %v3121, 0.0
    %v3126 = vcombine.low %v2747, %v2835
    %v3127 = vcombine.high %v2747, %v2835
    %v3129 = vunpack.c.l.s4 1983009808
    %v3130 = vunpack.c.0.s8 %v3129
    %v3131 = vlaneseq
    %v3132 = vshrl.u32 %v3131, 7
    %v3133 = vsub.s32 %v3130, %v3132
    %v3134 = vrot.slane %v3126, %v3133
    %v3136 = vunpack.c.l.s4 1983009808
    %v3137 = vunpack.c.0.s8 %v3136
    %v3138 = vlaneseq
    %v3139 = vshrl.u32 %v3138, 7
    %v3140 = vsub.s32 %v3137, %v3139
    %v3141 = vrot.slane %v3127, %v3140
    %v3142 = vcombine.low %v2791, %v2879
    %v3143 = vcombine.high %v2791, %v2879
    %v3145 = vunpack.c.l.s4 1983009808
    %v3146 = vunpack.c.0.s8 %v3145
    %v3147 = vlaneseq
    %v3148 = vshrl.u32 %v3147, 7
    %v3149 = vsub.s32 %v3146, %v3148
    %v3150 = vrot.slane %v3142, %v3149
    %v3152 = vunpack.c.l.s4 1983009808
    %v3153 = vunpack.c.0.s8 %v3152
    %v3154 = vlaneseq
    %v3155 = vshrl.u32 %v3154, 7
    %v3156 = vsub.s32 %v3153, %v3155
    %v3157 = vrot.slane %v3143, %v3156
    %v3158 = vcombine.low %v3134, %v3150
    %v3159 = vcombine.high %v3134, %v3150
    %v3161 = vunpack.c.l.s4 1934713408
    %v3162 = vunpack.c.0.s8 %v3161
    %v3163 = vlaneseq
    %v3164 = vshrl.u32 %v3163, 7
    %v3165 = vsub.s32 %v3162, %v3164
    %v3166 = vrot.slane %v3158, %v3165
    %v3168 = vunpack.c.l.s4 1934713408
    %v3169 = vunpack.c.0.s8 %v3168
    %v3170 = vlaneseq
    %v3171 = vshrl.u32 %v3170, 7
    %v3172 = vsub.s32 %v3169, %v3171
    %v3173 = vrot.slane %v3159, %v3172
    %v3174 = vcombine.low %v3141, %v3157
    %v3175 = vcombine.high %v3141, %v3157
    %v3177 = vunpack.c.l.s4 1934713408
    %v3178 = vunpack.c.0.s8 %v3177
    %v3179 = vlaneseq
    %v3180 = vshrl.u32 %v3179, 7
    %v3181 = vsub.s32 %v3178, %v3180
    %v3182 = vrot.slane %v3174, %v3181
    %v3184 = vunpack.c.l.s4 1934713408
    %v3185 = vunpack.c.0.s8 %v3184
    %v3186 = vlaneseq
    %v3187 = vshrl.u32 %v3186, 7
    %v3188 = vsub.s32 %v3185, %v3187
    %v3189 = vrot.slane %v3175, %v3188
    %v3190 = vcombine.high %v3166, 0.0
    %v3191 = vcombine.high %v3173, 0.0
    %v3192 = vcombine.high %v3182, 0.0
    %v3193 = vcombine.high %v3189, 0.0
    %v3194 = vcombine.low %v2920, %v3008
    %v3195 = vcombine.high %v2920, %v3008
    %v3197 = vunpack.c.l.s4 1983009808
    %v3198 = vunpack.c.0.s8 %v3197
    %v3199 = vlaneseq
    %v3200 = vshrl.u32 %v3199, 7
    %v3201 = vsub.s32 %v3198, %v3200
    %v3202 = vrot.slane %v3194, %v3201
    %v3204 = vunpack.c.l.s4 1983009808
    %v3205 = vunpack.c.0.s8 %v3204
    %v3206 = vlaneseq
    %v3207 = vshrl.u32 %v3206, 7
    %v3208 = vsub.s32 %v3205, %v3207
    %v3209 = vrot.slane %v3195, %v3208
    %v3210 = vcombine.low %v2964, %v3052
    %v3211 = vcombine.high %v2964, %v3052
    %v3213 = vunpack.c.l.s4 1983009808
    %v3214 = vunpack.c.0.s8 %v3213
    %v3215 = vlaneseq
    %v3216 = vshrl.u32 %v3215, 7
    %v3217 = vsub.s32 %v3214, %v3216
    %v3218 = vrot.slane %v3210, %v3217
    %v3220 = vunpack.c.l.s4 1983009808
    %v3221 = vunpack.c.0.s8 %v3220
    %v3222 = vlaneseq
    %v3223 = vshrl.u32 %v3222, 7
    %v3224 = vsub.s32 %v3221, %v3223
    %v3225 = vrot.slane %v3211, %v3224
    %v3226 = vcombine.low %v3202, %v3218
    %v3227 = vcombine.high %v3202, %v3218
    %v3229 = vunpack.c.l.s4 1934713408
    %v3230 = vunpack.c.0.s8 %v3229
    %v3231 = vlaneseq
    %v3232 = vshrl.u32 %v3231, 7
    %v3233 = vsub.s32 %v3230, %v3232
    %v3234 = vrot.slane %v3226, %v3233
    %v3236 = vunpack.c.l.s4 1934713408
    %v3237 = vunpack.c.0.s8 %v3236
    %v3238 = vlaneseq
    %v3239 = vshrl.u32 %v3238, 7
    %v3240 = vsub.s32 %v3237, %v3239
    %v3241 = vrot.slane %v3227, %v3240
    %v3242 = vcombine.low %v3209, %v3225
    %v3243 = vcombine.high %v3209, %v3225
    %v3245 = vunpack.c.l.s4 1934713408
    %v3246 = vunpack.c.0.s8 %v3245
    %v3247 = vlaneseq
    %v3248 = vshrl.u32 %v3247, 7
    %v3249 = vsub.s32 %v3246, %v3248
    %v3250 = vrot.slane %v3242, %v3249
    %v3252 = vunpack.c.l.s4 1934713408
    %v3253 = vunpack.c.0.s8 %v3252
    %v3254 = vlaneseq
    %v3255 = vshrl.u32 %v3254, 7
    %v3256 = vsub.s32 %v3253, %v3255
    %v3257 = vrot.slane %v3243, %v3256
    %v3258 = vcombine.high %v3234, 0.0
    %v3259 = vcombine.high %v3241, 0.0
    %v3260 = vcombine.high %v3250, 0.0
    %v3261 = vcombine.high %v3257, 0.0
    %v3262 = vcombine.low %v2923, %v3011
    %v3263 = vcombine.high %v2923, %v3011
    %v3265 = vunpack.c.l.s4 1983009808
    %v3266 = vunpack.c.0.s8 %v3265
    %v3267 = vlaneseq
    %v3268 = vshrl.u32 %v3267, 7
    %v3269 = vsub.s32 %v3266, %v3268
    %v3270 = vrot.slane %v3262, %v3269
    %v3272 = vunpack.c.l.s4 1983009808
    %v3273 = vunpack.c.0.s8 %v3272
    %v3274 = vlaneseq
    %v3275 = vshrl.u32 %v3274, 7
    %v3276 = vsub.s32 %v3273, %v3275
    %v3277 = vrot.slane %v3263, %v3276
    %v3278 = vcombine.low %v2967, %v3055
    %v3279 = vcombine.high %v2967, %v3055
    %v3281 = vunpack.c.l.s4 1983009808
    %v3282 = vunpack.c.0.s8 %v3281
    %v3283 = vlaneseq
    %v3284 = vshrl.u32 %v3283, 7
    %v3285 = vsub.s32 %v3282, %v3284
    %v3286 = vrot.slane %v3278, %v3285
    %v3288 = vunpack.c.l.s4 1983009808
    %v3289 = vunpack.c.0.s8 %v3288
    %v3290 = vlaneseq
    %v3291 = vshrl.u32 %v3290, 7
    %v3292 = vsub.s32 %v3289, %v3291
    %v3293 = vrot.slane %v3279, %v3292
    %v3294 = vcombine.low %v3270, %v3286
    %v3295 = vcombine.high %v3270, %v3286
    %v3297 = vunpack.c.l.s4 1934713408
    %v3298 = vunpack.c.0.s8 %v3297
    %v3299 = vlaneseq
    %v3300 = vshrl.u32 %v3299, 7
    %v3301 = vsub.s32 %v3298, %v3300
    %v3302 = vrot.slane %v3294, %v3301
    %v3304 = vunpack.c.l.s4 1934713408
    %v3305 = vunpack.c.0.s8 %v3304
    %v3306 = vlaneseq
    %v3307 = vshrl.u32 %v3306, 7
    %v3308 = vsub.s32 %v3305, %v3307
    %v3309 = vrot.slane %v3295, %v3308
    %v3310 = vcombine.low %v3277, %v3293
    %v3311 = vcombine.high %v3277, %v3293
    %v3313 = vunpack.c.l.s4 1934713408
    %v3314 = vunpack.c.0.s8 %v3313
    %v3315 = vlaneseq
    %v3316 = vshrl.u32 %v3315, 7
    %v3317 = vsub.s32 %v3314, %v3316
    %v3318 = vrot.slane %v3310, %v3317
    %v3320 = vunpack.c.l.s4 1934713408
    %v3321 = vunpack.c.0.s8 %v3320
    %v3322 = vlaneseq
    %v3323 = vshrl.u32 %v3322, 7
    %v3324 = vsub.s32 %v3321, %v3323
    %v3325 = vrot.slane %v3311, %v3324
    %v3326 = vcombine.high %v3302, 0.0
    %v3327 = vcombine.high %v3309, 0.0
    %v3328 = vcombine.high %v3318, 0.0
    %v3329 = vcombine.high %v3325, 0.0
    %v3330 = vcombine.low %v3098, %v3105
    %v3332 = vunpack.c.l.s4 1983009808
    %v3333 = vunpack.c.0.s8 %v3332
    %v3334 = vlaneseq
    %v3335 = vshrl.u32 %v3334, 7
    %v3336 = vsub.s32 %v3333, %v3335
    %v3337 = vrot.slane %v3330, %v3336
    %v3338 = vcombine.low %v3122, %v3123
    %v3340 = vunpack.c.l.s4 1983009808
    %v3341 = vunpack.c.0.s8 %v3340
    %v3342 = vlaneseq
    %v3343 = vshrl.u32 %v3342, 7
    %v3344 = vsub.s32 %v3341, %v3343
    %v3345 = vrot.slane %v3338, %v3344
    %v3346 = vcombine.low %v3114, %v3121
    %v3348 = vunpack.c.l.s4 1983009808
    %v3349 = vunpack.c.0.s8 %v3348
    %v3350 = vlaneseq
    %v3351 = vshrl.u32 %v3350, 7
    %v3352 = vsub.s32 %v3349, %v3351
    %v3353 = vrot.slane %v3346, %v3352
    %v3354 = vcombine.low %v3124, %v3125
    %v3356 = vunpack.c.l.s4 1983009808
    %v3357 = vunpack.c.0.s8 %v3356
    %v3358 = vlaneseq
    %v3359 = vshrl.u32 %v3358, 7
    %v3360 = vsub.s32 %v3357, %v3359
    %v3361 = vrot.slane %v3354, %v3360
    %v3362 = vcombine.low %v3337, %v3345
    %v3363 = vcombine.high %v3337, %v3345
    %v3365 = vunpack.c.l.s4 1934713408
    %v3366 = vunpack.c.0.s8 %v3365
    %v3367 = vlaneseq
    %v3368 = vshrl.u32 %v3367, 7
    %v3369 = vsub.s32 %v3366, %v3368
    %v3370 = vrot.slane %v3362, %v3369
    %v3372 = vunpack.c.l.s4 1934713408
    %v3373 = vunpack.c.0.s8 %v3372
    %v3374 = vlaneseq
    %v3375 = vshrl.u32 %v3374, 7
    %v3376 = vsub.s32 %v3373, %v3375
    %v3377 = vrot.slane %v3363, %v3376
    %v3378 = vcombine.low %v3353, %v3361
    %v3379 = vcombine.high %v3353, %v3361
    %v3381 = vunpack.c.l.s4 1934713408
    %v3382 = vunpack.c.0.s8 %v3381
    %v3383 = vlaneseq
    %v3384 = vshrl.u32 %v3383, 7
    %v3385 = vsub.s32 %v3382, %v3384
    %v3386 = vrot.slane %v3378, %v3385
    %v3388 = vunpack.c.l.s4 1934713408
    %v3389 = vunpack.c.0.s8 %v3388
    %v3390 = vlaneseq
    %v3391 = vshrl.u32 %v3390, 7
    %v3392 = vsub.s32 %v3389, %v3391
    %v3393 = vrot.slane %v3379, %v3392
    %v3394 = vcombine.low %v3370, %v3386
    %v3395 = vcombine.high %v3370, %v3386
    %v3396 = vcombine.low %v3377, %v3393
    %v3397 = vcombine.high %v3377, %v3393
    %v3398 = vcombine.low %v3166, %v3173
    %v3400 = vunpack.c.l.s4 1983009808
    %v3401 = vunpack.c.0.s8 %v3400
    %v3402 = vlaneseq
    %v3403 = vshrl.u32 %v3402, 7
    %v3404 = vsub.s32 %v3401, %v3403
    %v3405 = vrot.slane %v3398, %v3404
    %v3406 = vcombine.low %v3190, %v3191
    %v3408 = vunpack.c.l.s4 1983009808
    %v3409 = vunpack.c.0.s8 %v3408
    %v3410 = vlaneseq
    %v3411 = vshrl.u32 %v3410, 7
    %v3412 = vsub.s32 %v3409, %v3411
    %v3413 = vrot.slane %v3406, %v3412
    %v3414 = vcombine.low %v3182, %v3189
    %v3416 = vunpack.c.l.s4 1983009808
    %v3417 = vunpack.c.0.s8 %v3416
    %v3418 = vlaneseq
    %v3419 = vshrl.u32 %v3418, 7
    %v3420 = vsub.s32 %v3417, %v3419
    %v3421 = vrot.slane %v3414, %v3420
    %v3422 = vcombine.low %v3192, %v3193
    %v3424 = vunpack.c.l.s4 1983009808
    %v3425 = vunpack.c.0.s8 %v3424
    %v3426 = vlaneseq
    %v3427 = vshrl.u32 %v3426, 7
    %v3428 = vsub.s32 %v3425, %v3427
    %v3429 = vrot.slane %v3422, %v3428
    %v3430 = vcombine.low %v3405, %v3413
    %v3431 = vcombine.high %v3405, %v3413
    %v3433 = vunpack.c.l.s4 1934713408
    %v3434 = vunpack.c.0.s8 %v3433
    %v3435 = vlaneseq
    %v3436 = vshrl.u32 %v3435, 7
    %v3437 = vsub.s32 %v3434, %v3436
    %v3438 = vrot.slane %v3430, %v3437
    %v3440 = vunpack.c.l.s4 1934713408
    %v3441 = vunpack.c.0.s8 %v3440
    %v3442 = vlaneseq
    %v3443 = vshrl.u32 %v3442, 7
    %v3444 = vsub.s32 %v3441, %v3443
    %v3445 = vrot.slane %v3431, %v3444
    %v3446 = vcombine.low %v3421, %v3429
    %v3447 = vcombine.high %v3421, %v3429
    %v3449 = vunpack.c.l.s4 1934713408
    %v3450 = vunpack.c.0.s8 %v3449
    %v3451 = vlaneseq
    %v3452 = vshrl.u32 %v3451, 7
    %v3453 = vsub.s32 %v3450, %v3452
    %v3454 = vrot.slane %v3446, %v3453
    %v3456 = vunpack.c.l.s4 1934713408
    %v3457 = vunpack.c.0.s8 %v3456
    %v3458 = vlaneseq
    %v3459 = vshrl.u32 %v3458, 7
    %v3460 = vsub.s32 %v3457, %v3459
    %v3461 = vrot.slane %v3447, %v3460
    %v3462 = vcombine.low %v3438, %v3454
    %v3463 = vcombine.high %v3438, %v3454
    %v3464 = vcombine.low %v3445, %v3461
    %v3465 = vcombine.high %v3445, %v3461
    %v3466 = vcombine.low %v3234, %v3241
    %v3468 = vunpack.c.l.s4 1983009808
    %v3469 = vunpack.c.0.s8 %v3468
    %v3470 = vlaneseq
    %v3471 = vshrl.u32 %v3470, 7
    %v3472 = vsub.s32 %v3469, %v3471
    %v3473 = vrot.slane %v3466, %v3472
    %v3474 = vcombine.low %v3258, %v3259
    %v3476 = vunpack.c.l.s4 1983009808
    %v3477 = vunpack.c.0.s8 %v3476
    %v3478 = vlaneseq
    %v3479 = vshrl.u32 %v3478, 7
    %v3480 = vsub.s32 %v3477, %v3479
    %v3481 = vrot.slane %v3474, %v3480
    %v3482 = vcombine.low %v3250, %v3257
    %v3484 = vunpack.c.l.s4 1983009808
    %v3485 = vunpack.c.0.s8 %v3484
    %v3486 = vlaneseq
    %v3487 = vshrl.u32 %v3486, 7
    %v3488 = vsub.s32 %v3485, %v3487
    %v3489 = vrot.slane %v3482, %v3488
    %v3490 = vcombine.low %v3260, %v3261
    %v3492 = vunpack.c.l.s4 1983009808
    %v3493 = vunpack.c.0.s8 %v3492
    %v3494 = vlaneseq
    %v3495 = vshrl.u32 %v3494, 7
    %v3496 = vsub.s32 %v3493, %v3495
    %v3497 = vrot.slane %v3490, %v3496
    %v3498 = vcombine.low %v3473, %v3481
    %v3499 = vcombine.high %v3473, %v3481
    %v3501 = vunpack.c.l.s4 1934713408
    %v3502 = vunpack.c.0.s8 %v3501
    %v3503 = vlaneseq
    %v3504 = vshrl.u32 %v3503, 7
    %v3505 = vsub.s32 %v3502, %v3504
    %v3506 = vrot.slane %v3498, %v3505
    %v3508 = vunpack.c.l.s4 1934713408
    %v3509 = vunpack.c.0.s8 %v3508
    %v3510 = vlaneseq
    %v3511 = vshrl.u32 %v3510, 7
    %v3512 = vsub.s32 %v3509, %v3511
    %v3513 = vrot.slane %v3499, %v3512
    %v3514 = vcombine.low %v3489, %v3497
    %v3515 = vcombine.high %v3489, %v3497
    %v3517 = vunpack.c.l.s4 1934713408
    %v3518 = vunpack.c.0.s8 %v3517
    %v3519 = vlaneseq
    %v3520 = vshrl.u32 %v3519, 7
    %v3521 = vsub.s32 %v3518, %v3520
    %v3522 = vrot.slane %v3514, %v3521
    %v3524 = vunpack.c.l.s4 1934713408
    %v3525 = vunpack.c.0.s8 %v3524
    %v3526 = vlaneseq
    %v3527 = vshrl.u32 %v3526, 7
    %v3528 = vsub.s32 %v3525, %v3527
    %v3529 = vrot.slane %v3515, %v3528
    %v3530 = vcombine.low %v3506, %v3522
    %v3531 = vcombine.high %v3506, %v3522
    %v3532 = vcombine.low %v3513, %v3529
    %v3533 = vcombine.high %v3513, %v3529
    %v3534 = vcombine.low %v3302, %v3309
    %v3536 = vunpack.c.l.s4 1983009808
    %v3537 = vunpack.c.0.s8 %v3536
    %v3538 = vlaneseq
    %v3539 = vshrl.u32 %v3538, 7
    %v3540 = vsub.s32 %v3537, %v3539
    %v3541 = vrot.slane %v3534, %v3540
    %v3542 = vcombine.low %v3326, %v3327
    %v3544 = vunpack.c.l.s4 1983009808
    %v3545 = vunpack.c.0.s8 %v3544
    %v3546 = vlaneseq
    %v3547 = vshrl.u32 %v3546, 7
    %v3548 = vsub.s32 %v3545, %v3547
    %v3549 = vrot.slane %v3542, %v3548
    %v3550 = vcombine.low %v3318, %v3325
    %v3552 = vunpack.c.l.s4 1983009808
    %v3553 = vunpack.c.0.s8 %v3552
    %v3554 = vlaneseq
    %v3555 = vshrl.u32 %v3554, 7
    %v3556 = vsub.s32 %v3553, %v3555
    %v3557 = vrot.slane %v3550, %v3556
    %v3558 = vcombine.low %v3328, %v3329
    %v3560 = vunpack.c.l.s4 1983009808
    %v3561 = vunpack.c.0.s8 %v3560
    %v3562 = vlaneseq
    %v3563 = vshrl.u32 %v3562, 7
    %v3564 = vsub.s32 %v3561, %v3563
    %v3565 = vrot.slane %v3558, %v3564
    %v3566 = vcombine.low %v3541, %v3549
    %v3567 = vcombine.high %v3541, %v3549
    %v3569 = vunpack.c.l.s4 1934713408
    %v3570 = vunpack.c.0.s8 %v3569
    %v3571 = vlaneseq
    %v3572 = vshrl.u32 %v3571, 7
    %v3573 = vsub.s32 %v3570, %v3572
    %v3574 = vrot.slane %v3566, %v3573
    %v3576 = vunpack.c.l.s4 1934713408
    %v3577 = vunpack.c.0.s8 %v3576
    %v3578 = vlaneseq
    %v3579 = vshrl.u32 %v3578, 7
    %v3580 = vsub.s32 %v3577, %v3579
    %v3581 = vrot.slane %v3567, %v3580
    %v3582 = vcombine.low %v3557, %v3565
    %v3583 = vcombine.high %v3557, %v3565
    %v3585 = vunpack.c.l.s4 1934713408
    %v3586 = vunpack.c.0.s8 %v3585
    %v3587 = vlaneseq
    %v3588 = vshrl.u32 %v3587, 7
    %v3589 = vsub.s32 %v3586, %v3588
    %v3590 = vrot.slane %v3582, %v3589
    %v3592 = vunpack.c.l.s4 1934713408
    %v3593 = vunpack.c.0.s8 %v3592
    %v3594 = vlaneseq
    %v3595 = vshrl.u32 %v3594, 7
    %v3596 = vsub.s32 %v3593, %v3595
    %v3597 = vrot.slane %v3583, %v3596
    %v3598 = vcombine.low %v3574, %v3590
    %v3599 = vcombine.high %v3574, %v3590
    %v3600 = vcombine.low %v3581, %v3597
    %v3601 = vcombine.high %v3581, %v3597
    %3606 = vrot.lane.b32.xlu0 %v3395, 32
    %v3607 = vpop.permute.xlu0 %3606
    %3608 = vrot.lane.b32.xlu0 %v3463, 32
    %v3609 = vpop.permute.xlu0 %3608
    %3610 = vrot.lane.b32.xlu0 %v3531, 32
    %v3611 = vpop.permute.xlu0 %3610
    %3612 = vrot.lane.b32.xlu0 %v3599, 32
    %v3613 = vpop.permute.xlu0 %3612
    %3622 = vrot.lane.b32.xlu0 %v3396, 64
    %v3623 = vpop.permute.xlu0 %3622
    %3624 = vrot.lane.b32.xlu0 %v3464, 64
    %v3625 = vpop.permute.xlu0 %3624
    %3626 = vrot.lane.b32.xlu0 %v3532, 64
    %v3627 = vpop.permute.xlu0 %3626
    %3628 = vrot.lane.b32.xlu0 %v3600, 64
    %v3629 = vpop.permute.xlu0 %3628
    %3638 = vrot.lane.b32.xlu0 %v3397, 96
    %v3639 = vpop.permute.xlu0 %3638
    %3640 = vrot.lane.b32.xlu0 %v3465, 96
    %v3641 = vpop.permute.xlu0 %3640
    %3642 = vrot.lane.b32.xlu0 %v3533, 96
    %v3643 = vpop.permute.xlu0 %3642
    %3644 = vrot.lane.b32.xlu0 %v3601, 96
    %v3645 = vpop.permute.xlu0 %3644
    %v3650 = vsel %vm2099, %v3394, %v3607
    %v3651 = vsel %vm2099, %v3462, %v3609
    %v3652 = vsel %vm2099, %v3530, %v3611
    %v3653 = vsel %vm2099, %v3598, %v3613
    %vm3654 = vcmask 523264
    %v3655 = vsel %vm3654, %v3650, %v3623
    %v3656 = vsel %vm3654, %v3651, %v3625
    %v3657 = vsel %vm3654, %v3652, %v3627
    %v3658 = vsel %vm3654, %v3653, %v3629
    %vm3659 = vcmask 785408
    %v3660 = vsel %vm3659, %v3655, %v3639
    %v3661 = vsel %vm3659, %v3656, %v3641
    %v3662 = vsel %vm3659, %v3657, %v3643
    %v3663 = vsel %vm3659, %v3658, %v3645
    %v3664 = vpack.c.bf16 %v3661, %v3660
    %v3665 = vpack.c.bf16 %v3663, %v3662
    %v3666 = vld [vmem:[#allocation7] sm:$0xf]
    %v3667 = vld [vmem:[#allocation7 + $0x4] sm:$0xf]
    %v3668 = vld [vmem:[#allocation7 + $0x8] sm:$0xf]
    %v3669 = vld [vmem:[#allocation7 + $0xc] sm:$0xf]
    %v3670 = vld [vmem:[#allocation7 + $0x10] sm:$0xf]
    %v3671 = vld [vmem:[#allocation7 + $0x14] sm:$0xf]
    %v3672 = vld [vmem:[#allocation7 + $0x18] sm:$0xf]
    %v3673 = vld [vmem:[#allocation7 + $0x1c] sm:$0xf]
    %v3674 = vld [vmem:[#allocation7 + $0x20] sm:$0xf]
    %v3675 = vld [vmem:[#allocation7 + $0x24] sm:$0xf]
    %v3676 = vld [vmem:[#allocation7 + $0x28] sm:$0xf]
    %v3677 = vld [vmem:[#allocation7 + $0x2c] sm:$0xf]
    %v3678 = vld [vmem:[#allocation7 + $0x30] sm:$0xf]
    %v3679 = vld [vmem:[#allocation7 + $0x34] sm:$0xf]
    %v3680 = vld [vmem:[#allocation7 + $0x38] sm:$0xf]
    %v3681 = vld [vmem:[#allocation7 + $0x3c] sm:$0xf]
    %v3698 = vunpack.c.l.b16 %v3666
    %v3699 = vunpack.c.l.b16 %v3667
    %v3700 = vunpack.c.l.b16 %v3668
    %v3701 = vunpack.c.l.b16 %v3669
    %v3702 = vunpack.c.l.b16 %v3670
    %v3703 = vunpack.c.l.b16 %v3671
    %v3704 = vunpack.c.l.b16 %v3672
    %v3705 = vunpack.c.l.b16 %v3673
    %v3706 = vunpack.c.l.b16 %v3674
    %v3707 = vunpack.c.l.b16 %v3675
    %v3708 = vunpack.c.l.b16 %v3676
    %v3709 = vunpack.c.l.b16 %v3677
    %v3710 = vunpack.c.l.b16 %v3678
    %v3711 = vunpack.c.l.b16 %v3679
    %v3712 = vunpack.c.l.b16 %v3680
    %v3713 = vunpack.c.l.b16 %v3681
    %v3714 = vpack.c.b16 %v3699, %v3698
    %v3715 = vpack.c.b16 %v3701, %v3700
    %v3716 = vpack.c.b16 %v3703, %v3702
    %v3717 = vpack.c.b16 %v3705, %v3704
    %v3718 = vpack.c.b16 %v3707, %v3706
    %v3719 = vpack.c.b16 %v3709, %v3708
    %v3720 = vpack.c.b16 %v3711, %v3710
    %v3721 = vpack.c.b16 %v3713, %v3712
    %3730 = vmatprep.subr.bf16.mxu0 0
    %3731 = vmatpush1.bf16.msra.mxu0 %v3721
    %3732 = vmatprep.subr.bf16.mxu0 0
    %3733 = vmatpush1.bf16.msra.mxu0 %v3720
    %3734 = vmatprep.subr.bf16.mxu0 0
    %3735 = vmatpush1.bf16.msra.mxu0 %v3719
    %3736 = vmatprep.subr.bf16.mxu0 0
    %3737 = vmatpush1.bf16.msra.mxu0 %v3718
    %3738 = vmatprep.subr.bf16.mxu0 0
    %3739 = vmatpush1.bf16.msra.mxu0 %v3717
    %3740 = vmatprep.subr.bf16.mxu0 0
    %3741 = vmatpush1.bf16.msra.mxu0 %v3716
    %3742 = vmatprep.subr.bf16.mxu0 0
    %3743 = vmatpush1.bf16.msra.mxu0 %v3715
    %3744 = vmatprep.subr.bf16.mxu0 0
    %3745 = vmatpush1.bf16.msra.mxu0 %v3714
    %3746 = vmatprep.subr.bf16.mxu0 0
    %3747 = vmatpush2.bf16.msra.mxu0 0
    %3748 = vmatprep.subr.bf16.mxu0 0
    %3749 = vmatpush2.bf16.msra.mxu0 0
    %3750 = vmatprep.subr.bf16.mxu0 0
    %3751 = vmatpush2.bf16.msra.mxu0 0
    %3752 = vmatprep.subr.bf16.mxu0 0
    %3753 = vmatpush2.bf16.msra.mxu0 0
    %3754 = vmatprep.subr.bf16.mxu0 0
    %3755 = vmatpush2.bf16.msra.mxu0 0
    %3756 = vmatprep.subr.bf16.mxu0 0
    %3757 = vmatpush2.bf16.msra.mxu0 0
    %3758 = vmatprep.subr.bf16.mxu0 0
    %3759 = vmatpush2.bf16.msra.mxu0 0
    %3760 = vmatprep.subr.bf16.mxu0 0
    %3761 = vmatpush2.bf16.msra.mxu0 0
    %3762 = vmatprep.mubr.bf16.mxu0 0
    %3763 = vmatmul.mubr.bf16.gmra.mxu0 %v3664
    %v3764 = vpop.f32.mrf.mxu0
    %v3765 = vadd.f32 0.0, %v3764
    %v3766 = vpop.f32.mrf.mxu0
    %v3767 = vpop.f32.mrf.mxu0
    %v3768 = vadd.f32 0.0, %v3767
    %v3769 = vpop.f32.mrf.mxu0
    %3770 = vmatprep.mubr.bf16.mxu0 0
    %3771 = vmatmul.mubr.bf16.gmra.mxu0 %v3665
    %v3772 = vpop.f32.mrf.mxu0
    %v3773 = vadd.f32 0.0, %v3772
    %v3774 = vpop.f32.mrf.mxu0
    %v3775 = vpop.f32.mrf.mxu0
    %v3776 = vadd.f32 0.0, %v3775
    %v3777 = vpop.f32.mrf.mxu0
    %3778 = vdwg.mxu0
    %v3779 = vld [vmem:[%s3] sm:$0x1]
    %p3780 = scmp.eq.s32.totalorder 0, 0
    // Predicated region
    $region30: #{tpu_custom_call.1} parent=1 // pred_check
      %p3781 = pneg %p3780
    $region31: #{tpu_custom_call.1} parent=1 // pred_check_branch
      %3783 = sbr.rel (%p3781) target = $region33
    $region32: #{tpu_custom_call.1} parent=1 // pred_region
      %v3785 = vlaneseq
      %v3786 = vshrl.u32 %v3785, 7
      %v3787 = vsub.s32 0, %v3786
      %v3788 = vrot.slane %v3779, %v3787
      %v3790 = vadd.f32 %v3765, %v3788
      %v3791 = vadd.f32 %v3768, %v3788
      %v3792 = vadd.f32 %v3773, %v3788
      %v3793 = vadd.f32 %v3776, %v3788
      %3794 = vst [vmem:[#allocation8] sm:$0xff] %v3790
      %3795 = vst [vmem:[#allocation8 + $0x8] sm:$0xff] %v3791
      %3796 = vst [vmem:[#allocation8 + $0x10] sm:$0xff] %v3792
      %3797 = vst [vmem:[#allocation8 + $0x18] sm:$0xff] %v3793
    $region33: #{tpu_custom_call.1} parent=1 // pred_fallthru
      _
    %p3798 = scmp.ne.s32.totalorder 0, 0
    // Predicated region
    $region34: #{tpu_custom_call.1} parent=1 // pred_check
      %p3799 = pneg %p3798
    $region35: #{tpu_custom_call.1} parent=1 // pred_check_branch
      %3801 = sbr.rel (%p3799) target = $region37
    $region36: #{tpu_custom_call.1} parent=1 // pred_region
      %v3802 = vld [vmem:[#allocation8] sm:$0xff]
      %v3803 = vld [vmem:[#allocation8 + $0x8] sm:$0xff]
      %v3804 = vld [vmem:[#allocation8 + $0x10] sm:$0xff]
      %v3805 = vld [vmem:[#allocation8 + $0x18] sm:$0xff]
      %v3806 = vadd.f32 %v3802, %v3765
      %v3807 = vadd.f32 %v3803, %v3768
      %v3808 = vadd.f32 %v3804, %v3773
      %v3809 = vadd.f32 %v3805, %v3776
      %3810 = vst [vmem:[#allocation8] sm:$0xff] %v3806
      %3811 = vst [vmem:[#allocation8 + $0x8] sm:$0xff] %v3807
      %3812 = vst [vmem:[#allocation8 + $0x10] sm:$0xff] %v3808
      %3813 = vst [vmem:[#allocation8 + $0x18] sm:$0xff] %v3809
    $region37: #{tpu_custom_call.1} parent=1 // pred_fallthru
      _
    // Predicated region
    $region38: #{tpu_custom_call.1} parent=1 // pred_check
      _
    $region39: #{tpu_custom_call.1} parent=1 // pred_check_branch
      %3815 = sbr.rel (0) target = $region41
    $region40: #{tpu_custom_call.1} parent=1 // pred_region
      %s3817 = ssub.s32 512, 512
      %3818 = vsyncadd [#allocation4], %s3817
      %s3819 = sshll.u32 [#allocation8], 4
      %s3820 = int_to_ptr.vmem [resolvable:$true] %s3819
      %3825 = dma.vmem_to_hbm [thread:$0]  %s3820, 512, %s4, [#allocation4], 128, 128, 8
    $region41: #{tpu_custom_call.1} parent=1 // pred_fallthru
      _
    // Predicated region
    $region42: #{tpu_custom_call.1} parent=1 // pred_check
      _
    $region43: #{tpu_custom_call.1} parent=1 // pred_check_branch
      %3827 = sbr.rel (0) target = $region45
    $region44: #{tpu_custom_call.1} parent=1 // pred_region
      %s3829 = ssub.s32 2048, 2048
      %3830 = vsyncadd [#allocation10], %s3829
      %s3831 = sshll.u32 [#allocation9], 4
      %s3832 = int_to_ptr.vmem [resolvable:$true] %s3831
      %3837 = dma.vmem_to_hbm [thread:$0]  %s3832, 2048, %s5, [#allocation10], 128, 128, 8
    $region45: #{tpu_custom_call.1} parent=1 // pred_fallthru
      _
    // Predicated region
    $region46: #{tpu_custom_call.1} parent=1 // pred_check
      _
    $region47: #{tpu_custom_call.1} parent=1 // pred_check_branch
      %3839 = sbr.rel (0) target = $region49
    $region48: #{tpu_custom_call.1} parent=1 // pred_region
      %3840 = dma.done [#allocation4], 512
    $region49: #{tpu_custom_call.1} parent=1 // pred_fallthru
      _
    // Predicated region
    $region50: #{tpu_custom_call.1} parent=1 // pred_check
      _
    $region51: #{tpu_custom_call.1} parent=1 // pred_check_branch
      %3842 = sbr.rel (0) target = $region53
    $region52: #{tpu_custom_call.1} parent=1 // pred_region
      %3843 = dma.done [#allocation10], 2048
    $region53: #{tpu_custom_call.1} parent=1 // pred_fallthru
      _
    %3844 = vsyncpa [#allocation3], 1
    %3845 = vsyncpa [#allocation6], 1
    %3846 = vsyncpa [#allocation4], 1
    %3847 = vsyncpa [#allocation10], 1

</llo_original>
